<compile_context>
chip_gen: v6e
topology: v6e:2x2x1
jax: 0.10.0
libtpu: 0.0.40
codegen_flags: <defaults>
</compile_context>

<pallas_src>
import math

import jax
import jax.numpy as jnp
from jax import lax
from jax.experimental import pallas as pl
from jax.experimental.pallas import tpu as pltpu

# ----------------------------- configuration ------------------------------
B = 2
CH = 32                    # in_channels == out_channels for the mid block
TEMB_CH = 32
COND_DIM = 32              # add_condition_dim
H = W = 8
S = H * W
GROUPS = 8
CG = CH // GROUPS
EPS = 1e-6
HEAD_CH = 8                # attn_num_head_channels
NH = CH // HEAD_CH
DH = HEAD_CH
ATTN_SCALE = 1.0 / math.sqrt(DH)   # folded into packed W_q / b_q at pack time
OUT_SCALE = 1.0            # output_scale_factor / rescale_output_factor
DTYPE = jnp.float32
MXU_DTYPE = jnp.bfloat16
# num_layers = 1  ->  2 resnets (4 convs, 4 resnet norms) + 1 attention block.


# ------------------------------ fused kernel -------------------------------
def midblock_kernel(x_ref, temb_ref, cond_ref, gavg_ref, cmask_ref, qmask_ref,
                    hmask_ref, ngb_ref, convw_ref, convb_ref, wvec_ref, bvec_ref,
                    wqkv_ref, bqkv_ref, wproj_ref, bproj_ref, out_ref):
    gavg = gavg_ref[...]                                   # (C, C) group-average matrix (f32)

    def group_norm(h, ni, silu):
        gamma = ngb_ref[ni, 0]                             # (1, C)
        beta = ngb_ref[ni, 1]                              # (1, C)
        s1 = jnp.sum(h, axis=0, keepdims=True)             # (1, C)
        s2 = jnp.sum(h * h, axis=0, keepdims=True)         # (1, C)
        moments = jnp.dot(jnp.concatenate([s1, s2], axis=0), gavg,
                          preferred_element_type=jnp.float32)        # (2, C)
        mean = moments[0:1]                                 # per-group mean
        var = jnp.maximum(moments[1:2] - mean * mean, 0.0)  # per-group variance
        y = (h - mean) * lax.rsqrt(var + EPS) * gamma + beta
        if silu:
            y = y * jax.nn.sigmoid(y)
        return y

    def conv3x3(h, ci):
        # 3x3 "same" conv: 9 rolled + edge-masked token windows (no scratch),
        # im2col'd along lanes into one (S, 9C) operand -> single K=9C matmul.
        wins = []
        for kh in range(3):
            for kw in range(3):
                t = kh * 3 + kw
                delta = (kh - 1) * W + (kw - 1)
                win = pltpu.roll(h, shift=(-delta) % S, axis=0) if delta else h
                if t != 4:                                   # center tap is all-valid
                    win = win * cmask_ref[t]                 # (S, 1) edge mask, f32
                wins.append(win)
        patch = jnp.concatenate(wins, axis=1).astype(MXU_DTYPE)       # (S, 9C)
        return (jnp.dot(patch, convw_ref[ci], preferred_element_type=jnp.float32)
                + convb_ref[ci])                             # bias: (1, C)

    def resnet(h, ri, vec_proj):
        hid = group_norm(h, 2 * ri + 0, silu=True)
        hid = conv3x3(hid, 2 * ri + 0)
        hid = hid + vec_proj                                 # fused temb + cond term
        hid = group_norm(hid, 2 * ri + 1, silu=True)
        # dropout(p=0.0) is the identity
        hid = conv3x3(hid, 2 * ri + 1)
        out = h + hid
        if OUT_SCALE != 1.0:                                 # elided when == 1.0
            out = out * (1.0 / OUT_SCALE)
        return out

    def attention(h):
        xn = group_norm(h, 4, silu=False)
        qkv = (jnp.dot(xn.astype(MXU_DTYPE), wqkv_ref[...],
                       preferred_element_type=jnp.float32) + bqkv_ref[...])   # (S, 3C)
        q = qkv[:, 0:CH]                                     # already scaled by ATTN_SCALE
        k = qkv[:, CH:2 * CH]
        v = qkv[:, 2 * CH:3 * CH]
        # Heads stacked along sublanes: block h of q_blk holds q masked to head
        # h's channels, so ONE dot yields all heads' scores and the softmax is a
        # plain last-axis reduction (no per-head loop / concat / segmentation).
        q_blk = (jnp.concatenate([q] * NH, axis=0) * qmask_ref[...]).astype(MXU_DTYPE)
        scores = lax.dot_general(q_blk, k.astype(MXU_DTYPE),
                                 (((1,), (1,)), ((), ())),
                                 preferred_element_type=jnp.float32)          # (NH*S, S)
        m = jnp.max(scores, axis=-1, keepdims=True)
        e = jnp.exp(scores - m)
        p = e / jnp.sum(e, axis=-1, keepdims=True)           # exact softmax (f32)
        ctx_blk = jnp.dot(p.astype(MXU_DTYPE), v.astype(MXU_DTYPE),
                          preferred_element_type=jnp.float32)                 # (NH*S, C)
        # Keep head h's channel block from sublane block h and recombine heads.
        ctx = jnp.sum(ctx_blk.reshape(NH, S, CH) * hmask_ref[...], axis=0)    # (S, C)
        y = (jnp.dot(ctx.astype(MXU_DTYPE), wproj_ref[...],
                     preferred_element_type=jnp.float32) + bproj_ref[...])
        out = y + h
        if OUT_SCALE != 1.0:
            out = out * (1.0 / OUT_SCALE)
        return out

    # Fused SiLU(temb) / SiLU(cond) projection for BOTH resnets: one matmul,
    # independent of h, so it overlaps the first GroupNorm on the scheduler.
    tv = temb_ref[0]                                         # (1, T)
    cv = cond_ref[0]                                         # (1, A)
    vec = jnp.concatenate([tv * jax.nn.sigmoid(tv), cv * jax.nn.sigmoid(cv)], axis=1)
    projs = (jnp.dot(vec, wvec_ref[...], preferred_element_type=jnp.float32)
             + bvec_ref[...])                                # (1, 2C)

    h = x_ref[0]                                             # (S, C) f32
    h = resnet(h, 0, projs[:, 0:CH])
    h = attention(h)
    h = resnet(h, 1, projs[:, CH:2 * CH])
    out_ref[0] = h


# ------------------------- parameter packing (glue) -------------------------
def pack_params(p):
    """Re-lay PyTorch-style parameters into the kernel's packed layouts."""
    def conv_im2col(w):  # torch (Cout, Cin, 3, 3) -> (9*Cin, Cout), tap-major rows
        return jnp.transpose(w, (2, 3, 1, 0)).reshape(9 * w.shape[1], w.shape[0])

    r0, r1, a0 = p["resnet0"], p["resnet1"], p["attn0"]
    # norm order: [r0.norm1, r0.norm2, r1.norm1, r1.norm2, attn.group_norm]
    ngb = jnp.stack([
        jnp.stack([r0["norm1_g"], r0["norm1_b"]]),
        jnp.stack([r0["norm2_g"], r0["norm2_b"]]),
        jnp.stack([r1["norm1_g"], r1["norm1_b"]]),
        jnp.stack([r1["norm2_g"], r1["norm2_b"]]),
        jnp.stack([a0["gn_g"], a0["gn_b"]]),
    ]).reshape(5, 2, 1, CH).astype(DTYPE)
    # conv order: [r0.conv1, r0.conv2, r1.conv1, r1.conv2]; im2col layout (9C, C)
    convw = jnp.stack([conv_im2col(r0["conv1_w"]), conv_im2col(r0["conv2_w"]),
                       conv_im2col(r1["conv1_w"]), conv_im2col(r1["conv2_w"])]).astype(MXU_DTYPE)
    convb = jnp.stack([r0["conv1_b"], r0["conv2_b"],
                       r1["conv1_b"], r1["conv2_b"]]).reshape(4, 1, CH).astype(DTYPE)
    # fused [SiLU(temb) || SiLU(cond)] projection; both resnets stacked along N
    wvec = jnp.concatenate([
        jnp.concatenate([r0["temb_w"].T, r1["temb_w"].T], axis=1),   # (T, 2C)
        jnp.concatenate([r0["cond_w"].T, r1["cond_w"].T], axis=1),   # (A, 2C)
    ], axis=0).astype(DTYPE)                                          # (T+A, 2C)
    bvec = jnp.concatenate([r0["temb_b"] + r0["cond_b"],
                            r1["temb_b"] + r1["cond_b"]]).reshape(1, 2 * CH).astype(DTYPE)
    # merged QKV, attention scale folded into the q slice
    wqkv = jnp.concatenate([a0["q_w"].T * ATTN_SCALE, a0["k_w"].T, a0["v_w"].T],
                           axis=1).astype(MXU_DTYPE)                  # (C, 3C)
    bqkv = jnp.concatenate([a0["q_b"] * ATTN_SCALE, a0["k_b"],
                            a0["v_b"]]).reshape(1, 3 * CH).astype(DTYPE)
    wproj = a0["proj_w"].T.astype(MXU_DTYPE)
    bproj = a0["proj_b"].reshape(1, CH).astype(DTYPE)
    # group-average matrix: (sums @ gavg)[c] = per-group mean for channel c
    gidx = jnp.arange(CH) // CG
    gavg = (gidx[:, None] == gidx[None, :]).astype(DTYPE) / float(S * CG)
    # per-head channel masks (ctx recombination + sublane-stacked query masking)
    hidx = jnp.arange(CH) // DH
    hmask = (jnp.arange(NH)[:, None] == hidx[None, :]).astype(DTYPE).reshape(NH, 1, CH)
    qmask = (jnp.repeat(jnp.arange(NH), S)[:, None] == hidx[None, :]).astype(DTYPE)  # (NH*S, C)
    # 3x3-conv edge-validity masks per tap (flat tokens, row-major (H, W))
    ii = jnp.arange(S) // W
    jj = jnp.arange(S) % W
    cmask = jnp.stack([
        ((ii + kh - 1 >= 0) & (ii + kh - 1 < H) &
         (jj + kw - 1 >= 0) & (jj + kw - 1 < W)).astype(DTYPE)
        for kh in range(3) for kw in range(3)
    ]).reshape(9, S, 1)
    return dict(gavg=gavg, cmask=cmask, qmask=qmask, hmask=hmask, ngb=ngb,
                convw=convw, convb=convb, wvec=wvec, bvec=bvec,
                wqkv=wqkv, bqkv=bqkv, wproj=wproj, bproj=bproj)


# ------------------------------ forward wrapper ------------------------------
@jax.jit
def mid_block_forward(params, hidden_states, temb, condition):
    bsz, c, hh, ww = hidden_states.shape
    assert (c, hh, ww) == (CH, H, W)
    pk = pack_params(params)

    # single NCHW -> tokens conversion at entry
    x_tok = jnp.transpose(hidden_states, (0, 2, 3, 1)).reshape(bsz, S, CH).astype(DTYPE)
    temb3 = temb.reshape(bsz, 1, TEMB_CH).astype(DTYPE)
    cond3 = condition.reshape(bsz, 1, COND_DIM).astype(DTYPE)

    out = pl.pallas_call(
        midblock_kernel,
        out_shape=jax.ShapeDtypeStruct((bsz, S, CH), DTYPE),
        grid=(bsz,),
        in_specs=[
            pl.BlockSpec((1, S, CH), lambda i: (i, 0, 0)),                # x tokens
            pl.BlockSpec((1, 1, TEMB_CH), lambda i: (i, 0, 0)),           # temb
            pl.BlockSpec((1, 1, COND_DIM), lambda i: (i, 0, 0)),          # condition
            pl.BlockSpec((CH, CH), lambda i: (0, 0)),                     # group-avg matrix
            pl.BlockSpec((9, S, 1), lambda i: (0, 0, 0)),                 # conv edge masks
            pl.BlockSpec((NH * S, CH), lambda i: (0, 0)),                 # head masks (queries)
            pl.BlockSpec((NH, 1, CH), lambda i: (0, 0, 0)),               # head masks (ctx)
            pl.BlockSpec((5, 2, 1, CH), lambda i: (0, 0, 0, 0)),          # norm gamma/beta
            pl.BlockSpec((4, 9 * CH, CH), lambda i: (0, 0, 0)),           # conv im2col weights
            pl.BlockSpec((4, 1, CH), lambda i: (0, 0, 0)),                # conv biases
            pl.BlockSpec((TEMB_CH + COND_DIM, 2 * CH), lambda i: (0, 0)), # fused temb+cond W
            pl.BlockSpec((1, 2 * CH), lambda i: (0, 0)),                  # fused temb+cond b
            pl.BlockSpec((CH, 3 * CH), lambda i: (0, 0)),                 # merged W_qkv
            pl.BlockSpec((1, 3 * CH), lambda i: (0, 0)),                  # merged b_qkv
            pl.BlockSpec((CH, CH), lambda i: (0, 0)),                     # W_proj
            pl.BlockSpec((1, CH), lambda i: (0, 0)),                      # b_proj
        ],
        out_specs=pl.BlockSpec((1, S, CH), lambda i: (i, 0, 0)),
        compiler_params=pltpu.CompilerParams(dimension_semantics=("parallel",)),
    )(x_tok, temb3, cond3, pk["gavg"], pk["cmask"], pk["qmask"], pk["hmask"],
      pk["ngb"], pk["convw"], pk["convb"], pk["wvec"], pk["bvec"], pk["wqkv"],
      pk["bqkv"], pk["wproj"], pk["bproj"])

    # single tokens -> NCHW conversion at exit
    return jnp.transpose(out.reshape(bsz, H, W, CH), (0, 3, 1, 2))


# -------------------------------- parameters --------------------------------
def init_params(key):
    ks = iter(jax.random.split(key, 64))

    def nrm(shape, scale=0.05):
        return scale * jax.random.normal(next(ks), shape, DTYPE)

    def resnet_params():
        return {
            "norm1_g": 1.0 + nrm((CH,), 0.1), "norm1_b": nrm((CH,), 0.1),
            "conv1_w": nrm((CH, CH, 3, 3)),   "conv1_b": nrm((CH,), 0.01),
            "temb_w": nrm((CH, TEMB_CH)),     "temb_b": nrm((CH,), 0.01),
            "cond_w": nrm((CH, COND_DIM)),    "cond_b": nrm((CH,), 0.01),
            "norm2_g": 1.0 + nrm((CH,), 0.1), "norm2_b": nrm((CH,), 0.1),
            "conv2_w": nrm((CH, CH, 3, 3)),   "conv2_b": nrm((CH,), 0.01),
        }

    attn = {
        "gn_g": 1.0 + nrm((CH,), 0.1), "gn_b": nrm((CH,), 0.1),
        "q_w": nrm((CH, CH)), "q_b": nrm((CH,), 0.01),
        "k_w": nrm((CH, CH)), "k_b": nrm((CH,), 0.01),
        "v_w": nrm((CH, CH)), "v_b": nrm((CH,), 0.01),
        "proj_w": nrm((CH, CH)), "proj_b": nrm((CH,), 0.01),
    }
    return {"resnet0": resnet_params(), "resnet1": resnet_params(), "attn0": attn}


# ----------------------------------- main ------------------------------------
if __name__ == "__main__":
    key = jax.random.PRNGKey(0)
    kx, kt, kc, kp = jax.random.split(key, 4)

    hidden_states = jax.random.normal(kx, (B, CH, H, W), DTYPE)
    temb = jax.random.normal(kt, (B, TEMB_CH), DTYPE)
    condition = jax.random.normal(kc, (B, COND_DIM), DTYPE)
    params = init_params(kp)

    out = mid_block_forward(params, hidden_states, temb, condition)
    out = jax.block_until_ready(out)

    assert out.shape == (B, CH, H, W)
    assert bool(jnp.all(jnp.isfinite(out)))
    print("KERNEL_OK")
</pallas_src>

<mosaic_0001>
module attributes {stable_mosaic.version = 11 : i64} {
  func.func @midblock_kernel(%arg0: i32, %arg1: memref<1x64x32xf32, #tpu.memory_space<vmem>>, %arg2: memref<1x1x32xf32, #tpu.memory_space<vmem>>, %arg3: memref<1x1x32xf32, #tpu.memory_space<vmem>>, %arg4: memref<32x32xf32, #tpu.memory_space<vmem>>, %arg5: memref<9x64x1xf32, #tpu.memory_space<vmem>>, %arg6: memref<256x32xf32, #tpu.memory_space<vmem>>, %arg7: memref<4x1x32xf32, #tpu.memory_space<vmem>>, %arg8: memref<5x2x1x32xf32, #tpu.memory_space<vmem>>, %arg9: memref<4x288x32xbf16, #tpu.memory_space<vmem>>, %arg10: memref<4x1x32xf32, #tpu.memory_space<vmem>>, %arg11: memref<64x64xf32, #tpu.memory_space<vmem>>, %arg12: memref<1x64xf32, #tpu.memory_space<vmem>>, %arg13: memref<32x96xbf16, #tpu.memory_space<vmem>>, %arg14: memref<1x96xf32, #tpu.memory_space<vmem>>, %arg15: memref<32x32xbf16, #tpu.memory_space<vmem>>, %arg16: memref<1x32xf32, #tpu.memory_space<vmem>>, %arg17: memref<1x64x32xf32, #tpu.memory_space<vmem>>) attributes {dimension_semantics = [#tpu.dimension_semantics<parallel>], iteration_bounds = array<i64: 2>, scalar_prefetch = 0 : i64, scratch_operands = 0 : i64, tpu.core_type = #tpu.core_type<tc>, window_params = [{transform_indices = @transform_0, window_bounds = array<i64: 1, 64, 32>}, {transform_indices = @transform_1, window_bounds = array<i64: 1, 1, 32>}, {transform_indices = @transform_2, window_bounds = array<i64: 1, 1, 32>}, {pipeline_mode = #tpu.pipeline_mode<synchronous>, transform_indices = @transform_3, window_bounds = array<i64: 32, 32>}, {pipeline_mode = #tpu.pipeline_mode<synchronous>, transform_indices = @transform_4, window_bounds = array<i64: 9, 64, 1>}, {pipeline_mode = #tpu.pipeline_mode<synchronous>, transform_indices = @transform_5, window_bounds = array<i64: 256, 32>}, {pipeline_mode = #tpu.pipeline_mode<synchronous>, transform_indices = @transform_6, window_bounds = array<i64: 4, 1, 32>}, {pipeline_mode = #tpu.pipeline_mode<synchronous>, transform_indices = @transform_7, window_bounds = array<i64: 5, 2, 1, 32>}, {pipeline_mode = #tpu.pipeline_mode<synchronous>, transform_indices = @transform_8, window_bounds = array<i64: 4, 288, 32>}, {pipeline_mode = #tpu.pipeline_mode<synchronous>, transform_indices = @transform_9, window_bounds = array<i64: 4, 1, 32>}, {pipeline_mode = #tpu.pipeline_mode<synchronous>, transform_indices = @transform_10, window_bounds = array<i64: 64, 64>}, {pipeline_mode = #tpu.pipeline_mode<synchronous>, transform_indices = @transform_11, window_bounds = array<i64: 1, 64>}, {pipeline_mode = #tpu.pipeline_mode<synchronous>, transform_indices = @transform_12, window_bounds = array<i64: 32, 96>}, {pipeline_mode = #tpu.pipeline_mode<synchronous>, transform_indices = @transform_13, window_bounds = array<i64: 1, 96>}, {pipeline_mode = #tpu.pipeline_mode<synchronous>, transform_indices = @transform_14, window_bounds = array<i64: 32, 32>}, {pipeline_mode = #tpu.pipeline_mode<synchronous>, transform_indices = @transform_15, window_bounds = array<i64: 1, 32>}, {transform_indices = @transform_16, window_bounds = array<i64: 1, 64, 32>}]} {
    %c0 = arith.constant 0 : index
    %c0_0 = arith.constant 0 : index
    %0 = vector.load %arg4[%c0, %c0_0] : memref<32x32xf32, #tpu.memory_space<vmem>>, vector<32x32xf32>
    %c0_1 = arith.constant 0 : index
    %c0_2 = arith.constant 0 : index
    %c0_3 = arith.constant 0 : index
    %1 = vector.load %arg2[%c0_1, %c0_2, %c0_3] : memref<1x1x32xf32, #tpu.memory_space<vmem>>, vector<1x1x32xf32>
    %2 = vector.shape_cast %1 : vector<1x1x32xf32> to vector<1x32xf32>
    %c0_4 = arith.constant 0 : index
    %c0_5 = arith.constant 0 : index
    %c0_6 = arith.constant 0 : index
    %3 = vector.load %arg3[%c0_4, %c0_5, %c0_6] : memref<1x1x32xf32, #tpu.memory_space<vmem>>, vector<1x1x32xf32>
    %4 = vector.shape_cast %3 : vector<1x1x32xf32> to vector<1x32xf32>
    %5 = arith.negf %2 : vector<1x32xf32>
    %6 = math.exp %5 : vector<1x32xf32>
    %cst = arith.constant 1.000000e+00 : f32
    %7 = vector.broadcast %cst : f32 to vector<1x32xf32>
    %8 = arith.addf %7, %6 : vector<1x32xf32>
    %9 = arith.divf %7, %8 : vector<1x32xf32>
    %10 = arith.mulf %2, %9 : vector<1x32xf32>
    %11 = arith.negf %4 : vector<1x32xf32>
    %12 = math.exp %11 : vector<1x32xf32>
    %cst_7 = arith.constant 1.000000e+00 : f32
    %13 = vector.broadcast %cst_7 : f32 to vector<1x32xf32>
    %14 = arith.addf %13, %12 : vector<1x32xf32>
    %15 = arith.divf %13, %14 : vector<1x32xf32>
    %16 = arith.mulf %4, %15 : vector<1x32xf32>
    %17 = tpu.concatenate %10, %16 in 1 : vector<1x32xf32>, vector<1x32xf32> -> vector<1x64xf32>
    %c0_8 = arith.constant 0 : index
    %c0_9 = arith.constant 0 : index
    %18 = vector.load %arg11[%c0_8, %c0_9] : memref<64x64xf32, #tpu.memory_space<vmem>>, vector<64x64xf32>
    %cst_10 = arith.constant dense<0.000000e+00> : vector<1x64xf32>
    %19 = tpu.matmul %17, %18, %cst_10 {dimension_numbers = #tpu.dot_dimension_numbers<[1], [0], [0], [1], [0, 0, 1, 1], [], []>} : vector<1x64xf32>, vector<64x64xf32>, vector<1x64xf32> -> vector<1x64xf32>
    %c0_11 = arith.constant 0 : index
    %c0_12 = arith.constant 0 : index
    %20 = vector.load %arg12[%c0_11, %c0_12] : memref<1x64xf32, #tpu.memory_space<vmem>>, vector<1x64xf32>
    %21 = arith.addf %19, %20 : vector<1x64xf32>
    %c0_13 = arith.constant 0 : index
    %c0_14 = arith.constant 0 : index
    %c0_15 = arith.constant 0 : index
    %22 = vector.load %arg1[%c0_13, %c0_14, %c0_15] : memref<1x64x32xf32, #tpu.memory_space<vmem>>, vector<1x64x32xf32>
    %23 = vector.shape_cast %22 : vector<1x64x32xf32> to vector<64x32xf32>
    %24 = vector.extract_strided_slice %21 {offsets = [0, 0], sizes = [1, 32], strides = [1, 1]} : vector<1x64xf32> to vector<1x32xf32>
    %c0_16 = arith.constant 0 : index
    %c0_17 = arith.constant 0 : index
    %c0_18 = arith.constant 0 : index
    %c0_19 = arith.constant 0 : index
    %25 = vector.load %arg8[%c0_16, %c0_17, %c0_18, %c0_19] : memref<5x2x1x32xf32, #tpu.memory_space<vmem>>, vector<1x1x1x32xf32>
    %26 = vector.shape_cast %25 : vector<1x1x1x32xf32> to vector<1x32xf32>
    %c0_20 = arith.constant 0 : index
    %c1 = arith.constant 1 : index
    %c0_21 = arith.constant 0 : index
    %c0_22 = arith.constant 0 : index
    %27 = vector.load %arg8[%c0_20, %c1, %c0_21, %c0_22] : memref<5x2x1x32xf32, #tpu.memory_space<vmem>>, vector<1x1x1x32xf32>
    %28 = vector.shape_cast %27 : vector<1x1x1x32xf32> to vector<1x32xf32>
    %cst_23 = arith.constant dense<0.000000e+00> : vector<32xf32>
    %29 = vector.multi_reduction <add>, %23, %cst_23 [0] : vector<64x32xf32> to vector<32xf32>
    %30 = vector.shape_cast %29 : vector<32xf32> to vector<1x32xf32>
    %31 = arith.mulf %23, %23 : vector<64x32xf32>
    %cst_24 = arith.constant dense<0.000000e+00> : vector<32xf32>
    %32 = vector.multi_reduction <add>, %31, %cst_24 [0] : vector<64x32xf32> to vector<32xf32>
    %33 = vector.shape_cast %32 : vector<32xf32> to vector<1x32xf32>
    %34 = tpu.concatenate %30, %33 in 0 : vector<1x32xf32>, vector<1x32xf32> -> vector<2x32xf32>
    %cst_25 = arith.constant dense<0.000000e+00> : vector<2x32xf32>
    %35 = tpu.matmul %34, %0, %cst_25 {dimension_numbers = #tpu.dot_dimension_numbers<[1], [0], [0], [1], [0, 0, 1, 1], [], []>} : vector<2x32xf32>, vector<32x32xf32>, vector<2x32xf32> -> vector<2x32xf32>
    %36 = vector.extract_strided_slice %35 {offsets = [0, 0], sizes = [1, 32], strides = [1, 1]} : vector<2x32xf32> to vector<1x32xf32>
    %37 = vector.extract_strided_slice %35 {offsets = [1, 0], sizes = [1, 32], strides = [1, 1]} : vector<2x32xf32> to vector<1x32xf32>
    %38 = arith.mulf %36, %36 : vector<1x32xf32>
    %39 = arith.subf %37, %38 : vector<1x32xf32>
    %cst_26 = arith.constant 0.000000e+00 : f32
    %40 = vector.broadcast %cst_26 : f32 to vector<1x32xf32>
    %41 = arith.maximumf %39, %40 : vector<1x32xf32>
    %42 = vector.broadcast %36 : vector<1x32xf32> to vector<64x32xf32>
    %43 = arith.subf %23, %42 : vector<64x32xf32>
    %cst_27 = arith.constant 9.99999997E-7 : f32
    %44 = vector.broadcast %cst_27 : f32 to vector<1x32xf32>
    %45 = arith.addf %41, %44 : vector<1x32xf32>
    %46 = math.rsqrt %45 : vector<1x32xf32>
    %47 = vector.broadcast %46 : vector<1x32xf32> to vector<64x32xf32>
    %48 = arith.mulf %43, %47 : vector<64x32xf32>
    %49 = vector.broadcast %26 : vector<1x32xf32> to vector<64x32xf32>
    %50 = arith.mulf %48, %49 : vector<64x32xf32>
    %51 = vector.broadcast %28 : vector<1x32xf32> to vector<64x32xf32>
    %52 = arith.addf %50, %51 : vector<64x32xf32>
    %53 = arith.negf %52 : vector<64x32xf32>
    %54 = math.exp %53 : vector<64x32xf32>
    %cst_28 = arith.constant 1.000000e+00 : f32
    %55 = vector.broadcast %cst_28 : f32 to vector<64x32xf32>
    %56 = arith.addf %55, %54 : vector<64x32xf32>
    %57 = arith.divf %55, %56 : vector<64x32xf32>
    %58 = arith.mulf %52, %57 : vector<64x32xf32>
    %c9_i32 = arith.constant 9 : i32
    %59 = tpu.dynamic_rotate %58 by %c9_i32 dim 0 : vector<64x32xf32>, i32 -> vector<64x32xf32>
    %c0_29 = arith.constant 0 : index
    %c0_30 = arith.constant 0 : index
    %c0_31 = arith.constant 0 : index
    %60 = vector.load %arg5[%c0_29, %c0_30, %c0_31] : memref<9x64x1xf32, #tpu.memory_space<vmem>>, vector<1x64x1xf32>
    %61 = vector.shape_cast %60 : vector<1x64x1xf32> to vector<64x1xf32>
    %62 = vector.broadcast %61 : vector<64x1xf32> to vector<64x32xf32>
    %63 = arith.mulf %59, %62 : vector<64x32xf32>
    %c8_i32 = arith.constant 8 : i32
    %64 = tpu.dynamic_rotate %58 by %c8_i32 dim 0 : vector<64x32xf32>, i32 -> vector<64x32xf32>
    %c1_32 = arith.constant 1 : index
    %c0_33 = arith.constant 0 : index
    %c0_34 = arith.constant 0 : index
    %65 = vector.load %arg5[%c1_32, %c0_33, %c0_34] : memref<9x64x1xf32, #tpu.memory_space<vmem>>, vector<1x64x1xf32>
    %66 = vector.shape_cast %65 : vector<1x64x1xf32> to vector<64x1xf32>
    %67 = vector.broadcast %66 : vector<64x1xf32> to vector<64x32xf32>
    %68 = arith.mulf %64, %67 : vector<64x32xf32>
    %c7_i32 = arith.constant 7 : i32
    %69 = tpu.dynamic_rotate %58 by %c7_i32 dim 0 : vector<64x32xf32>, i32 -> vector<64x32xf32>
    %c2 = arith.constant 2 : index
    %c0_35 = arith.constant 0 : index
    %c0_36 = arith.constant 0 : index
    %70 = vector.load %arg5[%c2, %c0_35, %c0_36] : memref<9x64x1xf32, #tpu.memory_space<vmem>>, vector<1x64x1xf32>
    %71 = vector.shape_cast %70 : vector<1x64x1xf32> to vector<64x1xf32>
    %72 = vector.broadcast %71 : vector<64x1xf32> to vector<64x32xf32>
    %73 = arith.mulf %69, %72 : vector<64x32xf32>
    %c1_i32 = arith.constant 1 : i32
    %74 = tpu.dynamic_rotate %58 by %c1_i32 dim 0 : vector<64x32xf32>, i32 -> vector<64x32xf32>
    %c3 = arith.constant 3 : index
    %c0_37 = arith.constant 0 : index
    %c0_38 = arith.constant 0 : index
    %75 = vector.load %arg5[%c3, %c0_37, %c0_38] : memref<9x64x1xf32, #tpu.memory_space<vmem>>, vector<1x64x1xf32>
    %76 = vector.shape_cast %75 : vector<1x64x1xf32> to vector<64x1xf32>
    %77 = vector.broadcast %76 : vector<64x1xf32> to vector<64x32xf32>
    %78 = arith.mulf %74, %77 : vector<64x32xf32>
    %c63_i32 = arith.constant 63 : i32
    %79 = tpu.dynamic_rotate %58 by %c63_i32 dim 0 : vector<64x32xf32>, i32 -> vector<64x32xf32>
    %c5 = arith.constant 5 : index
    %c0_39 = arith.constant 0 : index
    %c0_40 = arith.constant 0 : index
    %80 = vector.load %arg5[%c5, %c0_39, %c0_40] : memref<9x64x1xf32, #tpu.memory_space<vmem>>, vector<1x64x1xf32>
    %81 = vector.shape_cast %80 : vector<1x64x1xf32> to vector<64x1xf32>
    %82 = vector.broadcast %81 : vector<64x1xf32> to vector<64x32xf32>
    %83 = arith.mulf %79, %82 : vector<64x32xf32>
    %c57_i32 = arith.constant 57 : i32
    %84 = tpu.dynamic_rotate %58 by %c57_i32 dim 0 : vector<64x32xf32>, i32 -> vector<64x32xf32>
    %c6 = arith.constant 6 : index
    %c0_41 = arith.constant 0 : index
    %c0_42 = arith.constant 0 : index
    %85 = vector.load %arg5[%c6, %c0_41, %c0_42] : memref<9x64x1xf32, #tpu.memory_space<vmem>>, vector<1x64x1xf32>
    %86 = vector.shape_cast %85 : vector<1x64x1xf32> to vector<64x1xf32>
    %87 = vector.broadcast %86 : vector<64x1xf32> to vector<64x32xf32>
    %88 = arith.mulf %84, %87 : vector<64x32xf32>
    %c56_i32 = arith.constant 56 : i32
    %89 = tpu.dynamic_rotate %58 by %c56_i32 dim 0 : vector<64x32xf32>, i32 -> vector<64x32xf32>
    %c7 = arith.constant 7 : index
    %c0_43 = arith.constant 0 : index
    %c0_44 = arith.constant 0 : index
    %90 = vector.load %arg5[%c7, %c0_43, %c0_44] : memref<9x64x1xf32, #tpu.memory_space<vmem>>, vector<1x64x1xf32>
    %91 = vector.shape_cast %90 : vector<1x64x1xf32> to vector<64x1xf32>
    %92 = vector.broadcast %91 : vector<64x1xf32> to vector<64x32xf32>
    %93 = arith.mulf %89, %92 : vector<64x32xf32>
    %c55_i32 = arith.constant 55 : i32
    %94 = tpu.dynamic_rotate %58 by %c55_i32 dim 0 : vector<64x32xf32>, i32 -> vector<64x32xf32>
    %c8 = arith.constant 8 : index
    %c0_45 = arith.constant 0 : index
    %c0_46 = arith.constant 0 : index
    %95 = vector.load %arg5[%c8, %c0_45, %c0_46] : memref<9x64x1xf32, #tpu.memory_space<vmem>>, vector<1x64x1xf32>
    %96 = vector.shape_cast %95 : vector<1x64x1xf32> to vector<64x1xf32>
    %97 = vector.broadcast %96 : vector<64x1xf32> to vector<64x32xf32>
    %98 = arith.mulf %94, %97 : vector<64x32xf32>
    %99 = tpu.concatenate %63, %68, %73, %78, %58, %83, %88, %93, %98 in 1 : vector<64x32xf32>, vector<64x32xf32>, vector<64x32xf32>, vector<64x32xf32>, vector<64x32xf32>, vector<64x32xf32>, vector<64x32xf32>, vector<64x32xf32>, vector<64x32xf32> -> vector<64x288xf32>
    %100 = arith.truncf %99 : vector<64x288xf32> to vector<64x288xbf16>
    %c0_47 = arith.constant 0 : index
    %c0_48 = arith.constant 0 : index
    %c0_49 = arith.constant 0 : index
    %101 = vector.load %arg9[%c0_47, %c0_48, %c0_49] : memref<4x288x32xbf16, #tpu.memory_space<vmem>>, vector<1x288x32xbf16>
    %102 = vector.shape_cast %101 : vector<1x288x32xbf16> to vector<288x32xbf16>
    %cst_50 = arith.constant dense<0.000000e+00> : vector<64x32xf32>
    %103 = tpu.matmul %100, %102, %cst_50 {dimension_numbers = #tpu.dot_dimension_numbers<[1], [0], [0], [1], [0, 0, 1, 1], [], []>} : vector<64x288xbf16>, vector<288x32xbf16>, vector<64x32xf32> -> vector<64x32xf32>
    %c0_51 = arith.constant 0 : index
    %c0_52 = arith.constant 0 : index
    %c0_53 = arith.constant 0 : index
    %104 = vector.load %arg10[%c0_51, %c0_52, %c0_53] : memref<4x1x32xf32, #tpu.memory_space<vmem>>, vector<1x1x32xf32>
    %105 = vector.shape_cast %104 : vector<1x1x32xf32> to vector<1x32xf32>
    %106 = vector.broadcast %105 : vector<1x32xf32> to vector<64x32xf32>
    %107 = arith.addf %103, %106 : vector<64x32xf32>
    %108 = vector.broadcast %24 : vector<1x32xf32> to vector<64x32xf32>
    %109 = arith.addf %107, %108 : vector<64x32xf32>
    %c1_54 = arith.constant 1 : index
    %c0_55 = arith.constant 0 : index
    %c0_56 = arith.constant 0 : index
    %c0_57 = arith.constant 0 : index
    %110 = vector.load %arg8[%c1_54, %c0_55, %c0_56, %c0_57] : memref<5x2x1x32xf32, #tpu.memory_space<vmem>>, vector<1x1x1x32xf32>
    %111 = vector.shape_cast %110 : vector<1x1x1x32xf32> to vector<1x32xf32>
    %c1_58 = arith.constant 1 : index
    %c1_59 = arith.constant 1 : index
    %c0_60 = arith.constant 0 : index
    %c0_61 = arith.constant 0 : index
    %112 = vector.load %arg8[%c1_58, %c1_59, %c0_60, %c0_61] : memref<5x2x1x32xf32, #tpu.memory_space<vmem>>, vector<1x1x1x32xf32>
    %113 = vector.shape_cast %112 : vector<1x1x1x32xf32> to vector<1x32xf32>
    %cst_62 = arith.constant dense<0.000000e+00> : vector<32xf32>
    %114 = vector.multi_reduction <add>, %109, %cst_62 [0] : vector<64x32xf32> to vector<32xf32>
    %115 = vector.shape_cast %114 : vector<32xf32> to vector<1x32xf32>
    %116 = arith.mulf %109, %109 : vector<64x32xf32>
    %cst_63 = arith.constant dense<0.000000e+00> : vector<32xf32>
    %117 = vector.multi_reduction <add>, %116, %cst_63 [0] : vector<64x32xf32> to vector<32xf32>
    %118 = vector.shape_cast %117 : vector<32xf32> to vector<1x32xf32>
    %119 = tpu.concatenate %115, %118 in 0 : vector<1x32xf32>, vector<1x32xf32> -> vector<2x32xf32>
    %cst_64 = arith.constant dense<0.000000e+00> : vector<2x32xf32>
    %120 = tpu.matmul %119, %0, %cst_64 {dimension_numbers = #tpu.dot_dimension_numbers<[1], [0], [0], [1], [0, 0, 1, 1], [], []>} : vector<2x32xf32>, vector<32x32xf32>, vector<2x32xf32> -> vector<2x32xf32>
    %121 = vector.extract_strided_slice %120 {offsets = [0, 0], sizes = [1, 32], strides = [1, 1]} : vector<2x32xf32> to vector<1x32xf32>
    %122 = vector.extract_strided_slice %120 {offsets = [1, 0], sizes = [1, 32], strides = [1, 1]} : vector<2x32xf32> to vector<1x32xf32>
    %123 = arith.mulf %121, %121 : vector<1x32xf32>
    %124 = arith.subf %122, %123 : vector<1x32xf32>
    %cst_65 = arith.constant 0.000000e+00 : f32
    %125 = vector.broadcast %cst_65 : f32 to vector<1x32xf32>
    %126 = arith.maximumf %124, %125 : vector<1x32xf32>
    %127 = vector.broadcast %121 : vector<1x32xf32> to vector<64x32xf32>
    %128 = arith.subf %109, %127 : vector<64x32xf32>
    %cst_66 = arith.constant 9.99999997E-7 : f32
    %129 = vector.broadcast %cst_66 : f32 to vector<1x32xf32>
    %130 = arith.addf %126, %129 : vector<1x32xf32>
    %131 = math.rsqrt %130 : vector<1x32xf32>
    %132 = vector.broadcast %131 : vector<1x32xf32> to vector<64x32xf32>
    %133 = arith.mulf %128, %132 : vector<64x32xf32>
    %134 = vector.broadcast %111 : vector<1x32xf32> to vector<64x32xf32>
    %135 = arith.mulf %133, %134 : vector<64x32xf32>
    %136 = vector.broadcast %113 : vector<1x32xf32> to vector<64x32xf32>
    %137 = arith.addf %135, %136 : vector<64x32xf32>
    %138 = arith.negf %137 : vector<64x32xf32>
    %139 = math.exp %138 : vector<64x32xf32>
    %cst_67 = arith.constant 1.000000e+00 : f32
    %140 = vector.broadcast %cst_67 : f32 to vector<64x32xf32>
    %141 = arith.addf %140, %139 : vector<64x32xf32>
    %142 = arith.divf %140, %141 : vector<64x32xf32>
    %143 = arith.mulf %137, %142 : vector<64x32xf32>
    %c9_i32_68 = arith.constant 9 : i32
    %144 = tpu.dynamic_rotate %143 by %c9_i32_68 dim 0 : vector<64x32xf32>, i32 -> vector<64x32xf32>
    %c0_69 = arith.constant 0 : index
    %c0_70 = arith.constant 0 : index
    %c0_71 = arith.constant 0 : index
    %145 = vector.load %arg5[%c0_69, %c0_70, %c0_71] : memref<9x64x1xf32, #tpu.memory_space<vmem>>, vector<1x64x1xf32>
    %146 = vector.shape_cast %145 : vector<1x64x1xf32> to vector<64x1xf32>
    %147 = vector.broadcast %146 : vector<64x1xf32> to vector<64x32xf32>
    %148 = arith.mulf %144, %147 : vector<64x32xf32>
    %c8_i32_72 = arith.constant 8 : i32
    %149 = tpu.dynamic_rotate %143 by %c8_i32_72 dim 0 : vector<64x32xf32>, i32 -> vector<64x32xf32>
    %c1_73 = arith.constant 1 : index
    %c0_74 = arith.constant 0 : index
    %c0_75 = arith.constant 0 : index
    %150 = vector.load %arg5[%c1_73, %c0_74, %c0_75] : memref<9x64x1xf32, #tpu.memory_space<vmem>>, vector<1x64x1xf32>
    %151 = vector.shape_cast %150 : vector<1x64x1xf32> to vector<64x1xf32>
    %152 = vector.broadcast %151 : vector<64x1xf32> to vector<64x32xf32>
    %153 = arith.mulf %149, %152 : vector<64x32xf32>
    %c7_i32_76 = arith.constant 7 : i32
    %154 = tpu.dynamic_rotate %143 by %c7_i32_76 dim 0 : vector<64x32xf32>, i32 -> vector<64x32xf32>
    %c2_77 = arith.constant 2 : index
    %c0_78 = arith.constant 0 : index
    %c0_79 = arith.constant 0 : index
    %155 = vector.load %arg5[%c2_77, %c0_78, %c0_79] : memref<9x64x1xf32, #tpu.memory_space<vmem>>, vector<1x64x1xf32>
    %156 = vector.shape_cast %155 : vector<1x64x1xf32> to vector<64x1xf32>
    %157 = vector.broadcast %156 : vector<64x1xf32> to vector<64x32xf32>
    %158 = arith.mulf %154, %157 : vector<64x32xf32>
    %c1_i32_80 = arith.constant 1 : i32
    %159 = tpu.dynamic_rotate %143 by %c1_i32_80 dim 0 : vector<64x32xf32>, i32 -> vector<64x32xf32>
    %c3_81 = arith.constant 3 : index
    %c0_82 = arith.constant 0 : index
    %c0_83 = arith.constant 0 : index
    %160 = vector.load %arg5[%c3_81, %c0_82, %c0_83] : memref<9x64x1xf32, #tpu.memory_space<vmem>>, vector<1x64x1xf32>
    %161 = vector.shape_cast %160 : vector<1x64x1xf32> to vector<64x1xf32>
    %162 = vector.broadcast %161 : vector<64x1xf32> to vector<64x32xf32>
    %163 = arith.mulf %159, %162 : vector<64x32xf32>
    %c63_i32_84 = arith.constant 63 : i32
    %164 = tpu.dynamic_rotate %143 by %c63_i32_84 dim 0 : vector<64x32xf32>, i32 -> vector<64x32xf32>
    %c5_85 = arith.constant 5 : index
    %c0_86 = arith.constant 0 : index
    %c0_87 = arith.constant 0 : index
    %165 = vector.load %arg5[%c5_85, %c0_86, %c0_87] : memref<9x64x1xf32, #tpu.memory_space<vmem>>, vector<1x64x1xf32>
    %166 = vector.shape_cast %165 : vector<1x64x1xf32> to vector<64x1xf32>
    %167 = vector.broadcast %166 : vector<64x1xf32> to vector<64x32xf32>
    %168 = arith.mulf %164, %167 : vector<64x32xf32>
    %c57_i32_88 = arith.constant 57 : i32
    %169 = tpu.dynamic_rotate %143 by %c57_i32_88 dim 0 : vector<64x32xf32>, i32 -> vector<64x32xf32>
    %c6_89 = arith.constant 6 : index
    %c0_90 = arith.constant 0 : index
    %c0_91 = arith.constant 0 : index
    %170 = vector.load %arg5[%c6_89, %c0_90, %c0_91] : memref<9x64x1xf32, #tpu.memory_space<vmem>>, vector<1x64x1xf32>
    %171 = vector.shape_cast %170 : vector<1x64x1xf32> to vector<64x1xf32>
    %172 = vector.broadcast %171 : vector<64x1xf32> to vector<64x32xf32>
    %173 = arith.mulf %169, %172 : vector<64x32xf32>
    %c56_i32_92 = arith.constant 56 : i32
    %174 = tpu.dynamic_rotate %143 by %c56_i32_92 dim 0 : vector<64x32xf32>, i32 -> vector<64x32xf32>
    %c7_93 = arith.constant 7 : index
    %c0_94 = arith.constant 0 : index
    %c0_95 = arith.constant 0 : index
    %175 = vector.load %arg5[%c7_93, %c0_94, %c0_95] : memref<9x64x1xf32, #tpu.memory_space<vmem>>, vector<1x64x1xf32>
    %176 = vector.shape_cast %175 : vector<1x64x1xf32> to vector<64x1xf32>
    %177 = vector.broadcast %176 : vector<64x1xf32> to vector<64x32xf32>
    %178 = arith.mulf %174, %177 : vector<64x32xf32>
    %c55_i32_96 = arith.constant 55 : i32
    %179 = tpu.dynamic_rotate %143 by %c55_i32_96 dim 0 : vector<64x32xf32>, i32 -> vector<64x32xf32>
    %c8_97 = arith.constant 8 : index
    %c0_98 = arith.constant 0 : index
    %c0_99 = arith.constant 0 : index
    %180 = vector.load %arg5[%c8_97, %c0_98, %c0_99] : memref<9x64x1xf32, #tpu.memory_space<vmem>>, vector<1x64x1xf32>
    %181 = vector.shape_cast %180 : vector<1x64x1xf32> to vector<64x1xf32>
    %182 = vector.broadcast %181 : vector<64x1xf32> to vector<64x32xf32>
    %183 = arith.mulf %179, %182 : vector<64x32xf32>
    %184 = tpu.concatenate %148, %153, %158, %163, %143, %168, %173, %178, %183 in 1 : vector<64x32xf32>, vector<64x32xf32>, vector<64x32xf32>, vector<64x32xf32>, vector<64x32xf32>, vector<64x32xf32>, vector<64x32xf32>, vector<64x32xf32>, vector<64x32xf32> -> vector<64x288xf32>
    %185 = arith.truncf %184 : vector<64x288xf32> to vector<64x288xbf16>
    %c1_100 = arith.constant 1 : index
    %c0_101 = arith.constant 0 : index
    %c0_102 = arith.constant 0 : index
    %186 = vector.load %arg9[%c1_100, %c0_101, %c0_102] : memref<4x288x32xbf16, #tpu.memory_space<vmem>>, vector<1x288x32xbf16>
    %187 = vector.shape_cast %186 : vector<1x288x32xbf16> to vector<288x32xbf16>
    %cst_103 = arith.constant dense<0.000000e+00> : vector<64x32xf32>
    %188 = tpu.matmul %185, %187, %cst_103 {dimension_numbers = #tpu.dot_dimension_numbers<[1], [0], [0], [1], [0, 0, 1, 1], [], []>} : vector<64x288xbf16>, vector<288x32xbf16>, vector<64x32xf32> -> vector<64x32xf32>
    %c1_104 = arith.constant 1 : index
    %c0_105 = arith.constant 0 : index
    %c0_106 = arith.constant 0 : index
    %189 = vector.load %arg10[%c1_104, %c0_105, %c0_106] : memref<4x1x32xf32, #tpu.memory_space<vmem>>, vector<1x1x32xf32>
    %190 = vector.shape_cast %189 : vector<1x1x32xf32> to vector<1x32xf32>
    %191 = vector.broadcast %190 : vector<1x32xf32> to vector<64x32xf32>
    %192 = arith.addf %188, %191 : vector<64x32xf32>
    %193 = arith.addf %23, %192 : vector<64x32xf32>
    %c4 = arith.constant 4 : index
    %c0_107 = arith.constant 0 : index
    %c0_108 = arith.constant 0 : index
    %c0_109 = arith.constant 0 : index
    %194 = vector.load %arg8[%c4, %c0_107, %c0_108, %c0_109] : memref<5x2x1x32xf32, #tpu.memory_space<vmem>>, vector<1x1x1x32xf32>
    %195 = vector.shape_cast %194 : vector<1x1x1x32xf32> to vector<1x32xf32>
    %c4_110 = arith.constant 4 : index
    %c1_111 = arith.constant 1 : index
    %c0_112 = arith.constant 0 : index
    %c0_113 = arith.constant 0 : index
    %196 = vector.load %arg8[%c4_110, %c1_111, %c0_112, %c0_113] : memref<5x2x1x32xf32, #tpu.memory_space<vmem>>, vector<1x1x1x32xf32>
    %197 = vector.shape_cast %196 : vector<1x1x1x32xf32> to vector<1x32xf32>
    %cst_114 = arith.constant dense<0.000000e+00> : vector<32xf32>
    %198 = vector.multi_reduction <add>, %193, %cst_114 [0] : vector<64x32xf32> to vector<32xf32>
    %199 = vector.shape_cast %198 : vector<32xf32> to vector<1x32xf32>
    %200 = arith.mulf %193, %193 : vector<64x32xf32>
    %cst_115 = arith.constant dense<0.000000e+00> : vector<32xf32>
    %201 = vector.multi_reduction <add>, %200, %cst_115 [0] : vector<64x32xf32> to vector<32xf32>
    %202 = vector.shape_cast %201 : vector<32xf32> to vector<1x32xf32>
    %203 = tpu.concatenate %199, %202 in 0 : vector<1x32xf32>, vector<1x32xf32> -> vector<2x32xf32>
    %cst_116 = arith.constant dense<0.000000e+00> : vector<2x32xf32>
    %204 = tpu.matmul %203, %0, %cst_116 {dimension_numbers = #tpu.dot_dimension_numbers<[1], [0], [0], [1], [0, 0, 1, 1], [], []>} : vector<2x32xf32>, vector<32x32xf32>, vector<2x32xf32> -> vector<2x32xf32>
    %205 = vector.extract_strided_slice %204 {offsets = [0, 0], sizes = [1, 32], strides = [1, 1]} : vector<2x32xf32> to vector<1x32xf32>
    %206 = vector.extract_strided_slice %204 {offsets = [1, 0], sizes = [1, 32], strides = [1, 1]} : vector<2x32xf32> to vector<1x32xf32>
    %207 = arith.mulf %205, %205 : vector<1x32xf32>
    %208 = arith.subf %206, %207 : vector<1x32xf32>
    %cst_117 = arith.constant 0.000000e+00 : f32
    %209 = vector.broadcast %cst_117 : f32 to vector<1x32xf32>
    %210 = arith.maximumf %208, %209 : vector<1x32xf32>
    %211 = vector.broadcast %205 : vector<1x32xf32> to vector<64x32xf32>
    %212 = arith.subf %193, %211 : vector<64x32xf32>
    %cst_118 = arith.constant 9.99999997E-7 : f32
    %213 = vector.broadcast %cst_118 : f32 to vector<1x32xf32>
    %214 = arith.addf %210, %213 : vector<1x32xf32>
    %215 = math.rsqrt %214 : vector<1x32xf32>
    %216 = vector.broadcast %215 : vector<1x32xf32> to vector<64x32xf32>
    %217 = arith.mulf %212, %216 : vector<64x32xf32>
    %218 = vector.broadcast %195 : vector<1x32xf32> to vector<64x32xf32>
    %219 = arith.mulf %217, %218 : vector<64x32xf32>
    %220 = vector.broadcast %197 : vector<1x32xf32> to vector<64x32xf32>
    %221 = arith.addf %219, %220 : vector<64x32xf32>
    %222 = arith.truncf %221 : vector<64x32xf32> to vector<64x32xbf16>
    %c0_119 = arith.constant 0 : index
    %c0_120 = arith.constant 0 : index
    %223 = vector.load %arg13[%c0_119, %c0_120] : memref<32x96xbf16, #tpu.memory_space<vmem>>, vector<32x96xbf16>
    %cst_121 = arith.constant dense<0.000000e+00> : vector<64x96xf32>
    %224 = tpu.matmul %222, %223, %cst_121 {dimension_numbers = #tpu.dot_dimension_numbers<[1], [0], [0], [1], [0, 0, 1, 1], [], []>} : vector<64x32xbf16>, vector<32x96xbf16>, vector<64x96xf32> -> vector<64x96xf32>
    %c0_122 = arith.constant 0 : index
    %c0_123 = arith.constant 0 : index
    %225 = vector.load %arg14[%c0_122, %c0_123] : memref<1x96xf32, #tpu.memory_space<vmem>>, vector<1x96xf32>
    %226 = vector.broadcast %225 : vector<1x96xf32> to vector<64x96xf32>
    %227 = arith.addf %224, %226 : vector<64x96xf32>
    %228 = vector.extract_strided_slice %227 {offsets = [0, 0], sizes = [64, 32], strides = [1, 1]} : vector<64x96xf32> to vector<64x32xf32>
    %229 = vector.extract_strided_slice %227 {offsets = [0, 32], sizes = [64, 32], strides = [1, 1]} : vector<64x96xf32> to vector<64x32xf32>
    %230 = vector.extract_strided_slice %227 {offsets = [0, 64], sizes = [64, 32], strides = [1, 1]} : vector<64x96xf32> to vector<64x32xf32>
    %231 = tpu.concatenate %228, %228, %228, %228 in 0 : vector<64x32xf32>, vector<64x32xf32>, vector<64x32xf32>, vector<64x32xf32> -> vector<256x32xf32>
    %c0_124 = arith.constant 0 : index
    %c0_125 = arith.constant 0 : index
    %232 = vector.load %arg6[%c0_124, %c0_125] : memref<256x32xf32, #tpu.memory_space<vmem>>, vector<256x32xf32>
    %233 = arith.mulf %231, %232 : vector<256x32xf32>
    %234 = arith.truncf %233 : vector<256x32xf32> to vector<256x32xbf16>
    %235 = arith.truncf %229 : vector<64x32xf32> to vector<64x32xbf16>
    %cst_126 = arith.constant dense<0.000000e+00> : vector<256x64xf32>
    %236 = tpu.matmul %234, %235, %cst_126 {dimension_numbers = #tpu.dot_dimension_numbers<[1], [1], [0], [0], [0, 0, 1, 0], [], []>} : vector<256x32xbf16>, vector<64x32xbf16>, vector<256x64xf32> -> vector<256x64xf32>
    %cst_127 = arith.constant dense<0xFF800000> : vector<256xf32>
    %237 = vector.multi_reduction <maximumf>, %236, %cst_127 [1] : vector<256x64xf32> to vector<256xf32>
    %238 = vector.shape_cast %237 : vector<256xf32> to vector<256x1xf32>
    %239 = vector.broadcast %238 : vector<256x1xf32> to vector<256x64xf32>
    %240 = arith.subf %236, %239 : vector<256x64xf32>
    %241 = math.exp %240 : vector<256x64xf32>
    %cst_128 = arith.constant dense<0.000000e+00> : vector<256xf32>
    %242 = vector.multi_reduction <add>, %241, %cst_128 [1] : vector<256x64xf32> to vector<256xf32>
    %243 = vector.shape_cast %242 : vector<256xf32> to vector<256x1xf32>
    %244 = vector.broadcast %243 : vector<256x1xf32> to vector<256x64xf32>
    %245 = arith.divf %241, %244 : vector<256x64xf32>
    %246 = arith.truncf %245 : vector<256x64xf32> to vector<256x64xbf16>
    %247 = arith.truncf %230 : vector<64x32xf32> to vector<64x32xbf16>
    %cst_129 = arith.constant dense<0.000000e+00> : vector<256x32xf32>
    %248 = tpu.matmul %246, %247, %cst_129 {dimension_numbers = #tpu.dot_dimension_numbers<[1], [0], [0], [1], [0, 0, 1, 1], [], []>} : vector<256x64xbf16>, vector<64x32xbf16>, vector<256x32xf32> -> vector<256x32xf32>
    %249 = vector.shape_cast %248 : vector<256x32xf32> to vector<4x64x32xf32>
    %c0_130 = arith.constant 0 : index
    %c0_131 = arith.constant 0 : index
    %c0_132 = arith.constant 0 : index
    %250 = vector.load %arg7[%c0_130, %c0_131, %c0_132] : memref<4x1x32xf32, #tpu.memory_space<vmem>>, vector<4x1x32xf32>
    %251 = vector.broadcast %250 : vector<4x1x32xf32> to vector<4x64x32xf32>
    %252 = arith.mulf %249, %251 : vector<4x64x32xf32>
    %cst_133 = arith.constant dense<0.000000e+00> : vector<64x32xf32>
    %253 = vector.multi_reduction <add>, %252, %cst_133 [0] : vector<4x64x32xf32> to vector<64x32xf32>
    %254 = arith.truncf %253 : vector<64x32xf32> to vector<64x32xbf16>
    %c0_134 = arith.constant 0 : index
    %c0_135 = arith.constant 0 : index
    %255 = vector.load %arg15[%c0_134, %c0_135] : memref<32x32xbf16, #tpu.memory_space<vmem>>, vector<32x32xbf16>
    %cst_136 = arith.constant dense<0.000000e+00> : vector<64x32xf32>
    %256 = tpu.matmul %254, %255, %cst_136 {dimension_numbers = #tpu.dot_dimension_numbers<[1], [0], [0], [1], [0, 0, 1, 1], [], []>} : vector<64x32xbf16>, vector<32x32xbf16>, vector<64x32xf32> -> vector<64x32xf32>
    %c0_137 = arith.constant 0 : index
    %c0_138 = arith.constant 0 : index
    %257 = vector.load %arg16[%c0_137, %c0_138] : memref<1x32xf32, #tpu.memory_space<vmem>>, vector<1x32xf32>
    %258 = vector.broadcast %257 : vector<1x32xf32> to vector<64x32xf32>
    %259 = arith.addf %256, %258 : vector<64x32xf32>
    %260 = arith.addf %259, %193 : vector<64x32xf32>
    %261 = vector.extract_strided_slice %21 {offsets = [0, 32], sizes = [1, 32], strides = [1, 1]} : vector<1x64xf32> to vector<1x32xf32>
    %c2_139 = arith.constant 2 : index
    %c0_140 = arith.constant 0 : index
    %c0_141 = arith.constant 0 : index
    %c0_142 = arith.constant 0 : index
    %262 = vector.load %arg8[%c2_139, %c0_140, %c0_141, %c0_142] : memref<5x2x1x32xf32, #tpu.memory_space<vmem>>, vector<1x1x1x32xf32>
    %263 = vector.shape_cast %262 : vector<1x1x1x32xf32> to vector<1x32xf32>
    %c2_143 = arith.constant 2 : index
    %c1_144 = arith.constant 1 : index
    %c0_145 = arith.constant 0 : index
    %c0_146 = arith.constant 0 : index
    %264 = vector.load %arg8[%c2_143, %c1_144, %c0_145, %c0_146] : memref<5x2x1x32xf32, #tpu.memory_space<vmem>>, vector<1x1x1x32xf32>
    %265 = vector.shape_cast %264 : vector<1x1x1x32xf32> to vector<1x32xf32>
    %cst_147 = arith.constant dense<0.000000e+00> : vector<32xf32>
    %266 = vector.multi_reduction <add>, %260, %cst_147 [0] : vector<64x32xf32> to vector<32xf32>
    %267 = vector.shape_cast %266 : vector<32xf32> to vector<1x32xf32>
    %268 = arith.mulf %260, %260 : vector<64x32xf32>
    %cst_148 = arith.constant dense<0.000000e+00> : vector<32xf32>
    %269 = vector.multi_reduction <add>, %268, %cst_148 [0] : vector<64x32xf32> to vector<32xf32>
    %270 = vector.shape_cast %269 : vector<32xf32> to vector<1x32xf32>
    %271 = tpu.concatenate %267, %270 in 0 : vector<1x32xf32>, vector<1x32xf32> -> vector<2x32xf32>
    %cst_149 = arith.constant dense<0.000000e+00> : vector<2x32xf32>
    %272 = tpu.matmul %271, %0, %cst_149 {dimension_numbers = #tpu.dot_dimension_numbers<[1], [0], [0], [1], [0, 0, 1, 1], [], []>} : vector<2x32xf32>, vector<32x32xf32>, vector<2x32xf32> -> vector<2x32xf32>
    %273 = vector.extract_strided_slice %272 {offsets = [0, 0], sizes = [1, 32], strides = [1, 1]} : vector<2x32xf32> to vector<1x32xf32>
    %274 = vector.extract_strided_slice %272 {offsets = [1, 0], sizes = [1, 32], strides = [1, 1]} : vector<2x32xf32> to vector<1x32xf32>
    %275 = arith.mulf %273, %273 : vector<1x32xf32>
    %276 = arith.subf %274, %275 : vector<1x32xf32>
    %cst_150 = arith.constant 0.000000e+00 : f32
    %277 = vector.broadcast %cst_150 : f32 to vector<1x32xf32>
    %278 = arith.maximumf %276, %277 : vector<1x32xf32>
    %279 = vector.broadcast %273 : vector<1x32xf32> to vector<64x32xf32>
    %280 = arith.subf %260, %279 : vector<64x32xf32>
    %cst_151 = arith.constant 9.99999997E-7 : f32
    %281 = vector.broadcast %cst_151 : f32 to vector<1x32xf32>
    %282 = arith.addf %278, %281 : vector<1x32xf32>
    %283 = math.rsqrt %282 : vector<1x32xf32>
    %284 = vector.broadcast %283 : vector<1x32xf32> to vector<64x32xf32>
    %285 = arith.mulf %280, %284 : vector<64x32xf32>
    %286 = vector.broadcast %263 : vector<1x32xf32> to vector<64x32xf32>
    %287 = arith.mulf %285, %286 : vector<64x32xf32>
    %288 = vector.broadcast %265 : vector<1x32xf32> to vector<64x32xf32>
    %289 = arith.addf %287, %288 : vector<64x32xf32>
    %290 = arith.negf %289 : vector<64x32xf32>
    %291 = math.exp %290 : vector<64x32xf32>
    %cst_152 = arith.constant 1.000000e+00 : f32
    %292 = vector.broadcast %cst_152 : f32 to vector<64x32xf32>
    %293 = arith.addf %292, %291 : vector<64x32xf32>
    %294 = arith.divf %292, %293 : vector<64x32xf32>
    %295 = arith.mulf %289, %294 : vector<64x32xf32>
    %c9_i32_153 = arith.constant 9 : i32
    %296 = tpu.dynamic_rotate %295 by %c9_i32_153 dim 0 : vector<64x32xf32>, i32 -> vector<64x32xf32>
    %c0_154 = arith.constant 0 : index
    %c0_155 = arith.constant 0 : index
    %c0_156 = arith.constant 0 : index
    %297 = vector.load %arg5[%c0_154, %c0_155, %c0_156] : memref<9x64x1xf32, #tpu.memory_space<vmem>>, vector<1x64x1xf32>
    %298 = vector.shape_cast %297 : vector<1x64x1xf32> to vector<64x1xf32>
    %299 = vector.broadcast %298 : vector<64x1xf32> to vector<64x32xf32>
    %300 = arith.mulf %296, %299 : vector<64x32xf32>
    %c8_i32_157 = arith.constant 8 : i32
    %301 = tpu.dynamic_rotate %295 by %c8_i32_157 dim 0 : vector<64x32xf32>, i32 -> vector<64x32xf32>
    %c1_158 = arith.constant 1 : index
    %c0_159 = arith.constant 0 : index
    %c0_160 = arith.constant 0 : index
    %302 = vector.load %arg5[%c1_158, %c0_159, %c0_160] : memref<9x64x1xf32, #tpu.memory_space<vmem>>, vector<1x64x1xf32>
    %303 = vector.shape_cast %302 : vector<1x64x1xf32> to vector<64x1xf32>
    %304 = vector.broadcast %303 : vector<64x1xf32> to vector<64x32xf32>
    %305 = arith.mulf %301, %304 : vector<64x32xf32>
    %c7_i32_161 = arith.constant 7 : i32
    %306 = tpu.dynamic_rotate %295 by %c7_i32_161 dim 0 : vector<64x32xf32>, i32 -> vector<64x32xf32>
    %c2_162 = arith.constant 2 : index
    %c0_163 = arith.constant 0 : index
    %c0_164 = arith.constant 0 : index
    %307 = vector.load %arg5[%c2_162, %c0_163, %c0_164] : memref<9x64x1xf32, #tpu.memory_space<vmem>>, vector<1x64x1xf32>
    %308 = vector.shape_cast %307 : vector<1x64x1xf32> to vector<64x1xf32>
    %309 = vector.broadcast %308 : vector<64x1xf32> to vector<64x32xf32>
    %310 = arith.mulf %306, %309 : vector<64x32xf32>
    %c1_i32_165 = arith.constant 1 : i32
    %311 = tpu.dynamic_rotate %295 by %c1_i32_165 dim 0 : vector<64x32xf32>, i32 -> vector<64x32xf32>
    %c3_166 = arith.constant 3 : index
    %c0_167 = arith.constant 0 : index
    %c0_168 = arith.constant 0 : index
    %312 = vector.load %arg5[%c3_166, %c0_167, %c0_168] : memref<9x64x1xf32, #tpu.memory_space<vmem>>, vector<1x64x1xf32>
    %313 = vector.shape_cast %312 : vector<1x64x1xf32> to vector<64x1xf32>
    %314 = vector.broadcast %313 : vector<64x1xf32> to vector<64x32xf32>
    %315 = arith.mulf %311, %314 : vector<64x32xf32>
    %c63_i32_169 = arith.constant 63 : i32
    %316 = tpu.dynamic_rotate %295 by %c63_i32_169 dim 0 : vector<64x32xf32>, i32 -> vector<64x32xf32>
    %c5_170 = arith.constant 5 : index
    %c0_171 = arith.constant 0 : index
    %c0_172 = arith.constant 0 : index
    %317 = vector.load %arg5[%c5_170, %c0_171, %c0_172] : memref<9x64x1xf32, #tpu.memory_space<vmem>>, vector<1x64x1xf32>
    %318 = vector.shape_cast %317 : vector<1x64x1xf32> to vector<64x1xf32>
    %319 = vector.broadcast %318 : vector<64x1xf32> to vector<64x32xf32>
    %320 = arith.mulf %316, %319 : vector<64x32xf32>
    %c57_i32_173 = arith.constant 57 : i32
    %321 = tpu.dynamic_rotate %295 by %c57_i32_173 dim 0 : vector<64x32xf32>, i32 -> vector<64x32xf32>
    %c6_174 = arith.constant 6 : index
    %c0_175 = arith.constant 0 : index
    %c0_176 = arith.constant 0 : index
    %322 = vector.load %arg5[%c6_174, %c0_175, %c0_176] : memref<9x64x1xf32, #tpu.memory_space<vmem>>, vector<1x64x1xf32>
    %323 = vector.shape_cast %322 : vector<1x64x1xf32> to vector<64x1xf32>
    %324 = vector.broadcast %323 : vector<64x1xf32> to vector<64x32xf32>
    %325 = arith.mulf %321, %324 : vector<64x32xf32>
    %c56_i32_177 = arith.constant 56 : i32
    %326 = tpu.dynamic_rotate %295 by %c56_i32_177 dim 0 : vector<64x32xf32>, i32 -> vector<64x32xf32>
    %c7_178 = arith.constant 7 : index
    %c0_179 = arith.constant 0 : index
    %c0_180 = arith.constant 0 : index
    %327 = vector.load %arg5[%c7_178, %c0_179, %c0_180] : memref<9x64x1xf32, #tpu.memory_space<vmem>>, vector<1x64x1xf32>
    %328 = vector.shape_cast %327 : vector<1x64x1xf32> to vector<64x1xf32>
    %329 = vector.broadcast %328 : vector<64x1xf32> to vector<64x32xf32>
    %330 = arith.mulf %326, %329 : vector<64x32xf32>
    %c55_i32_181 = arith.constant 55 : i32
    %331 = tpu.dynamic_rotate %295 by %c55_i32_181 dim 0 : vector<64x32xf32>, i32 -> vector<64x32xf32>
    %c8_182 = arith.constant 8 : index
    %c0_183 = arith.constant 0 : index
    %c0_184 = arith.constant 0 : index
    %332 = vector.load %arg5[%c8_182, %c0_183, %c0_184] : memref<9x64x1xf32, #tpu.memory_space<vmem>>, vector<1x64x1xf32>
    %333 = vector.shape_cast %332 : vector<1x64x1xf32> to vector<64x1xf32>
    %334 = vector.broadcast %333 : vector<64x1xf32> to vector<64x32xf32>
    %335 = arith.mulf %331, %334 : vector<64x32xf32>
    %336 = tpu.concatenate %300, %305, %310, %315, %295, %320, %325, %330, %335 in 1 : vector<64x32xf32>, vector<64x32xf32>, vector<64x32xf32>, vector<64x32xf32>, vector<64x32xf32>, vector<64x32xf32>, vector<64x32xf32>, vector<64x32xf32>, vector<64x32xf32> -> vector<64x288xf32>
    %337 = arith.truncf %336 : vector<64x288xf32> to vector<64x288xbf16>
    %c2_185 = arith.constant 2 : index
    %c0_186 = arith.constant 0 : index
    %c0_187 = arith.constant 0 : index
    %338 = vector.load %arg9[%c2_185, %c0_186, %c0_187] : memref<4x288x32xbf16, #tpu.memory_space<vmem>>, vector<1x288x32xbf16>
    %339 = vector.shape_cast %338 : vector<1x288x32xbf16> to vector<288x32xbf16>
    %cst_188 = arith.constant dense<0.000000e+00> : vector<64x32xf32>
    %340 = tpu.matmul %337, %339, %cst_188 {dimension_numbers = #tpu.dot_dimension_numbers<[1], [0], [0], [1], [0, 0, 1, 1], [], []>} : vector<64x288xbf16>, vector<288x32xbf16>, vector<64x32xf32> -> vector<64x32xf32>
    %c2_189 = arith.constant 2 : index
    %c0_190 = arith.constant 0 : index
    %c0_191 = arith.constant 0 : index
    %341 = vector.load %arg10[%c2_189, %c0_190, %c0_191] : memref<4x1x32xf32, #tpu.memory_space<vmem>>, vector<1x1x32xf32>
    %342 = vector.shape_cast %341 : vector<1x1x32xf32> to vector<1x32xf32>
    %343 = vector.broadcast %342 : vector<1x32xf32> to vector<64x32xf32>
    %344 = arith.addf %340, %343 : vector<64x32xf32>
    %345 = vector.broadcast %261 : vector<1x32xf32> to vector<64x32xf32>
    %346 = arith.addf %344, %345 : vector<64x32xf32>
    %c3_192 = arith.constant 3 : index
    %c0_193 = arith.constant 0 : index
    %c0_194 = arith.constant 0 : index
    %c0_195 = arith.constant 0 : index
    %347 = vector.load %arg8[%c3_192, %c0_193, %c0_194, %c0_195] : memref<5x2x1x32xf32, #tpu.memory_space<vmem>>, vector<1x1x1x32xf32>
    %348 = vector.shape_cast %347 : vector<1x1x1x32xf32> to vector<1x32xf32>
    %c3_196 = arith.constant 3 : index
    %c1_197 = arith.constant 1 : index
    %c0_198 = arith.constant 0 : index
    %c0_199 = arith.constant 0 : index
    %349 = vector.load %arg8[%c3_196, %c1_197, %c0_198, %c0_199] : memref<5x2x1x32xf32, #tpu.memory_space<vmem>>, vector<1x1x1x32xf32>
    %350 = vector.shape_cast %349 : vector<1x1x1x32xf32> to vector<1x32xf32>
    %cst_200 = arith.constant dense<0.000000e+00> : vector<32xf32>
    %351 = vector.multi_reduction <add>, %346, %cst_200 [0] : vector<64x32xf32> to vector<32xf32>
    %352 = vector.shape_cast %351 : vector<32xf32> to vector<1x32xf32>
    %353 = arith.mulf %346, %346 : vector<64x32xf32>
    %cst_201 = arith.constant dense<0.000000e+00> : vector<32xf32>
    %354 = vector.multi_reduction <add>, %353, %cst_201 [0] : vector<64x32xf32> to vector<32xf32>
    %355 = vector.shape_cast %354 : vector<32xf32> to vector<1x32xf32>
    %356 = tpu.concatenate %352, %355 in 0 : vector<1x32xf32>, vector<1x32xf32> -> vector<2x32xf32>
    %cst_202 = arith.constant dense<0.000000e+00> : vector<2x32xf32>
    %357 = tpu.matmul %356, %0, %cst_202 {dimension_numbers = #tpu.dot_dimension_numbers<[1], [0], [0], [1], [0, 0, 1, 1], [], []>} : vector<2x32xf32>, vector<32x32xf32>, vector<2x32xf32> -> vector<2x32xf32>
    %358 = vector.extract_strided_slice %357 {offsets = [0, 0], sizes = [1, 32], strides = [1, 1]} : vector<2x32xf32> to vector<1x32xf32>
    %359 = vector.extract_strided_slice %357 {offsets = [1, 0], sizes = [1, 32], strides = [1, 1]} : vector<2x32xf32> to vector<1x32xf32>
    %360 = arith.mulf %358, %358 : vector<1x32xf32>
    %361 = arith.subf %359, %360 : vector<1x32xf32>
    %cst_203 = arith.constant 0.000000e+00 : f32
    %362 = vector.broadcast %cst_203 : f32 to vector<1x32xf32>
    %363 = arith.maximumf %361, %362 : vector<1x32xf32>
    %364 = vector.broadcast %358 : vector<1x32xf32> to vector<64x32xf32>
    %365 = arith.subf %346, %364 : vector<64x32xf32>
    %cst_204 = arith.constant 9.99999997E-7 : f32
    %366 = vector.broadcast %cst_204 : f32 to vector<1x32xf32>
    %367 = arith.addf %363, %366 : vector<1x32xf32>
    %368 = math.rsqrt %367 : vector<1x32xf32>
    %369 = vector.broadcast %368 : vector<1x32xf32> to vector<64x32xf32>
    %370 = arith.mulf %365, %369 : vector<64x32xf32>
    %371 = vector.broadcast %348 : vector<1x32xf32> to vector<64x32xf32>
    %372 = arith.mulf %370, %371 : vector<64x32xf32>
    %373 = vector.broadcast %350 : vector<1x32xf32> to vector<64x32xf32>
    %374 = arith.addf %372, %373 : vector<64x32xf32>
    %375 = arith.negf %374 : vector<64x32xf32>
    %376 = math.exp %375 : vector<64x32xf32>
    %cst_205 = arith.constant 1.000000e+00 : f32
    %377 = vector.broadcast %cst_205 : f32 to vector<64x32xf32>
    %378 = arith.addf %377, %376 : vector<64x32xf32>
    %379 = arith.divf %377, %378 : vector<64x32xf32>
    %380 = arith.mulf %374, %379 : vector<64x32xf32>
    %c9_i32_206 = arith.constant 9 : i32
    %381 = tpu.dynamic_rotate %380 by %c9_i32_206 dim 0 : vector<64x32xf32>, i32 -> vector<64x32xf32>
    %c0_207 = arith.constant 0 : index
    %c0_208 = arith.constant 0 : index
    %c0_209 = arith.constant 0 : index
    %382 = vector.load %arg5[%c0_207, %c0_208, %c0_209] : memref<9x64x1xf32, #tpu.memory_space<vmem>>, vector<1x64x1xf32>
    %383 = vector.shape_cast %382 : vector<1x64x1xf32> to vector<64x1xf32>
    %384 = vector.broadcast %383 : vector<64x1xf32> to vector<64x32xf32>
    %385 = arith.mulf %381, %384 : vector<64x32xf32>
    %c8_i32_210 = arith.constant 8 : i32
    %386 = tpu.dynamic_rotate %380 by %c8_i32_210 dim 0 : vector<64x32xf32>, i32 -> vector<64x32xf32>
    %c1_211 = arith.constant 1 : index
    %c0_212 = arith.constant 0 : index
    %c0_213 = arith.constant 0 : index
    %387 = vector.load %arg5[%c1_211, %c0_212, %c0_213] : memref<9x64x1xf32, #tpu.memory_space<vmem>>, vector<1x64x1xf32>
    %388 = vector.shape_cast %387 : vector<1x64x1xf32> to vector<64x1xf32>
    %389 = vector.broadcast %388 : vector<64x1xf32> to vector<64x32xf32>
    %390 = arith.mulf %386, %389 : vector<64x32xf32>
    %c7_i32_214 = arith.constant 7 : i32
    %391 = tpu.dynamic_rotate %380 by %c7_i32_214 dim 0 : vector<64x32xf32>, i32 -> vector<64x32xf32>
    %c2_215 = arith.constant 2 : index
    %c0_216 = arith.constant 0 : index
    %c0_217 = arith.constant 0 : index
    %392 = vector.load %arg5[%c2_215, %c0_216, %c0_217] : memref<9x64x1xf32, #tpu.memory_space<vmem>>, vector<1x64x1xf32>
    %393 = vector.shape_cast %392 : vector<1x64x1xf32> to vector<64x1xf32>
    %394 = vector.broadcast %393 : vector<64x1xf32> to vector<64x32xf32>
    %395 = arith.mulf %391, %394 : vector<64x32xf32>
    %c1_i32_218 = arith.constant 1 : i32
    %396 = tpu.dynamic_rotate %380 by %c1_i32_218 dim 0 : vector<64x32xf32>, i32 -> vector<64x32xf32>
    %c3_219 = arith.constant 3 : index
    %c0_220 = arith.constant 0 : index
    %c0_221 = arith.constant 0 : index
    %397 = vector.load %arg5[%c3_219, %c0_220, %c0_221] : memref<9x64x1xf32, #tpu.memory_space<vmem>>, vector<1x64x1xf32>
    %398 = vector.shape_cast %397 : vector<1x64x1xf32> to vector<64x1xf32>
    %399 = vector.broadcast %398 : vector<64x1xf32> to vector<64x32xf32>
    %400 = arith.mulf %396, %399 : vector<64x32xf32>
    %c63_i32_222 = arith.constant 63 : i32
    %401 = tpu.dynamic_rotate %380 by %c63_i32_222 dim 0 : vector<64x32xf32>, i32 -> vector<64x32xf32>
    %c5_223 = arith.constant 5 : index
    %c0_224 = arith.constant 0 : index
    %c0_225 = arith.constant 0 : index
    %402 = vector.load %arg5[%c5_223, %c0_224, %c0_225] : memref<9x64x1xf32, #tpu.memory_space<vmem>>, vector<1x64x1xf32>
    %403 = vector.shape_cast %402 : vector<1x64x1xf32> to vector<64x1xf32>
    %404 = vector.broadcast %403 : vector<64x1xf32> to vector<64x32xf32>
    %405 = arith.mulf %401, %404 : vector<64x32xf32>
    %c57_i32_226 = arith.constant 57 : i32
    %406 = tpu.dynamic_rotate %380 by %c57_i32_226 dim 0 : vector<64x32xf32>, i32 -> vector<64x32xf32>
    %c6_227 = arith.constant 6 : index
    %c0_228 = arith.constant 0 : index
    %c0_229 = arith.constant 0 : index
    %407 = vector.load %arg5[%c6_227, %c0_228, %c0_229] : memref<9x64x1xf32, #tpu.memory_space<vmem>>, vector<1x64x1xf32>
    %408 = vector.shape_cast %407 : vector<1x64x1xf32> to vector<64x1xf32>
    %409 = vector.broadcast %408 : vector<64x1xf32> to vector<64x32xf32>
    %410 = arith.mulf %406, %409 : vector<64x32xf32>
    %c56_i32_230 = arith.constant 56 : i32
    %411 = tpu.dynamic_rotate %380 by %c56_i32_230 dim 0 : vector<64x32xf32>, i32 -> vector<64x32xf32>
    %c7_231 = arith.constant 7 : index
    %c0_232 = arith.constant 0 : index
    %c0_233 = arith.constant 0 : index
    %412 = vector.load %arg5[%c7_231, %c0_232, %c0_233] : memref<9x64x1xf32, #tpu.memory_space<vmem>>, vector<1x64x1xf32>
    %413 = vector.shape_cast %412 : vector<1x64x1xf32> to vector<64x1xf32>
    %414 = vector.broadcast %413 : vector<64x1xf32> to vector<64x32xf32>
    %415 = arith.mulf %411, %414 : vector<64x32xf32>
    %c55_i32_234 = arith.constant 55 : i32
    %416 = tpu.dynamic_rotate %380 by %c55_i32_234 dim 0 : vector<64x32xf32>, i32 -> vector<64x32xf32>
    %c8_235 = arith.constant 8 : index
    %c0_236 = arith.constant 0 : index
    %c0_237 = arith.constant 0 : index
    %417 = vector.load %arg5[%c8_235, %c0_236, %c0_237] : memref<9x64x1xf32, #tpu.memory_space<vmem>>, vector<1x64x1xf32>
    %418 = vector.shape_cast %417 : vector<1x64x1xf32> to vector<64x1xf32>
    %419 = vector.broadcast %418 : vector<64x1xf32> to vector<64x32xf32>
    %420 = arith.mulf %416, %419 : vector<64x32xf32>
    %421 = tpu.concatenate %385, %390, %395, %400, %380, %405, %410, %415, %420 in 1 : vector<64x32xf32>, vector<64x32xf32>, vector<64x32xf32>, vector<64x32xf32>, vector<64x32xf32>, vector<64x32xf32>, vector<64x32xf32>, vector<64x32xf32>, vector<64x32xf32> -> vector<64x288xf32>
    %422 = arith.truncf %421 : vector<64x288xf32> to vector<64x288xbf16>
    %c3_238 = arith.constant 3 : index
    %c0_239 = arith.constant 0 : index
    %c0_240 = arith.constant 0 : index
    %423 = vector.load %arg9[%c3_238, %c0_239, %c0_240] : memref<4x288x32xbf16, #tpu.memory_space<vmem>>, vector<1x288x32xbf16>
    %424 = vector.shape_cast %423 : vector<1x288x32xbf16> to vector<288x32xbf16>
    %cst_241 = arith.constant dense<0.000000e+00> : vector<64x32xf32>
    %425 = tpu.matmul %422, %424, %cst_241 {dimension_numbers = #tpu.dot_dimension_numbers<[1], [0], [0], [1], [0, 0, 1, 1], [], []>} : vector<64x288xbf16>, vector<288x32xbf16>, vector<64x32xf32> -> vector<64x32xf32>
    %c3_242 = arith.constant 3 : index
    %c0_243 = arith.constant 0 : index
    %c0_244 = arith.constant 0 : index
    %426 = vector.load %arg10[%c3_242, %c0_243, %c0_244] : memref<4x1x32xf32, #tpu.memory_space<vmem>>, vector<1x1x32xf32>
    %427 = vector.shape_cast %426 : vector<1x1x32xf32> to vector<1x32xf32>
    %428 = vector.broadcast %427 : vector<1x32xf32> to vector<64x32xf32>
    %429 = arith.addf %425, %428 : vector<64x32xf32>
    %430 = arith.addf %260, %429 : vector<64x32xf32>
    %c0_245 = arith.constant 0 : index
    %c0_246 = arith.constant 0 : index
    %c0_247 = arith.constant 0 : index
    %431 = vector.load %arg17[%c0_245, %c0_246, %c0_247] : memref<1x64x32xf32, #tpu.memory_space<vmem>>, vector<1x64x32xf32>
    %432 = vector.shape_cast %431 : vector<1x64x32xf32> to vector<64x32xf32>
    %433 = vector.shape_cast %430 : vector<64x32xf32> to vector<1x64x32xf32>
    tpu.vector_store %arg17[%c0_245, %c0_246, %c0_247], %433 {strides = array<i32>} : memref<1x64x32xf32, #tpu.memory_space<vmem>>, vector<1x64x32xf32>,
    return
  }
  func.func @transform_0(%arg0: i32) -> (i32, i32, i32) {
    %c0_i32 = arith.constant 0 : i32
    %c0_i32_0 = arith.constant 0 : i32
    %c0_i32_1 = arith.constant 0 : i32
    return %arg0, %c0_i32, %c0_i32_0 : i32, i32, i32
  }
  func.func @transform_1(%arg0: i32) -> (i32, i32, i32) {
    %c0_i32 = arith.constant 0 : i32
    %c0_i32_0 = arith.constant 0 : i32
    %c0_i32_1 = arith.constant 0 : i32
    return %arg0, %c0_i32, %c0_i32_0 : i32, i32, i32
  }
  func.func @transform_2(%arg0: i32) -> (i32, i32, i32) {
    %c0_i32 = arith.constant 0 : i32
    %c0_i32_0 = arith.constant 0 : i32
    %c0_i32_1 = arith.constant 0 : i32
    return %arg0, %c0_i32, %c0_i32_0 : i32, i32, i32
  }
  func.func @transform_3(%arg0: i32) -> (i32, i32) {
    %c0_i32 = arith.constant 0 : i32
    %c0_i32_0 = arith.constant 0 : i32
    %c0_i32_1 = arith.constant 0 : i32
    return %c0_i32, %c0_i32_0 : i32, i32
  }
  func.func @transform_4(%arg0: i32) -> (i32, i32, i32) {
    %c0_i32 = arith.constant 0 : i32
    %c0_i32_0 = arith.constant 0 : i32
    %c0_i32_1 = arith.constant 0 : i32
    %c0_i32_2 = arith.constant 0 : i32
    return %c0_i32, %c0_i32_0, %c0_i32_1 : i32, i32, i32
  }
  func.func @transform_5(%arg0: i32) -> (i32, i32) {
    %c0_i32 = arith.constant 0 : i32
    %c0_i32_0 = arith.constant 0 : i32
    %c0_i32_1 = arith.constant 0 : i32
    return %c0_i32, %c0_i32_0 : i32, i32
  }
  func.func @transform_6(%arg0: i32) -> (i32, i32, i32) {
    %c0_i32 = arith.constant 0 : i32
    %c0_i32_0 = arith.constant 0 : i32
    %c0_i32_1 = arith.constant 0 : i32
    %c0_i32_2 = arith.constant 0 : i32
    return %c0_i32, %c0_i32_0, %c0_i32_1 : i32, i32, i32
  }
  func.func @transform_7(%arg0: i32) -> (i32, i32, i32, i32) {
    %c0_i32 = arith.constant 0 : i32
    %c0_i32_0 = arith.constant 0 : i32
    %c0_i32_1 = arith.constant 0 : i32
    %c0_i32_2 = arith.constant 0 : i32
    %c0_i32_3 = arith.constant 0 : i32
    return %c0_i32, %c0_i32_0, %c0_i32_1, %c0_i32_2 : i32, i32, i32, i32
  }
  func.func @transform_8(%arg0: i32) -> (i32, i32, i32) {
    %c0_i32 = arith.constant 0 : i32
    %c0_i32_0 = arith.constant 0 : i32
    %c0_i32_1 = arith.constant 0 : i32
    %c0_i32_2 = arith.constant 0 : i32
    return %c0_i32, %c0_i32_0, %c0_i32_1 : i32, i32, i32
  }
  func.func @transform_9(%arg0: i32) -> (i32, i32, i32) {
    %c0_i32 = arith.constant 0 : i32
    %c0_i32_0 = arith.constant 0 : i32
    %c0_i32_1 = arith.constant 0 : i32
    %c0_i32_2 = arith.constant 0 : i32
    return %c0_i32, %c0_i32_0, %c0_i32_1 : i32, i32, i32
  }
  func.func @transform_10(%arg0: i32) -> (i32, i32) {
    %c0_i32 = arith.constant 0 : i32
    %c0_i32_0 = arith.constant 0 : i32
    %c0_i32_1 = arith.constant 0 : i32
    return %c0_i32, %c0_i32_0 : i32, i32
  }
  func.func @transform_11(%arg0: i32) -> (i32, i32) {
    %c0_i32 = arith.constant 0 : i32
    %c0_i32_0 = arith.constant 0 : i32
    %c0_i32_1 = arith.constant 0 : i32
    return %c0_i32, %c0_i32_0 : i32, i32
  }
  func.func @transform_12(%arg0: i32) -> (i32, i32) {
    %c0_i32 = arith.constant 0 : i32
    %c0_i32_0 = arith.constant 0 : i32
    %c0_i32_1 = arith.constant 0 : i32
    return %c0_i32, %c0_i32_0 : i32, i32
  }
  func.func @transform_13(%arg0: i32) -> (i32, i32) {
    %c0_i32 = arith.constant 0 : i32
    %c0_i32_0 = arith.constant 0 : i32
    %c0_i32_1 = arith.constant 0 : i32
    return %c0_i32, %c0_i32_0 : i32, i32
  }
  func.func @transform_14(%arg0: i32) -> (i32, i32) {
    %c0_i32 = arith.constant 0 : i32
    %c0_i32_0 = arith.constant 0 : i32
    %c0_i32_1 = arith.constant 0 : i32
    return %c0_i32, %c0_i32_0 : i32, i32
  }
  func.func @transform_15(%arg0: i32) -> (i32, i32) {
    %c0_i32 = arith.constant 0 : i32
    %c0_i32_0 = arith.constant 0 : i32
    %c0_i32_1 = arith.constant 0 : i32
    return %c0_i32, %c0_i32_0 : i32, i32
  }
  func.func @transform_16(%arg0: i32) -> (i32, i32, i32) {
    %c0_i32 = arith.constant 0 : i32
    %c0_i32_0 = arith.constant 0 : i32
    %c0_i32_1 = arith.constant 0 : i32
    return %arg0, %c0_i32, %c0_i32_0 : i32, i32, i32
  }
}

</mosaic_0001>

<llo_original>
// kernel: eq.38
$region0: #{eq.38}
  %s0 = inlined_call_operand.vmem [shape: s32[4,64], index: 0, kind: input, shape index: {}]
  %s1 = inlined_call_operand.vmem [shape: s32[256], index: 1, kind: output, shape index: {}]
  $region1: #{eq.38} parent=0
    #allocation0 [shape = 'u8[4096]{0}', space=vmem, size = 0x1000, scoped, tag = 'scoped mem for output reshape']
    #allocation1 [shape = 'u8[4096]{0}', space=vmem, size = 0x1000, scoped, tag = 'scoped mem for input reshape']
    %s3 = sshll.u32 1, 4
    %s4 = ssub.s32 %s3, 1
    %v5 = vld [vmem:[%s0] sm:%s4]
    %6 = vst [vmem:[#allocation1] sm:%s4] %v5
    %s7 = smov 3
    %v8 = vld [vmem:[#allocation1] ss:$2 sm:%s7]
    %vm9 = vcmask 523264
    %10 = vst.msk [vmem:[#allocation0] sm:$0x3] %vm9, %v8
    %s11 = scalar_lea.vmem [#allocation1], 1
    %s12 = smov 3
    %v13 = vld [vmem:[%s11] ss:$2 sm:%s12]
    %14 = vrot.lane.b32.xlu0 %v13, 64
    %v15 = vpop.permute.xlu0 %14
    %vm16 = vcmask 1048064
    %17 = vst.msk [vmem:[#allocation0] sm:$0x3] %vm16, %v15
    %s19 = sshll.u32 1, 2
    %s20 = ssub.s32 %s19, 1
    %v22 = vld [vmem:[#allocation0] sm:%s20]
    %s23 = sshll.u32 1, 2
    %s24 = ssub.s32 %s23, 1
    %25 = vst [vmem:[%s1] sm:%s24] %v22

// kernel: mid_block_forward.1
$region0: #{mid_block_forward.1}
  #allocation0 [shape = 'u32[]', space=smem, size = 0x4, offset = 0x4, fixed_abs, tag = 'smem constant byte address 0x4 - core index']
  #allocation1 [shape = 'u32[144,128]{1,0:T(1,128)}', space=vmem, size = 0x12000, scoped, tag = 'internal scratch']
  %s0 = inlined_call_operand.vmem [shape: f32[2,64,32], index: 0, kind: input, shape index: {}]
  %s1 = inlined_call_operand.vmem [shape: f32[2,1,32], index: 1, kind: input, shape index: {}]
  %s2 = inlined_call_operand.vmem [shape: f32[2,1,32], index: 2, kind: input, shape index: {}]
  %s3 = inlined_call_operand.vmem [shape: f32[32,32], index: 3, kind: input, shape index: {}]
  %s4 = inlined_call_operand.vmem [shape: f32[9,64,1], index: 4, kind: input, shape index: {}]
  %s5 = inlined_call_operand.vmem [shape: f32[256,32], index: 5, kind: input, shape index: {}]
  %s6 = inlined_call_operand.vmem [shape: f32[4,1,32], index: 6, kind: input, shape index: {}]
  %s7 = inlined_call_operand.vmem [shape: f32[5,2,1,32], index: 7, kind: input, shape index: {}]
  %s8 = inlined_call_operand.vmem [shape: bf16[4,288,32], index: 8, kind: input, shape index: {}]
  %s9 = inlined_call_operand.vmem [shape: f32[4,1,32], index: 9, kind: input, shape index: {}]
  %s10 = inlined_call_operand.vmem [shape: f32[64,64], index: 10, kind: input, shape index: {}]
  %s11 = inlined_call_operand.vmem [shape: f32[1,64], index: 11, kind: input, shape index: {}]
  %s12 = inlined_call_operand.vmem [shape: bf16[32,96], index: 12, kind: input, shape index: {}]
  %s13 = inlined_call_operand.vmem [shape: f32[1,96], index: 13, kind: input, shape index: {}]
  %s14 = inlined_call_operand.vmem [shape: bf16[32,32], index: 14, kind: input, shape index: {}]
  %s15 = inlined_call_operand.vmem [shape: f32[1,32], index: 15, kind: input, shape index: {}]
  %s16 = inlined_call_operand.hbm [shape: f32[2,64,32], index: 16, kind: output, shape index: {}]
  %s17 = sld [smem:[#allocation0]]
  $region97: #{mid_block_forward.1} parent=0
    _
  %s19 = ssub.s32 1, %s17
  %s20 = scalar_select 0, %s19, %s17
  $region1: #{mid_block_forward.1} parent=0
    #allocation2 [shape = 'u8[65536]{0}', space=vmem, size = 0x10000, scoped, tag = 'output window, operand 0']
    #allocation3 [shape = 's32[2]{0}', space=sflag, size = 0x8, scoped, tag = 'scoped memory for mid_block_forward.1']
    %21 = vsyncpa [#allocation3], 0
    %s22 = scalar_lea.sflag [#allocation3], 1
    %23 = vsyncpa %s22, 0
    loop: start=0, step=1, limit=4
    $region2: #{mid_block_forward.1} parent=1 // loop_pre_header
      _
    $region3: #{mid_block_forward.1} parent=1 // loop_header
      %s25 = sphi 0, %s29
      %p26 = scmp.ge.s32.totalorder %s25, 4
      %s35 = sphi 0, %s37
      %s38 = sphi 0, %s35
      %s39 = sphi 0, %s38
      %s55 = sphi 0, %s39
      %s61 = sphi 0, %s63
      %s64 = sphi 0, %s61
      %s65 = sphi 0, %s64
      %s81 = sphi 0, %s65
      %s87 = sphi 0, %s89
      %s90 = sphi 0, %s87
      %s91 = sphi 0, %s90
      %s107 = sphi 0, %s91
      %s111 = sphi 0, %s111
      %s113 = sphi 0, %s111
      %s114 = sphi 0, %s113
      %s128 = sphi 0, %s114
      %s132 = sphi 0, %s132
      %s134 = sphi 0, %s132
      %s135 = sphi 0, %s134
      %s149 = sphi 0, %s135
      %s153 = sphi 0, %s153
      %s155 = sphi 0, %s153
      %s156 = sphi 0, %s155
      %s170 = sphi 0, %s156
      %s174 = sphi 0, %s174
      %s176 = sphi 0, %s174
      %s177 = sphi 0, %s176
      %s191 = sphi 0, %s177
      %s195 = sphi 0, %s195
      %s197 = sphi 0, %s195
      %s198 = sphi 0, %s197
      %s212 = sphi 0, %s198
      %s216 = sphi 0, %s216
      %s218 = sphi 0, %s216
      %s219 = sphi 0, %s218
      %s233 = sphi 0, %s219
      %s237 = sphi 0, %s237
      %s239 = sphi 0, %s237
      %s240 = sphi 0, %s239
      %s254 = sphi 0, %s240
      %s258 = sphi 0, %s258
      %s260 = sphi 0, %s258
      %s261 = sphi 0, %s260
      %s275 = sphi 0, %s261
      %s279 = sphi 0, %s279
      %s281 = sphi 0, %s279
      %s282 = sphi 0, %s281
      %s296 = sphi 0, %s282
      %s300 = sphi 0, %s300
      %s302 = sphi 0, %s300
      %s303 = sphi 0, %s302
      %s317 = sphi 0, %s303
      %s321 = sphi 0, %s321
      %s323 = sphi 0, %s321
      %s324 = sphi 0, %s323
      %s338 = sphi 0, %s324
      %s342 = sphi 0, %s342
      %s344 = sphi 0, %s342
      %s345 = sphi 0, %s344
      %s359 = sphi 0, %s345
      %s363 = sphi 0, %s363
      %s365 = sphi 0, %s363
      %s366 = sphi 0, %s365
      %s380 = sphi 0, %s366
      %s386 = sphi 0, %s388
      %s389 = sphi 0, %s386
      %s390 = sphi 0, %s389
      %s406 = sphi 0, %s390
    $region4: #{mid_block_forward.1} parent=1 // loop_header_branch
      %28 = sbr.rel (%p26) target = $region8
    $region5: #{mid_block_forward.1} parent=1 // loop_body
      %s30 = ssub.s32 %s25, 1
      %s31 = ssub.s32 %s25, 2
      %s32 = sadd.s32 %s25, 1
      %s33 = ssub.s32 %s25, %s32
      %p34 = scmp.eq.s32.totalorder %s33, 0
      %s36 = sadd.s32 %s35, 1
      %s37 = scalar_select %p34, %s35, %s36
      %p40 = pneg %p34
      %p41 = scmp.eq.s32.totalorder %s25, 1
      %p42 = por %p40, %p41
      %p43 = scmp.ne.s32.totalorder %s35, %s38
      %p44 = scmp.eq.s32.totalorder %s25, 0
      %p45 = por %p43, %p44
      %p46 = scmp.ne.s32.totalorder %s35, %s38
      %p47 = scmp.eq.s32.totalorder %s30, 1
      %p48 = por %p46, %p47
      %p49 = scmp.ne.s32.totalorder %s38, %s39
      %p50 = scmp.eq.s32.totalorder %s30, 0
      %p51 = por %p49, %p50
      %p52 = scmp.ne.s32.totalorder %s38, %s39
      %p53 = scmp.eq.s32.totalorder %s31, 1
      %p54 = por %p52, %p53
      %p56 = scmp.ne.s32.totalorder %s39, %s55
      %p57 = scmp.eq.s32.totalorder %s31, 0
      %p58 = por %p56, %p57
      %s59 = ssub.s32 %s25, %s32
      %p60 = scmp.eq.s32.totalorder %s59, 0
      %s62 = sadd.s32 %s61, 1
      %s63 = scalar_select %p60, %s61, %s62
      %p66 = pneg %p60
      %p67 = scmp.eq.s32.totalorder %s25, 1
      %p68 = por %p66, %p67
      %p69 = scmp.ne.s32.totalorder %s61, %s64
      %p70 = scmp.eq.s32.totalorder %s25, 0
      %p71 = por %p69, %p70
      %p72 = scmp.ne.s32.totalorder %s61, %s64
      %p73 = scmp.eq.s32.totalorder %s30, 1
      %p74 = por %p72, %p73
      %p75 = scmp.ne.s32.totalorder %s64, %s65
      %p76 = scmp.eq.s32.totalorder %s30, 0
      %p77 = por %p75, %p76
      %p78 = scmp.ne.s32.totalorder %s64, %s65
      %p79 = scmp.eq.s32.totalorder %s31, 1
      %p80 = por %p78, %p79
      %p82 = scmp.ne.s32.totalorder %s65, %s81
      %p83 = scmp.eq.s32.totalorder %s31, 0
      %p84 = por %p82, %p83
      %s85 = ssub.s32 %s25, %s32
      %p86 = scmp.eq.s32.totalorder %s85, 0
      %s88 = sadd.s32 %s87, 1
      %s89 = scalar_select %p86, %s87, %s88
      %p92 = pneg %p86
      %p93 = scmp.eq.s32.totalorder %s25, 1
      %p94 = por %p92, %p93
      %p95 = scmp.ne.s32.totalorder %s87, %s90
      %p96 = scmp.eq.s32.totalorder %s25, 0
      %p97 = por %p95, %p96
      %p98 = scmp.ne.s32.totalorder %s87, %s90
      %p99 = scmp.eq.s32.totalorder %s30, 1
      %p100 = por %p98, %p99
      %p101 = scmp.ne.s32.totalorder %s90, %s91
      %p102 = scmp.eq.s32.totalorder %s30, 0
      %p103 = por %p101, %p102
      %p104 = scmp.ne.s32.totalorder %s90, %s91
      %p105 = scmp.eq.s32.totalorder %s31, 1
      %p106 = por %p104, %p105
      %p108 = scmp.ne.s32.totalorder %s91, %s107
      %p109 = scmp.eq.s32.totalorder %s31, 0
      %p110 = por %p108, %p109
      %s112 = sadd.s32 %s111, 1
      %p115 = scmp.eq.s32.totalorder %s25, 1
      %p116 = scmp.ne.s32.totalorder %s111, %s113
      %p117 = scmp.eq.s32.totalorder %s25, 0
      %p118 = por %p116, %p117
      %p119 = scmp.ne.s32.totalorder %s111, %s113
      %p120 = scmp.eq.s32.totalorder %s30, 1
      %p121 = por %p119, %p120
      %p122 = scmp.ne.s32.totalorder %s113, %s114
      %p123 = scmp.eq.s32.totalorder %s30, 0
      %p124 = por %p122, %p123
      %p125 = scmp.ne.s32.totalorder %s113, %s114
      %p126 = scmp.eq.s32.totalorder %s31, 1
      %p127 = por %p125, %p126
      %p129 = scmp.ne.s32.totalorder %s114, %s128
      %p130 = scmp.eq.s32.totalorder %s31, 0
      %p131 = por %p129, %p130
      %s133 = sadd.s32 %s132, 1
      %p136 = scmp.eq.s32.totalorder %s25, 1
      %p137 = scmp.ne.s32.totalorder %s132, %s134
      %p138 = scmp.eq.s32.totalorder %s25, 0
      %p139 = por %p137, %p138
      %p140 = scmp.ne.s32.totalorder %s132, %s134
      %p141 = scmp.eq.s32.totalorder %s30, 1
      %p142 = por %p140, %p141
      %p143 = scmp.ne.s32.totalorder %s134, %s135
      %p144 = scmp.eq.s32.totalorder %s30, 0
      %p145 = por %p143, %p144
      %p146 = scmp.ne.s32.totalorder %s134, %s135
      %p147 = scmp.eq.s32.totalorder %s31, 1
      %p148 = por %p146, %p147
      %p150 = scmp.ne.s32.totalorder %s135, %s149
      %p151 = scmp.eq.s32.totalorder %s31, 0
      %p152 = por %p150, %p151
      %s154 = sadd.s32 %s153, 1
      %p157 = scmp.eq.s32.totalorder %s25, 1
      %p158 = scmp.ne.s32.totalorder %s153, %s155
      %p159 = scmp.eq.s32.totalorder %s25, 0
      %p160 = por %p158, %p159
      %p161 = scmp.ne.s32.totalorder %s153, %s155
      %p162 = scmp.eq.s32.totalorder %s30, 1
      %p163 = por %p161, %p162
      %p164 = scmp.ne.s32.totalorder %s155, %s156
      %p165 = scmp.eq.s32.totalorder %s30, 0
      %p166 = por %p164, %p165
      %p167 = scmp.ne.s32.totalorder %s155, %s156
      %p168 = scmp.eq.s32.totalorder %s31, 1
      %p169 = por %p167, %p168
      %p171 = scmp.ne.s32.totalorder %s156, %s170
      %p172 = scmp.eq.s32.totalorder %s31, 0
      %p173 = por %p171, %p172
      %s175 = sadd.s32 %s174, 1
      %p178 = scmp.eq.s32.totalorder %s25, 1
      %p179 = scmp.ne.s32.totalorder %s174, %s176
      %p180 = scmp.eq.s32.totalorder %s25, 0
      %p181 = por %p179, %p180
      %p182 = scmp.ne.s32.totalorder %s174, %s176
      %p183 = scmp.eq.s32.totalorder %s30, 1
      %p184 = por %p182, %p183
      %p185 = scmp.ne.s32.totalorder %s176, %s177
      %p186 = scmp.eq.s32.totalorder %s30, 0
      %p187 = por %p185, %p186
      %p188 = scmp.ne.s32.totalorder %s176, %s177
      %p189 = scmp.eq.s32.totalorder %s31, 1
      %p190 = por %p188, %p189
      %p192 = scmp.ne.s32.totalorder %s177, %s191
      %p193 = scmp.eq.s32.totalorder %s31, 0
      %p194 = por %p192, %p193
      %s196 = sadd.s32 %s195, 1
      %p199 = scmp.eq.s32.totalorder %s25, 1
      %p200 = scmp.ne.s32.totalorder %s195, %s197
      %p201 = scmp.eq.s32.totalorder %s25, 0
      %p202 = por %p200, %p201
      %p203 = scmp.ne.s32.totalorder %s195, %s197
      %p204 = scmp.eq.s32.totalorder %s30, 1
      %p205 = por %p203, %p204
      %p206 = scmp.ne.s32.totalorder %s197, %s198
      %p207 = scmp.eq.s32.totalorder %s30, 0
      %p208 = por %p206, %p207
      %p209 = scmp.ne.s32.totalorder %s197, %s198
      %p210 = scmp.eq.s32.totalorder %s31, 1
      %p211 = por %p209, %p210
      %p213 = scmp.ne.s32.totalorder %s198, %s212
      %p214 = scmp.eq.s32.totalorder %s31, 0
      %p215 = por %p213, %p214
      %s217 = sadd.s32 %s216, 1
      %p220 = scmp.eq.s32.totalorder %s25, 1
      %p221 = scmp.ne.s32.totalorder %s216, %s218
      %p222 = scmp.eq.s32.totalorder %s25, 0
      %p223 = por %p221, %p222
      %p224 = scmp.ne.s32.totalorder %s216, %s218
      %p225 = scmp.eq.s32.totalorder %s30, 1
      %p226 = por %p224, %p225
      %p227 = scmp.ne.s32.totalorder %s218, %s219
      %p228 = scmp.eq.s32.totalorder %s30, 0
      %p229 = por %p227, %p228
      %p230 = scmp.ne.s32.totalorder %s218, %s219
      %p231 = scmp.eq.s32.totalorder %s31, 1
      %p232 = por %p230, %p231
      %p234 = scmp.ne.s32.totalorder %s219, %s233
      %p235 = scmp.eq.s32.totalorder %s31, 0
      %p236 = por %p234, %p235
      %s238 = sadd.s32 %s237, 1
      %p241 = scmp.eq.s32.totalorder %s25, 1
      %p242 = scmp.ne.s32.totalorder %s237, %s239
      %p243 = scmp.eq.s32.totalorder %s25, 0
      %p244 = por %p242, %p243
      %p245 = scmp.ne.s32.totalorder %s237, %s239
      %p246 = scmp.eq.s32.totalorder %s30, 1
      %p247 = por %p245, %p246
      %p248 = scmp.ne.s32.totalorder %s239, %s240
      %p249 = scmp.eq.s32.totalorder %s30, 0
      %p250 = por %p248, %p249
      %p251 = scmp.ne.s32.totalorder %s239, %s240
      %p252 = scmp.eq.s32.totalorder %s31, 1
      %p253 = por %p251, %p252
      %p255 = scmp.ne.s32.totalorder %s240, %s254
      %p256 = scmp.eq.s32.totalorder %s31, 0
      %p257 = por %p255, %p256
      %s259 = sadd.s32 %s258, 1
      %p262 = scmp.eq.s32.totalorder %s25, 1
      %p263 = scmp.ne.s32.totalorder %s258, %s260
      %p264 = scmp.eq.s32.totalorder %s25, 0
      %p265 = por %p263, %p264
      %p266 = scmp.ne.s32.totalorder %s258, %s260
      %p267 = scmp.eq.s32.totalorder %s30, 1
      %p268 = por %p266, %p267
      %p269 = scmp.ne.s32.totalorder %s260, %s261
      %p270 = scmp.eq.s32.totalorder %s30, 0
      %p271 = por %p269, %p270
      %p272 = scmp.ne.s32.totalorder %s260, %s261
      %p273 = scmp.eq.s32.totalorder %s31, 1
      %p274 = por %p272, %p273
      %p276 = scmp.ne.s32.totalorder %s261, %s275
      %p277 = scmp.eq.s32.totalorder %s31, 0
      %p278 = por %p276, %p277
      %s280 = sadd.s32 %s279, 1
      %p283 = scmp.eq.s32.totalorder %s25, 1
      %p284 = scmp.ne.s32.totalorder %s279, %s281
      %p285 = scmp.eq.s32.totalorder %s25, 0
      %p286 = por %p284, %p285
      %p287 = scmp.ne.s32.totalorder %s279, %s281
      %p288 = scmp.eq.s32.totalorder %s30, 1
      %p289 = por %p287, %p288
      %p290 = scmp.ne.s32.totalorder %s281, %s282
      %p291 = scmp.eq.s32.totalorder %s30, 0
      %p292 = por %p290, %p291
      %p293 = scmp.ne.s32.totalorder %s281, %s282
      %p294 = scmp.eq.s32.totalorder %s31, 1
      %p295 = por %p293, %p294
      %p297 = scmp.ne.s32.totalorder %s282, %s296
      %p298 = scmp.eq.s32.totalorder %s31, 0
      %p299 = por %p297, %p298
      %s301 = sadd.s32 %s300, 1
      %p304 = scmp.eq.s32.totalorder %s25, 1
      %p305 = scmp.ne.s32.totalorder %s300, %s302
      %p306 = scmp.eq.s32.totalorder %s25, 0
      %p307 = por %p305, %p306
      %p308 = scmp.ne.s32.totalorder %s300, %s302
      %p309 = scmp.eq.s32.totalorder %s30, 1
      %p310 = por %p308, %p309
      %p311 = scmp.ne.s32.totalorder %s302, %s303
      %p312 = scmp.eq.s32.totalorder %s30, 0
      %p313 = por %p311, %p312
      %p314 = scmp.ne.s32.totalorder %s302, %s303
      %p315 = scmp.eq.s32.totalorder %s31, 1
      %p316 = por %p314, %p315
      %p318 = scmp.ne.s32.totalorder %s303, %s317
      %p319 = scmp.eq.s32.totalorder %s31, 0
      %p320 = por %p318, %p319
      %s322 = sadd.s32 %s321, 1
      %p325 = scmp.eq.s32.totalorder %s25, 1
      %p326 = scmp.ne.s32.totalorder %s321, %s323
      %p327 = scmp.eq.s32.totalorder %s25, 0
      %p328 = por %p326, %p327
      %p329 = scmp.ne.s32.totalorder %s321, %s323
      %p330 = scmp.eq.s32.totalorder %s30, 1
      %p331 = por %p329, %p330
      %p332 = scmp.ne.s32.totalorder %s323, %s324
      %p333 = scmp.eq.s32.totalorder %s30, 0
      %p334 = por %p332, %p333
      %p335 = scmp.ne.s32.totalorder %s323, %s324
      %p336 = scmp.eq.s32.totalorder %s31, 1
      %p337 = por %p335, %p336
      %p339 = scmp.ne.s32.totalorder %s324, %s338
      %p340 = scmp.eq.s32.totalorder %s31, 0
      %p341 = por %p339, %p340
      %s343 = sadd.s32 %s342, 1
      %p346 = scmp.eq.s32.totalorder %s25, 1
      %p347 = scmp.ne.s32.totalorder %s342, %s344
      %p348 = scmp.eq.s32.totalorder %s25, 0
      %p349 = por %p347, %p348
      %p350 = scmp.ne.s32.totalorder %s342, %s344
      %p351 = scmp.eq.s32.totalorder %s30, 1
      %p352 = por %p350, %p351
      %p353 = scmp.ne.s32.totalorder %s344, %s345
      %p354 = scmp.eq.s32.totalorder %s30, 0
      %p355 = por %p353, %p354
      %p356 = scmp.ne.s32.totalorder %s344, %s345
      %p357 = scmp.eq.s32.totalorder %s31, 1
      %p358 = por %p356, %p357
      %p360 = scmp.ne.s32.totalorder %s345, %s359
      %p361 = scmp.eq.s32.totalorder %s31, 0
      %p362 = por %p360, %p361
      %s364 = sadd.s32 %s363, 1
      %p367 = scmp.eq.s32.totalorder %s25, 1
      %p368 = scmp.ne.s32.totalorder %s363, %s365
      %p369 = scmp.eq.s32.totalorder %s25, 0
      %p370 = por %p368, %p369
      %p371 = scmp.ne.s32.totalorder %s363, %s365
      %p372 = scmp.eq.s32.totalorder %s30, 1
      %p373 = por %p371, %p372
      %p374 = scmp.ne.s32.totalorder %s365, %s366
      %p375 = scmp.eq.s32.totalorder %s30, 0
      %p376 = por %p374, %p375
      %p377 = scmp.ne.s32.totalorder %s365, %s366
      %p378 = scmp.eq.s32.totalorder %s31, 1
      %p379 = por %p377, %p378
      %p381 = scmp.ne.s32.totalorder %s366, %s380
      %p382 = scmp.eq.s32.totalorder %s31, 0
      %p383 = por %p381, %p382
      %s384 = ssub.s32 %s25, %s32
      %p385 = scmp.eq.s32.totalorder %s384, 0
      %s387 = sadd.s32 %s386, 1
      %s388 = scalar_select %p385, %s386, %s387
      %p391 = pneg %p385
      %p392 = scmp.eq.s32.totalorder %s25, 1
      %p393 = por %p391, %p392
      %p394 = scmp.ne.s32.totalorder %s386, %s389
      %p395 = scmp.eq.s32.totalorder %s25, 0
      %p396 = por %p394, %p395
      %p397 = scmp.ne.s32.totalorder %s386, %s389
      %p398 = scmp.eq.s32.totalorder %s30, 1
      %p399 = por %p397, %p398
      %p400 = scmp.ne.s32.totalorder %s389, %s390
      %p401 = scmp.eq.s32.totalorder %s30, 0
      %p402 = por %p400, %p401
      %p403 = scmp.ne.s32.totalorder %s389, %s390
      %p404 = scmp.eq.s32.totalorder %s31, 1
      %p405 = por %p403, %p404
      %p407 = scmp.ne.s32.totalorder %s390, %s406
      %p408 = scmp.eq.s32.totalorder %s31, 0
      %p409 = por %p407, %p408
      %p410 = scmp.le.s32.totalorder 1, %s25
      %p411 = scmp.lt.s32.totalorder %s25, 3
      %p412 = pnand %p410, %p411
      %p413 = pneg %p412
      // Predicated region
      $region9: #{mid_block_forward.1} parent=5 // pred_check
        _
      $region10: #{mid_block_forward.1} parent=5 // pred_check_branch
        %415 = sbr.rel (%p412) target = $region12
      $region11: #{mid_block_forward.1} parent=5 // pred_region
        %s416 = ssub.s32 %s25, 1
        // Predicated region
        $region13: #{mid_block_forward.1} parent=11 // pred_check
          %p417 = pneg %p124
        $region14: #{mid_block_forward.1} parent=11 // pred_check_branch
          %419 = sbr.rel (%p417) target = $region16
        $region15: #{mid_block_forward.1} parent=11 // pred_region
          _
        $region16: #{mid_block_forward.1} parent=11 // pred_fallthru
          _
        // Predicated region
        $region17: #{mid_block_forward.1} parent=11 // pred_check
          %p420 = pneg %p145
        $region18: #{mid_block_forward.1} parent=11 // pred_check_branch
          %422 = sbr.rel (%p420) target = $region20
        $region19: #{mid_block_forward.1} parent=11 // pred_region
          _
        $region20: #{mid_block_forward.1} parent=11 // pred_fallthru
          _
        // Predicated region
        $region21: #{mid_block_forward.1} parent=11 // pred_check
          %p423 = pneg %p166
        $region22: #{mid_block_forward.1} parent=11 // pred_check_branch
          %425 = sbr.rel (%p423) target = $region24
        $region23: #{mid_block_forward.1} parent=11 // pred_region
          _
        $region24: #{mid_block_forward.1} parent=11 // pred_fallthru
          _
        // Predicated region
        $region25: #{mid_block_forward.1} parent=11 // pred_check
          %p426 = pneg %p187
        $region26: #{mid_block_forward.1} parent=11 // pred_check_branch
          %428 = sbr.rel (%p426) target = $region28
        $region27: #{mid_block_forward.1} parent=11 // pred_region
          _
        $region28: #{mid_block_forward.1} parent=11 // pred_fallthru
          _
        // Predicated region
        $region29: #{mid_block_forward.1} parent=11 // pred_check
          %p429 = pneg %p208
        $region30: #{mid_block_forward.1} parent=11 // pred_check_branch
          %431 = sbr.rel (%p429) target = $region32
        $region31: #{mid_block_forward.1} parent=11 // pred_region
          _
        $region32: #{mid_block_forward.1} parent=11 // pred_fallthru
          _
        // Predicated region
        $region33: #{mid_block_forward.1} parent=11 // pred_check
          %p432 = pneg %p229
        $region34: #{mid_block_forward.1} parent=11 // pred_check_branch
          %434 = sbr.rel (%p432) target = $region36
        $region35: #{mid_block_forward.1} parent=11 // pred_region
          _
        $region36: #{mid_block_forward.1} parent=11 // pred_fallthru
          _
        // Predicated region
        $region37: #{mid_block_forward.1} parent=11 // pred_check
          %p435 = pneg %p250
        $region38: #{mid_block_forward.1} parent=11 // pred_check_branch
          %437 = sbr.rel (%p435) target = $region40
        $region39: #{mid_block_forward.1} parent=11 // pred_region
          _
        $region40: #{mid_block_forward.1} parent=11 // pred_fallthru
          _
        // Predicated region
        $region41: #{mid_block_forward.1} parent=11 // pred_check
          %p438 = pneg %p271
        $region42: #{mid_block_forward.1} parent=11 // pred_check_branch
          %440 = sbr.rel (%p438) target = $region44
        $region43: #{mid_block_forward.1} parent=11 // pred_region
          _
        $region44: #{mid_block_forward.1} parent=11 // pred_fallthru
          _
        // Predicated region
        $region45: #{mid_block_forward.1} parent=11 // pred_check
          %p441 = pneg %p292
        $region46: #{mid_block_forward.1} parent=11 // pred_check_branch
          %443 = sbr.rel (%p441) target = $region48
        $region47: #{mid_block_forward.1} parent=11 // pred_region
          _
        $region48: #{mid_block_forward.1} parent=11 // pred_fallthru
          _
        // Predicated region
        $region49: #{mid_block_forward.1} parent=11 // pred_check
          %p444 = pneg %p313
        $region50: #{mid_block_forward.1} parent=11 // pred_check_branch
          %446 = sbr.rel (%p444) target = $region52
        $region51: #{mid_block_forward.1} parent=11 // pred_region
          _
        $region52: #{mid_block_forward.1} parent=11 // pred_fallthru
          _
        // Predicated region
        $region53: #{mid_block_forward.1} parent=11 // pred_check
          %p447 = pneg %p334
        $region54: #{mid_block_forward.1} parent=11 // pred_check_branch
          %449 = sbr.rel (%p447) target = $region56
        $region55: #{mid_block_forward.1} parent=11 // pred_region
          _
        $region56: #{mid_block_forward.1} parent=11 // pred_fallthru
          _
        // Predicated region
        $region57: #{mid_block_forward.1} parent=11 // pred_check
          %p450 = pneg %p355
        $region58: #{mid_block_forward.1} parent=11 // pred_check_branch
          %452 = sbr.rel (%p450) target = $region60
        $region59: #{mid_block_forward.1} parent=11 // pred_region
          _
        $region60: #{mid_block_forward.1} parent=11 // pred_fallthru
          _
        // Predicated region
        $region61: #{mid_block_forward.1} parent=11 // pred_check
          %p453 = pneg %p376
        $region62: #{mid_block_forward.1} parent=11 // pred_check_branch
          %455 = sbr.rel (%p453) target = $region64
        $region63: #{mid_block_forward.1} parent=11 // pred_region
          _
        $region64: #{mid_block_forward.1} parent=11 // pred_fallthru
          _
      $region12: #{mid_block_forward.1} parent=5 // pred_fallthru
        _
      %p456 = scmp.lt.s32.totalorder %s25, 2
      // Predicated region
      $region65: #{mid_block_forward.1} parent=5 // pred_check
        %p457 = pneg %p456
      $region66: #{mid_block_forward.1} parent=5 // pred_check_branch
        %459 = sbr.rel (%p457) target = $region68
      $region67: #{mid_block_forward.1} parent=5 // pred_region
        // Predicated region
        $region69: #{mid_block_forward.1} parent=67 // pred_check
          %p460 = pneg %p45
        $region70: #{mid_block_forward.1} parent=67 // pred_check_branch
          %462 = sbr.rel (%p460) target = $region72
        $region71: #{mid_block_forward.1} parent=67 // pred_region
          %p463 = scmp.lt.s32.totalorder %s25, 1
          %s464 = scalar_select %p463, %s25, 1
          %s465 = smul.addr %s464, 8
          %s466 = smul.addr %s465, 8
          %s467 = scalar_lea.vmem %s0, %s466
        $region72: #{mid_block_forward.1} parent=67 // pred_fallthru
          _
        // Predicated region
        $region73: #{mid_block_forward.1} parent=67 // pred_check
          %p468 = pneg %p71
        $region74: #{mid_block_forward.1} parent=67 // pred_check_branch
          %470 = sbr.rel (%p468) target = $region76
        $region75: #{mid_block_forward.1} parent=67 // pred_region
          %p471 = scmp.lt.s32.totalorder %s25, 1
          %s472 = scalar_select %p471, %s25, 1
          %s473 = scalar_lea.vmem %s1, %s472
        $region76: #{mid_block_forward.1} parent=67 // pred_fallthru
          _
        // Predicated region
        $region77: #{mid_block_forward.1} parent=67 // pred_check
          %p474 = pneg %p97
        $region78: #{mid_block_forward.1} parent=67 // pred_check_branch
          %476 = sbr.rel (%p474) target = $region80
        $region79: #{mid_block_forward.1} parent=67 // pred_region
          %p477 = scmp.lt.s32.totalorder %s25, 1
          %s478 = scalar_select %p477, %s25, 1
          %s479 = scalar_lea.vmem %s2, %s478
        $region80: #{mid_block_forward.1} parent=67 // pred_fallthru
          _
      $region68: #{mid_block_forward.1} parent=5 // pred_fallthru
        _
      %p480 = scmp.le.s32.totalorder 1, %s25
      %p481 = scmp.lt.s32.totalorder %s25, 3
      %p482 = pnand %p480, %p481
      %p483 = pneg %p482
      // Predicated region
      $region81: #{mid_block_forward.1} parent=5 // pred_check
        _
      $region82: #{mid_block_forward.1} parent=5 // pred_check_branch
        %485 = sbr.rel (%p482) target = $region84
      $region83: #{mid_block_forward.1} parent=5 // pred_region
        %s486 = ssub.s32 %s25, 1
        %p487 = scmp.lt.s32.totalorder %s30, 1
        %s488 = scalar_select %p487, %s30, 1
        %s489 = smul.addr %s488, 8
        %s490 = smul.addr %s489, 8
        %s491 = scalar_lea.vmem %s0, %s490
        %p492 = pneg %p51
        %p493 = pneg %p48
        %p494 = scmp.lt.s32.totalorder %s30, 1
        %s495 = scalar_select %p494, %s30, 1
        %s496 = scalar_lea.vmem %s1, %s495
        %p497 = pneg %p77
        %p498 = pneg %p74
        %p499 = scmp.lt.s32.totalorder %s30, 1
        %s500 = scalar_select %p499, %s30, 1
        %s501 = scalar_lea.vmem %s2, %s500
        %p502 = pneg %p103
        %p503 = pneg %p100
        %p504 = pneg %p124
        %p505 = pneg %p121
        %p506 = pneg %p145
        %p507 = pneg %p142
        %p508 = pneg %p166
        %p509 = pneg %p163
        %p510 = pneg %p187
        %p511 = pneg %p184
        %p512 = pneg %p208
        %p513 = pneg %p205
        %p514 = pneg %p229
        %p515 = pneg %p226
        %p516 = pneg %p250
        %p517 = pneg %p247
        %p518 = pneg %p271
        %p519 = pneg %p268
        %p520 = pneg %p292
        %p521 = pneg %p289
        %p522 = pneg %p313
        %p523 = pneg %p310
        %p524 = pneg %p334
        %p525 = pneg %p331
        %p526 = pneg %p355
        %p527 = pneg %p352
        %p528 = pneg %p376
        %p529 = pneg %p373
        %p530 = pneg %p402
        %p531 = pneg %p399
        %s532 = sand.u32 %s389, 1
        %s533 = scalar_lea.sflag [#allocation3], %s532
        %s534 = sand.u32 %s389, 1
        %s535 = smul.addr %s534, 64
        %s536 = scalar_lea.vmem [#allocation2], %s535
        %p537 = scmp.lt.s32.totalorder %s30, 1
        %s538 = scalar_select %p537, %s30, 1
        %s539 = smul.addr %s538, 8
        %s540 = smul.addr %s539, 8
        %s541 = scalar_lea.vmem %s0, %s540
        %p542 = scmp.lt.s32.totalorder %s30, 1
        %s543 = scalar_select %p542, %s30, 1
        %s544 = scalar_lea.vmem %s1, %s543
        %p545 = scmp.lt.s32.totalorder %s30, 1
        %s546 = scalar_select %p545, %s30, 1
        %s547 = scalar_lea.vmem %s2, %s546
        %v549 = vld [vmem:[%s3] sm:$0xff]
        %v550 = vld [vmem:[%s3 + $0x8] sm:$0xff]
        %v551 = vld [vmem:[%s3 + $0x10] sm:$0xff]
        %v552 = vld [vmem:[%s3 + $0x18] sm:$0xff]
        %v553 = vld [vmem:[%s544] sm:$0x1]
        %v554 = vld [vmem:[%s547] sm:$0x1]
        %v555 = vxor.u32 %v553, 2147483648
        %v556 = vmul.f32 %v555, 1.442695
        %v557 = vpow.pop %v556
        %v558 = vadd.f32 %v557, 1.0
        %v559 = vrcp.pop %v558
        %v560 = vmul.f32 1.0, %v559
        %v561 = vmul.f32 %v553, %v560
        %v562 = vxor.u32 %v554, 2147483648
        %v563 = vmul.f32 %v562, 1.442695
        %v564 = vpow.pop %v563
        %v565 = vadd.f32 %v564, 1.0
        %v566 = vrcp.pop %v565
        %v567 = vmul.f32 1.0, %v566
        %v568 = vmul.f32 %v554, %v567
        %v570 = vlaneseq
        %v571 = vshrl.u32 %v570, 7
        %v572 = vsub.s32 0, %v571
        %v573 = vrot.slane %v568, %v572
        %574 = vrot.lane.b32.xlu0 %v573, 32
        %v575 = vpop.permute.xlu0 %574
        %vm577 = vcmask 261120
        %v578 = vsel %vm577, %v561, %v575
        %v579 = vld [vmem:[%s10] sm:$0xff]
        %v580 = vld [vmem:[%s10 + $0x8] sm:$0xff]
        %v581 = vld [vmem:[%s10 + $0x10] sm:$0xff]
        %v582 = vld [vmem:[%s10 + $0x18] sm:$0xff]
        %v583 = vld [vmem:[%s10 + $0x20] sm:$0xff]
        %v584 = vld [vmem:[%s10 + $0x28] sm:$0xff]
        %v585 = vld [vmem:[%s10 + $0x30] sm:$0xff]
        %v586 = vld [vmem:[%s10 + $0x38] sm:$0xff]
        %v587 = vld [vmem:[%s11] sm:$0x1]
        %vm588 = vcmask 523264
        %v590 = vsel %vm588, %v578, 0
        %592 = vmatprep.subr.mxu0 0.0
        %593 = vmatpush1.msra.mxu0 0.0
        %594 = vmatprep.subr.mxu0 0.0
        %595 = vmatpush1.msra.mxu0 0.0
        %596 = vmatprep.subr.mxu0 0.0
        %597 = vmatpush1.msra.mxu0 0.0
        %598 = vmatprep.subr.mxu0 0.0
        %599 = vmatpush1.msra.mxu0 0.0
        %600 = vmatprep.subr.mxu0 0.0
        %601 = vmatpush1.msra.mxu0 0.0
        %602 = vmatprep.subr.mxu0 0.0
        %603 = vmatpush1.msra.mxu0 0.0
        %604 = vmatprep.subr.mxu0 0.0
        %605 = vmatpush1.msra.mxu0 0.0
        %606 = vmatprep.subr.mxu0 0.0
        %607 = vmatpush1.msra.mxu0 0.0
        %608 = vmatprep.subr.mxu0 0.0
        %609 = vmatpush1.msra.mxu0 %v586
        %610 = vmatprep.subr.mxu0 0.0
        %611 = vmatpush1.msra.mxu0 %v585
        %612 = vmatprep.subr.mxu0 0.0
        %613 = vmatpush1.msra.mxu0 %v584
        %614 = vmatprep.subr.mxu0 0.0
        %615 = vmatpush1.msra.mxu0 %v583
        %616 = vmatprep.subr.mxu0 0.0
        %617 = vmatpush1.msra.mxu0 %v582
        %618 = vmatprep.subr.mxu0 0.0
        %619 = vmatpush1.msra.mxu0 %v581
        %620 = vmatprep.subr.mxu0 0.0
        %621 = vmatpush1.msra.mxu0 %v580
        %622 = vmatprep.subr.mxu0 0.0
        %623 = vmatpush1.msra.mxu0 %v579
        %624 = vmatprep.subr.mxu0 0.0
        %625 = vmatpush2.msra.mxu0 0.0
        %626 = vmatprep.subr.mxu0 0.0
        %627 = vmatpush2.msra.mxu0 0.0
        %628 = vmatprep.subr.mxu0 0.0
        %629 = vmatpush2.msra.mxu0 0.0
        %630 = vmatprep.subr.mxu0 0.0
        %631 = vmatpush2.msra.mxu0 0.0
        %632 = vmatprep.subr.mxu0 0.0
        %633 = vmatpush2.msra.mxu0 0.0
        %634 = vmatprep.subr.mxu0 0.0
        %635 = vmatpush2.msra.mxu0 0.0
        %636 = vmatprep.subr.mxu0 0.0
        %637 = vmatpush2.msra.mxu0 0.0
        %638 = vmatprep.subr.mxu0 0.0
        %639 = vmatpush2.msra.mxu0 0.0
        %640 = vmatprep.subr.mxu0 0.0
        %641 = vmatpush2.msra.mxu0 0.0
        %642 = vmatprep.subr.mxu0 0.0
        %643 = vmatpush2.msra.mxu0 0.0
        %644 = vmatprep.subr.mxu0 0.0
        %645 = vmatpush2.msra.mxu0 0.0
        %646 = vmatprep.subr.mxu0 0.0
        %647 = vmatpush2.msra.mxu0 0.0
        %648 = vmatprep.subr.mxu0 0.0
        %649 = vmatpush2.msra.mxu0 0.0
        %650 = vmatprep.subr.mxu0 0.0
        %651 = vmatpush2.msra.mxu0 0.0
        %652 = vmatprep.subr.mxu0 0.0
        %653 = vmatpush2.msra.mxu0 0.0
        %654 = vmatprep.subr.mxu0 0.0
        %655 = vmatpush2.msra.mxu0 0.0
        %656 = vmatprep.mubr.f32.mxu0 0.0
        %657 = vmatmul.mubr.f32.gmra.mxu0 %v590
        %v658 = vpop.f32.mrf.mxu0
        %v659 = vadd.f32 %v587, %v658
        %v660 = vpop.f32.mrf.mxu0
        %661 = vdwg.mxu0
        %v662 = vld [vmem:[%s541] sm:$0xff]
        %v663 = vld [vmem:[%s541 + $0x8] sm:$0xff]
        %v664 = vld [vmem:[%s541 + $0x10] sm:$0xff]
        %v665 = vld [vmem:[%s541 + $0x18] sm:$0xff]
        %v666 = vld [vmem:[%s541 + $0x20] sm:$0xff]
        %v667 = vld [vmem:[%s541 + $0x28] sm:$0xff]
        %v668 = vld [vmem:[%s541 + $0x30] sm:$0xff]
        %v669 = vld [vmem:[%s541 + $0x38] sm:$0xff]
        %v670 = vld [vmem:[%s7] sm:$0x1]
        %s671 = scalar_lea.vmem %s7, 1
        %v672 = vld [vmem:[%s671] sm:$0x1]
        %v673 = vsel %vm577, %v662, 0.0
        %v674 = vsel %vm577, %v663, 0.0
        %v675 = vadd.f32 %v673, %v674
        %v676 = vsel %vm577, %v664, 0.0
        %v677 = vadd.f32 %v675, %v676
        %v678 = vsel %vm577, %v665, 0.0
        %v679 = vadd.f32 %v677, %v678
        %v680 = vsel %vm577, %v666, 0.0
        %v681 = vadd.f32 %v679, %v680
        %v682 = vsel %vm577, %v667, 0.0
        %v683 = vadd.f32 %v681, %v682
        %v684 = vsel %vm577, %v668, 0.0
        %v685 = vadd.f32 %v683, %v684
        %v686 = vsel %vm577, %v669, 0.0
        %v687 = vadd.f32 %v685, %v686
        %v688 = vrot.slane %v687, 4
        %v689 = vadd.f32 %v687, %v688
        %v690 = vrot.slane %v689, 2
        %v691 = vadd.f32 %v689, %v690
        %v692 = vrot.slane %v691, 1
        %v693 = vadd.f32 %v691, %v692
        %v694 = vmul.f32 %v662, %v662
        %v695 = vmul.f32 %v663, %v663
        %v696 = vmul.f32 %v664, %v664
        %v697 = vmul.f32 %v665, %v665
        %v698 = vmul.f32 %v666, %v666
        %v699 = vmul.f32 %v667, %v667
        %v700 = vmul.f32 %v668, %v668
        %v701 = vmul.f32 %v669, %v669
        %v702 = vsel %vm577, %v694, 0.0
        %v703 = vsel %vm577, %v695, 0.0
        %v704 = vadd.f32 %v702, %v703
        %v705 = vsel %vm577, %v696, 0.0
        %v706 = vadd.f32 %v704, %v705
        %v707 = vsel %vm577, %v697, 0.0
        %v708 = vadd.f32 %v706, %v707
        %v709 = vsel %vm577, %v698, 0.0
        %v710 = vadd.f32 %v708, %v709
        %v711 = vsel %vm577, %v699, 0.0
        %v712 = vadd.f32 %v710, %v711
        %v713 = vsel %vm577, %v700, 0.0
        %v714 = vadd.f32 %v712, %v713
        %v715 = vsel %vm577, %v701, 0.0
        %v716 = vadd.f32 %v714, %v715
        %v717 = vrot.slane %v716, 4
        %v718 = vadd.f32 %v716, %v717
        %v719 = vrot.slane %v718, 2
        %v720 = vadd.f32 %v718, %v719
        %v721 = vrot.slane %v720, 1
        %v722 = vadd.f32 %v720, %v721
        %vm723 = vcmask 1040384
        %v724 = vsel %vm723, %v693, %v722
        %v726 = vsel %vm577, %v724, 0
        %728 = vmatprep.subr.mxu0 0.0
        %729 = vmatpush1.msra.mxu0 0.0
        %730 = vmatprep.subr.mxu0 0.0
        %731 = vmatpush1.msra.mxu0 0.0
        %732 = vmatprep.subr.mxu0 0.0
        %733 = vmatpush1.msra.mxu0 0.0
        %734 = vmatprep.subr.mxu0 0.0
        %735 = vmatpush1.msra.mxu0 0.0
        %736 = vmatprep.subr.mxu0 0.0
        %737 = vmatpush1.msra.mxu0 0.0
        %738 = vmatprep.subr.mxu0 0.0
        %739 = vmatpush1.msra.mxu0 0.0
        %740 = vmatprep.subr.mxu0 0.0
        %741 = vmatpush1.msra.mxu0 0.0
        %742 = vmatprep.subr.mxu0 0.0
        %743 = vmatpush1.msra.mxu0 0.0
        %744 = vmatprep.subr.mxu0 0.0
        %745 = vmatpush1.msra.mxu0 0.0
        %746 = vmatprep.subr.mxu0 0.0
        %747 = vmatpush1.msra.mxu0 0.0
        %748 = vmatprep.subr.mxu0 0.0
        %749 = vmatpush1.msra.mxu0 0.0
        %750 = vmatprep.subr.mxu0 0.0
        %751 = vmatpush1.msra.mxu0 0.0
        %752 = vmatprep.subr.mxu0 0.0
        %753 = vmatpush1.msra.mxu0 %v552
        %754 = vmatprep.subr.mxu0 0.0
        %755 = vmatpush1.msra.mxu0 %v551
        %756 = vmatprep.subr.mxu0 0.0
        %757 = vmatpush1.msra.mxu0 %v550
        %758 = vmatprep.subr.mxu0 0.0
        %759 = vmatpush1.msra.mxu0 %v549
        %760 = vmatprep.subr.mxu0 0.0
        %761 = vmatpush2.msra.mxu0 0.0
        %762 = vmatprep.subr.mxu0 0.0
        %763 = vmatpush2.msra.mxu0 0.0
        %764 = vmatprep.subr.mxu0 0.0
        %765 = vmatpush2.msra.mxu0 0.0
        %766 = vmatprep.subr.mxu0 0.0
        %767 = vmatpush2.msra.mxu0 0.0
        %768 = vmatprep.subr.mxu0 0.0
        %769 = vmatpush2.msra.mxu0 0.0
        %770 = vmatprep.subr.mxu0 0.0
        %771 = vmatpush2.msra.mxu0 0.0
        %772 = vmatprep.subr.mxu0 0.0
        %773 = vmatpush2.msra.mxu0 0.0
        %774 = vmatprep.subr.mxu0 0.0
        %775 = vmatpush2.msra.mxu0 0.0
        %776 = vmatprep.subr.mxu0 0.0
        %777 = vmatpush2.msra.mxu0 0.0
        %778 = vmatprep.subr.mxu0 0.0
        %779 = vmatpush2.msra.mxu0 0.0
        %780 = vmatprep.subr.mxu0 0.0
        %781 = vmatpush2.msra.mxu0 0.0
        %782 = vmatprep.subr.mxu0 0.0
        %783 = vmatpush2.msra.mxu0 0.0
        %784 = vmatprep.subr.mxu0 0.0
        %785 = vmatpush2.msra.mxu0 0.0
        %786 = vmatprep.subr.mxu0 0.0
        %787 = vmatpush2.msra.mxu0 0.0
        %788 = vmatprep.subr.mxu0 0.0
        %789 = vmatpush2.msra.mxu0 0.0
        %790 = vmatprep.subr.mxu0 0.0
        %791 = vmatpush2.msra.mxu0 0.0
        %792 = vmatprep.mubr.f32.mxu0 0.0
        %793 = vmatmul.mubr.f32.gmra.mxu0 %v726
        %v794 = vpop.f32.mrf.mxu0
        %v795 = vadd.f32 0.0, %v794
        %v796 = vpop.f32.mrf.mxu0
        %797 = vdwg.mxu0
        %v798 = vmul.f32 %v795, %v795
        %v800 = vrot.slane %v798, 7
        %v802 = vsub.f32 %v795, %v800
        %v803 = vmax.f32 %v802, 0.0
        %v804 = vlaneseq
        %v805 = vshrl.u32 %v804, 7
        %v806 = vsub.s32 0, %v805
        %v807 = vrot.slane %v795, %v806
        %v808 = vsub.f32 %v662, %v807
        %v809 = vsub.f32 %v663, %v807
        %v810 = vsub.f32 %v664, %v807
        %v811 = vsub.f32 %v665, %v807
        %v812 = vsub.f32 %v666, %v807
        %v813 = vsub.f32 %v667, %v807
        %v814 = vsub.f32 %v668, %v807
        %v815 = vsub.f32 %v669, %v807
        %v816 = vadd.f32 %v803, 1e-06
        %v817 = vrsqrt.pop %v816
        %v818 = vlaneseq
        %v819 = vshrl.u32 %v818, 7
        %v820 = vsub.s32 1, %v819
        %v821 = vrot.slane %v817, %v820
        %v822 = vmul.f32 %v808, %v821
        %v823 = vmul.f32 %v809, %v821
        %v824 = vmul.f32 %v810, %v821
        %v825 = vmul.f32 %v811, %v821
        %v826 = vmul.f32 %v812, %v821
        %v827 = vmul.f32 %v813, %v821
        %v828 = vmul.f32 %v814, %v821
        %v829 = vmul.f32 %v815, %v821
        %v831 = vlaneseq
        %v832 = vshrl.u32 %v831, 7
        %v833 = vsub.s32 0, %v832
        %v834 = vrot.slane %v670, %v833
        %v836 = vmul.f32 %v822, %v834
        %v837 = vmul.f32 %v823, %v834
        %v838 = vmul.f32 %v824, %v834
        %v839 = vmul.f32 %v825, %v834
        %v840 = vmul.f32 %v826, %v834
        %v841 = vmul.f32 %v827, %v834
        %v842 = vmul.f32 %v828, %v834
        %v843 = vmul.f32 %v829, %v834
        %v845 = vlaneseq
        %v846 = vshrl.u32 %v845, 7
        %v847 = vsub.s32 0, %v846
        %v848 = vrot.slane %v672, %v847
        %v850 = vadd.f32 %v836, %v848
        %v851 = vadd.f32 %v837, %v848
        %v852 = vadd.f32 %v838, %v848
        %v853 = vadd.f32 %v839, %v848
        %v854 = vadd.f32 %v840, %v848
        %v855 = vadd.f32 %v841, %v848
        %v856 = vadd.f32 %v842, %v848
        %v857 = vadd.f32 %v843, %v848
        %v858 = vxor.u32 %v850, 2147483648
        %v859 = vxor.u32 %v851, 2147483648
        %v860 = vxor.u32 %v852, 2147483648
        %v861 = vxor.u32 %v853, 2147483648
        %v862 = vxor.u32 %v854, 2147483648
        %v863 = vxor.u32 %v855, 2147483648
        %v864 = vxor.u32 %v856, 2147483648
        %v865 = vxor.u32 %v857, 2147483648
        %v866 = vmul.f32 %v858, 1.442695
        %v867 = vpow.pop %v866
        %v868 = vmul.f32 %v859, 1.442695
        %v869 = vpow.pop %v868
        %v870 = vmul.f32 %v860, 1.442695
        %v871 = vpow.pop %v870
        %v872 = vmul.f32 %v861, 1.442695
        %v873 = vpow.pop %v872
        %v874 = vmul.f32 %v862, 1.442695
        %v875 = vpow.pop %v874
        %v876 = vmul.f32 %v863, 1.442695
        %v877 = vpow.pop %v876
        %v878 = vmul.f32 %v864, 1.442695
        %v879 = vpow.pop %v878
        %v880 = vmul.f32 %v865, 1.442695
        %v881 = vpow.pop %v880
        %v882 = vadd.f32 %v867, 1.0
        %v883 = vadd.f32 %v869, 1.0
        %v884 = vadd.f32 %v871, 1.0
        %v885 = vadd.f32 %v873, 1.0
        %v886 = vadd.f32 %v875, 1.0
        %v887 = vadd.f32 %v877, 1.0
        %v888 = vadd.f32 %v879, 1.0
        %v889 = vadd.f32 %v881, 1.0
        %v890 = vrcp.pop %v882
        %v891 = vmul.f32 1.0, %v890
        %v892 = vrcp.pop %v883
        %v893 = vmul.f32 1.0, %v892
        %v894 = vrcp.pop %v884
        %v895 = vmul.f32 1.0, %v894
        %v896 = vrcp.pop %v885
        %v897 = vmul.f32 1.0, %v896
        %v898 = vrcp.pop %v886
        %v899 = vmul.f32 1.0, %v898
        %v900 = vrcp.pop %v887
        %v901 = vmul.f32 1.0, %v900
        %v902 = vrcp.pop %v888
        %v903 = vmul.f32 1.0, %v902
        %v904 = vrcp.pop %v889
        %v905 = vmul.f32 1.0, %v904
        %v906 = vmul.f32 %v850, %v891
        %v907 = vmul.f32 %v851, %v893
        %v908 = vmul.f32 %v852, %v895
        %v909 = vmul.f32 %v853, %v897
        %v910 = vmul.f32 %v854, %v899
        %v911 = vmul.f32 %v855, %v901
        %v912 = vmul.f32 %v856, %v903
        %v913 = vmul.f32 %v857, %v905
        %v914 = vrot.slane %v906, 7
        %v915 = vrot.slane %v907, 7
        %v916 = vrot.slane %v908, 7
        %v917 = vrot.slane %v909, 7
        %v918 = vrot.slane %v910, 7
        %v919 = vrot.slane %v911, 7
        %v920 = vrot.slane %v912, 7
        %v921 = vrot.slane %v913, 7
        %v922 = vlaneseq
        %v923 = vshrl.u32 %v922, 7
        %vm924 = vcmp.lt.s32.totalorder %v923, 1
        %v925 = vsel %vm924, %v920, %v921
        %v926 = vsel %vm924, %v919, %v920
        %v927 = vsel %vm924, %v918, %v919
        %v928 = vsel %vm924, %v917, %v918
        %v929 = vsel %vm924, %v916, %v917
        %v930 = vsel %vm924, %v915, %v916
        %v931 = vsel %vm924, %v914, %v915
        %v932 = vsel %vm924, %v921, %v914
        %v933 = vld [vmem:[%s4] sm:$0xff]
        %v934 = vld [vmem:[%s4 + $0x8] sm:$0xff]
        %v935 = vld [vmem:[%s4 + $0x10] sm:$0xff]
        %v936 = vld [vmem:[%s4 + $0x18] sm:$0xff]
        %v937 = vld [vmem:[%s4 + $0x20] sm:$0xff]
        %v938 = vld [vmem:[%s4 + $0x28] sm:$0xff]
        %v939 = vld [vmem:[%s4 + $0x30] sm:$0xff]
        %v940 = vld [vmem:[%s4 + $0x38] sm:$0xff]
        %942 = vset.pattern.permute.xlu0 0
        %943 = vperm.xlu0 %942, %v933
        %v944 = vpop.permute.xlu0 %943
        %947 = vset.pattern.permute.xlu0 0
        %948 = vperm.xlu0 %947, %v934
        %v949 = vpop.permute.xlu0 %948
        %952 = vset.pattern.permute.xlu0 0
        %953 = vperm.xlu0 %952, %v935
        %v954 = vpop.permute.xlu0 %953
        %957 = vset.pattern.permute.xlu0 0
        %958 = vperm.xlu0 %957, %v936
        %v959 = vpop.permute.xlu0 %958
        %962 = vset.pattern.permute.xlu0 0
        %963 = vperm.xlu0 %962, %v937
        %v964 = vpop.permute.xlu0 %963
        %967 = vset.pattern.permute.xlu0 0
        %968 = vperm.xlu0 %967, %v938
        %v969 = vpop.permute.xlu0 %968
        %972 = vset.pattern.permute.xlu0 0
        %973 = vperm.xlu0 %972, %v939
        %v974 = vpop.permute.xlu0 %973
        %977 = vset.pattern.permute.xlu0 0
        %978 = vperm.xlu0 %977, %v940
        %v979 = vpop.permute.xlu0 %978
        %v981 = vmul.f32 %v925, %v944
        %v982 = vmul.f32 %v932, %v949
        %v983 = vmul.f32 %v931, %v954
        %v984 = vmul.f32 %v930, %v959
        %v985 = vmul.f32 %v929, %v964
        %v986 = vmul.f32 %v928, %v969
        %v987 = vmul.f32 %v927, %v974
        %v988 = vmul.f32 %v926, %v979
        %s989 = scalar_lea.vmem %s4, 64
        %v990 = vld [vmem:[%s989] sm:$0xff]
        %v991 = vld [vmem:[%s989 + $0x8] sm:$0xff]
        %v992 = vld [vmem:[%s989 + $0x10] sm:$0xff]
        %v993 = vld [vmem:[%s989 + $0x18] sm:$0xff]
        %v994 = vld [vmem:[%s989 + $0x20] sm:$0xff]
        %v995 = vld [vmem:[%s989 + $0x28] sm:$0xff]
        %v996 = vld [vmem:[%s989 + $0x30] sm:$0xff]
        %v997 = vld [vmem:[%s989 + $0x38] sm:$0xff]
        %999 = vset.pattern.permute.xlu0 0
        %1000 = vperm.xlu0 %999, %v990
        %v1001 = vpop.permute.xlu0 %1000
        %1004 = vset.pattern.permute.xlu0 0
        %1005 = vperm.xlu0 %1004, %v991
        %v1006 = vpop.permute.xlu0 %1005
        %1009 = vset.pattern.permute.xlu0 0
        %1010 = vperm.xlu0 %1009, %v992
        %v1011 = vpop.permute.xlu0 %1010
        %1014 = vset.pattern.permute.xlu0 0
        %1015 = vperm.xlu0 %1014, %v993
        %v1016 = vpop.permute.xlu0 %1015
        %1019 = vset.pattern.permute.xlu0 0
        %1020 = vperm.xlu0 %1019, %v994
        %v1021 = vpop.permute.xlu0 %1020
        %1024 = vset.pattern.permute.xlu0 0
        %1025 = vperm.xlu0 %1024, %v995
        %v1026 = vpop.permute.xlu0 %1025
        %1029 = vset.pattern.permute.xlu0 0
        %1030 = vperm.xlu0 %1029, %v996
        %v1031 = vpop.permute.xlu0 %1030
        %1034 = vset.pattern.permute.xlu0 0
        %1035 = vperm.xlu0 %1034, %v997
        %v1036 = vpop.permute.xlu0 %1035
        %v1038 = vmul.f32 %v913, %v1001
        %v1039 = vmul.f32 %v906, %v1006
        %v1040 = vmul.f32 %v907, %v1011
        %v1041 = vmul.f32 %v908, %v1016
        %v1042 = vmul.f32 %v909, %v1021
        %v1043 = vmul.f32 %v910, %v1026
        %v1044 = vmul.f32 %v911, %v1031
        %v1045 = vmul.f32 %v912, %v1036
        %v1046 = vrot.slane %v906, 1
        %v1047 = vrot.slane %v907, 1
        %v1048 = vrot.slane %v908, 1
        %v1049 = vrot.slane %v909, 1
        %v1050 = vrot.slane %v910, 1
        %v1051 = vrot.slane %v911, 1
        %v1052 = vrot.slane %v912, 1
        %v1053 = vrot.slane %v913, 1
        %vm1054 = vcmp.lt.s32.totalorder %v923, 7
        %v1055 = vsel %vm1054, %v1052, %v1053
        %v1056 = vsel %vm1054, %v1051, %v1052
        %v1057 = vsel %vm1054, %v1050, %v1051
        %v1058 = vsel %vm1054, %v1049, %v1050
        %v1059 = vsel %vm1054, %v1048, %v1049
        %v1060 = vsel %vm1054, %v1047, %v1048
        %v1061 = vsel %vm1054, %v1046, %v1047
        %v1062 = vsel %vm1054, %v1053, %v1046
        %s1063 = scalar_lea.vmem %s4, 128
        %v1064 = vld [vmem:[%s1063] sm:$0xff]
        %v1065 = vld [vmem:[%s1063 + $0x8] sm:$0xff]
        %v1066 = vld [vmem:[%s1063 + $0x10] sm:$0xff]
        %v1067 = vld [vmem:[%s1063 + $0x18] sm:$0xff]
        %v1068 = vld [vmem:[%s1063 + $0x20] sm:$0xff]
        %v1069 = vld [vmem:[%s1063 + $0x28] sm:$0xff]
        %v1070 = vld [vmem:[%s1063 + $0x30] sm:$0xff]
        %v1071 = vld [vmem:[%s1063 + $0x38] sm:$0xff]
        %1073 = vset.pattern.permute.xlu0 0
        %1074 = vperm.xlu0 %1073, %v1064
        %v1075 = vpop.permute.xlu0 %1074
        %1078 = vset.pattern.permute.xlu0 0
        %1079 = vperm.xlu0 %1078, %v1065
        %v1080 = vpop.permute.xlu0 %1079
        %1083 = vset.pattern.permute.xlu0 0
        %1084 = vperm.xlu0 %1083, %v1066
        %v1085 = vpop.permute.xlu0 %1084
        %1088 = vset.pattern.permute.xlu0 0
        %1089 = vperm.xlu0 %1088, %v1067
        %v1090 = vpop.permute.xlu0 %1089
        %1093 = vset.pattern.permute.xlu0 0
        %1094 = vperm.xlu0 %1093, %v1068
        %v1095 = vpop.permute.xlu0 %1094
        %1098 = vset.pattern.permute.xlu0 0
        %1099 = vperm.xlu0 %1098, %v1069
        %v1100 = vpop.permute.xlu0 %1099
        %1103 = vset.pattern.permute.xlu0 0
        %1104 = vperm.xlu0 %1103, %v1070
        %v1105 = vpop.permute.xlu0 %1104
        %1108 = vset.pattern.permute.xlu0 0
        %1109 = vperm.xlu0 %1108, %v1071
        %v1110 = vpop.permute.xlu0 %1109
        %v1112 = vmul.f32 %v1062, %v1075
        %v1113 = vmul.f32 %v1061, %v1080
        %v1114 = vmul.f32 %v1060, %v1085
        %v1115 = vmul.f32 %v1059, %v1090
        %v1116 = vmul.f32 %v1058, %v1095
        %v1117 = vmul.f32 %v1057, %v1100
        %v1118 = vmul.f32 %v1056, %v1105
        %v1119 = vmul.f32 %v1055, %v1110
        %s1120 = scalar_lea.vmem %s4, 192
        %v1121 = vld [vmem:[%s1120] sm:$0xff]
        %v1122 = vld [vmem:[%s1120 + $0x8] sm:$0xff]
        %v1123 = vld [vmem:[%s1120 + $0x10] sm:$0xff]
        %v1124 = vld [vmem:[%s1120 + $0x18] sm:$0xff]
        %v1125 = vld [vmem:[%s1120 + $0x20] sm:$0xff]
        %v1126 = vld [vmem:[%s1120 + $0x28] sm:$0xff]
        %v1127 = vld [vmem:[%s1120 + $0x30] sm:$0xff]
        %v1128 = vld [vmem:[%s1120 + $0x38] sm:$0xff]
        %1130 = vset.pattern.permute.xlu0 0
        %1131 = vperm.xlu0 %1130, %v1121
        %v1132 = vpop.permute.xlu0 %1131
        %1135 = vset.pattern.permute.xlu0 0
        %1136 = vperm.xlu0 %1135, %v1122
        %v1137 = vpop.permute.xlu0 %1136
        %1140 = vset.pattern.permute.xlu0 0
        %1141 = vperm.xlu0 %1140, %v1123
        %v1142 = vpop.permute.xlu0 %1141
        %1145 = vset.pattern.permute.xlu0 0
        %1146 = vperm.xlu0 %1145, %v1124
        %v1147 = vpop.permute.xlu0 %1146
        %1150 = vset.pattern.permute.xlu0 0
        %1151 = vperm.xlu0 %1150, %v1125
        %v1152 = vpop.permute.xlu0 %1151
        %1155 = vset.pattern.permute.xlu0 0
        %1156 = vperm.xlu0 %1155, %v1126
        %v1157 = vpop.permute.xlu0 %1156
        %1160 = vset.pattern.permute.xlu0 0
        %1161 = vperm.xlu0 %1160, %v1127
        %v1162 = vpop.permute.xlu0 %1161
        %1165 = vset.pattern.permute.xlu0 0
        %1166 = vperm.xlu0 %1165, %v1128
        %v1167 = vpop.permute.xlu0 %1166
        %v1169 = vmul.f32 %v932, %v1132
        %v1170 = vmul.f32 %v931, %v1137
        %v1171 = vmul.f32 %v930, %v1142
        %v1172 = vmul.f32 %v929, %v1147
        %v1173 = vmul.f32 %v928, %v1152
        %v1174 = vmul.f32 %v927, %v1157
        %v1175 = vmul.f32 %v926, %v1162
        %v1176 = vmul.f32 %v925, %v1167
        %s1177 = scalar_lea.vmem %s4, 320
        %v1178 = vld [vmem:[%s1177] sm:$0xff]
        %v1179 = vld [vmem:[%s1177 + $0x8] sm:$0xff]
        %v1180 = vld [vmem:[%s1177 + $0x10] sm:$0xff]
        %v1181 = vld [vmem:[%s1177 + $0x18] sm:$0xff]
        %v1182 = vld [vmem:[%s1177 + $0x20] sm:$0xff]
        %v1183 = vld [vmem:[%s1177 + $0x28] sm:$0xff]
        %v1184 = vld [vmem:[%s1177 + $0x30] sm:$0xff]
        %v1185 = vld [vmem:[%s1177 + $0x38] sm:$0xff]
        %1187 = vset.pattern.permute.xlu0 0
        %1188 = vperm.xlu0 %1187, %v1178
        %v1189 = vpop.permute.xlu0 %1188
        %1192 = vset.pattern.permute.xlu0 0
        %1193 = vperm.xlu0 %1192, %v1179
        %v1194 = vpop.permute.xlu0 %1193
        %1197 = vset.pattern.permute.xlu0 0
        %1198 = vperm.xlu0 %1197, %v1180
        %v1199 = vpop.permute.xlu0 %1198
        %1202 = vset.pattern.permute.xlu0 0
        %1203 = vperm.xlu0 %1202, %v1181
        %v1204 = vpop.permute.xlu0 %1203
        %1207 = vset.pattern.permute.xlu0 0
        %1208 = vperm.xlu0 %1207, %v1182
        %v1209 = vpop.permute.xlu0 %1208
        %1212 = vset.pattern.permute.xlu0 0
        %1213 = vperm.xlu0 %1212, %v1183
        %v1214 = vpop.permute.xlu0 %1213
        %1217 = vset.pattern.permute.xlu0 0
        %1218 = vperm.xlu0 %1217, %v1184
        %v1219 = vpop.permute.xlu0 %1218
        %1222 = vset.pattern.permute.xlu0 0
        %1223 = vperm.xlu0 %1222, %v1185
        %v1224 = vpop.permute.xlu0 %1223
        %v1226 = vmul.f32 %v1061, %v1189
        %v1227 = vmul.f32 %v1060, %v1194
        %v1228 = vmul.f32 %v1059, %v1199
        %v1229 = vmul.f32 %v1058, %v1204
        %v1230 = vmul.f32 %v1057, %v1209
        %v1231 = vmul.f32 %v1056, %v1214
        %v1232 = vmul.f32 %v1055, %v1219
        %v1233 = vmul.f32 %v1062, %v1224
        %s1234 = scalar_lea.vmem %s4, 384
        %v1235 = vld [vmem:[%s1234] sm:$0xff]
        %v1236 = vld [vmem:[%s1234 + $0x8] sm:$0xff]
        %v1237 = vld [vmem:[%s1234 + $0x10] sm:$0xff]
        %v1238 = vld [vmem:[%s1234 + $0x18] sm:$0xff]
        %v1239 = vld [vmem:[%s1234 + $0x20] sm:$0xff]
        %v1240 = vld [vmem:[%s1234 + $0x28] sm:$0xff]
        %v1241 = vld [vmem:[%s1234 + $0x30] sm:$0xff]
        %v1242 = vld [vmem:[%s1234 + $0x38] sm:$0xff]
        %1244 = vset.pattern.permute.xlu0 0
        %1245 = vperm.xlu0 %1244, %v1235
        %v1246 = vpop.permute.xlu0 %1245
        %1249 = vset.pattern.permute.xlu0 0
        %1250 = vperm.xlu0 %1249, %v1236
        %v1251 = vpop.permute.xlu0 %1250
        %1254 = vset.pattern.permute.xlu0 0
        %1255 = vperm.xlu0 %1254, %v1237
        %v1256 = vpop.permute.xlu0 %1255
        %1259 = vset.pattern.permute.xlu0 0
        %1260 = vperm.xlu0 %1259, %v1238
        %v1261 = vpop.permute.xlu0 %1260
        %1264 = vset.pattern.permute.xlu0 0
        %1265 = vperm.xlu0 %1264, %v1239
        %v1266 = vpop.permute.xlu0 %1265
        %1269 = vset.pattern.permute.xlu0 0
        %1270 = vperm.xlu0 %1269, %v1240
        %v1271 = vpop.permute.xlu0 %1270
        %1274 = vset.pattern.permute.xlu0 0
        %1275 = vperm.xlu0 %1274, %v1241
        %v1276 = vpop.permute.xlu0 %1275
        %1279 = vset.pattern.permute.xlu0 0
        %1280 = vperm.xlu0 %1279, %v1242
        %v1281 = vpop.permute.xlu0 %1280
        %v1283 = vmul.f32 %v931, %v1246
        %v1284 = vmul.f32 %v930, %v1251
        %v1285 = vmul.f32 %v929, %v1256
        %v1286 = vmul.f32 %v928, %v1261
        %v1287 = vmul.f32 %v927, %v1266
        %v1288 = vmul.f32 %v926, %v1271
        %v1289 = vmul.f32 %v925, %v1276
        %v1290 = vmul.f32 %v932, %v1281
        %s1291 = scalar_lea.vmem %s4, 448
        %v1292 = vld [vmem:[%s1291] sm:$0xff]
        %v1293 = vld [vmem:[%s1291 + $0x8] sm:$0xff]
        %v1294 = vld [vmem:[%s1291 + $0x10] sm:$0xff]
        %v1295 = vld [vmem:[%s1291 + $0x18] sm:$0xff]
        %v1296 = vld [vmem:[%s1291 + $0x20] sm:$0xff]
        %v1297 = vld [vmem:[%s1291 + $0x28] sm:$0xff]
        %v1298 = vld [vmem:[%s1291 + $0x30] sm:$0xff]
        %v1299 = vld [vmem:[%s1291 + $0x38] sm:$0xff]
        %1301 = vset.pattern.permute.xlu0 0
        %1302 = vperm.xlu0 %1301, %v1292
        %v1303 = vpop.permute.xlu0 %1302
        %1306 = vset.pattern.permute.xlu0 0
        %1307 = vperm.xlu0 %1306, %v1293
        %v1308 = vpop.permute.xlu0 %1307
        %1311 = vset.pattern.permute.xlu0 0
        %1312 = vperm.xlu0 %1311, %v1294
        %v1313 = vpop.permute.xlu0 %1312
        %1316 = vset.pattern.permute.xlu0 0
        %1317 = vperm.xlu0 %1316, %v1295
        %v1318 = vpop.permute.xlu0 %1317
        %1321 = vset.pattern.permute.xlu0 0
        %1322 = vperm.xlu0 %1321, %v1296
        %v1323 = vpop.permute.xlu0 %1322
        %1326 = vset.pattern.permute.xlu0 0
        %1327 = vperm.xlu0 %1326, %v1297
        %v1328 = vpop.permute.xlu0 %1327
        %1331 = vset.pattern.permute.xlu0 0
        %1332 = vperm.xlu0 %1331, %v1298
        %v1333 = vpop.permute.xlu0 %1332
        %1336 = vset.pattern.permute.xlu0 0
        %1337 = vperm.xlu0 %1336, %v1299
        %v1338 = vpop.permute.xlu0 %1337
        %v1340 = vmul.f32 %v907, %v1303
        %v1341 = vmul.f32 %v908, %v1308
        %v1342 = vmul.f32 %v909, %v1313
        %v1343 = vmul.f32 %v910, %v1318
        %v1344 = vmul.f32 %v911, %v1323
        %v1345 = vmul.f32 %v912, %v1328
        %v1346 = vmul.f32 %v913, %v1333
        %v1347 = vmul.f32 %v906, %v1338
        %s1348 = scalar_lea.vmem %s4, 512
        %v1349 = vld [vmem:[%s1348] sm:$0xff]
        %v1350 = vld [vmem:[%s1348 + $0x8] sm:$0xff]
        %v1351 = vld [vmem:[%s1348 + $0x10] sm:$0xff]
        %v1352 = vld [vmem:[%s1348 + $0x18] sm:$0xff]
        %v1353 = vld [vmem:[%s1348 + $0x20] sm:$0xff]
        %v1354 = vld [vmem:[%s1348 + $0x28] sm:$0xff]
        %v1355 = vld [vmem:[%s1348 + $0x30] sm:$0xff]
        %v1356 = vld [vmem:[%s1348 + $0x38] sm:$0xff]
        %1358 = vset.pattern.permute.xlu0 0
        %1359 = vperm.xlu0 %1358, %v1349
        %v1360 = vpop.permute.xlu0 %1359
        %1363 = vset.pattern.permute.xlu0 0
        %1364 = vperm.xlu0 %1363, %v1350
        %v1365 = vpop.permute.xlu0 %1364
        %1368 = vset.pattern.permute.xlu0 0
        %1369 = vperm.xlu0 %1368, %v1351
        %v1370 = vpop.permute.xlu0 %1369
        %1373 = vset.pattern.permute.xlu0 0
        %1374 = vperm.xlu0 %1373, %v1352
        %v1375 = vpop.permute.xlu0 %1374
        %1378 = vset.pattern.permute.xlu0 0
        %1379 = vperm.xlu0 %1378, %v1353
        %v1380 = vpop.permute.xlu0 %1379
        %1383 = vset.pattern.permute.xlu0 0
        %1384 = vperm.xlu0 %1383, %v1354
        %v1385 = vpop.permute.xlu0 %1384
        %1388 = vset.pattern.permute.xlu0 0
        %1389 = vperm.xlu0 %1388, %v1355
        %v1390 = vpop.permute.xlu0 %1389
        %1393 = vset.pattern.permute.xlu0 0
        %1394 = vperm.xlu0 %1393, %v1356
        %v1395 = vpop.permute.xlu0 %1394
        %v1397 = vmul.f32 %v1060, %v1360
        %v1398 = vmul.f32 %v1059, %v1365
        %v1399 = vmul.f32 %v1058, %v1370
        %v1400 = vmul.f32 %v1057, %v1375
        %v1401 = vmul.f32 %v1056, %v1380
        %v1402 = vmul.f32 %v1055, %v1385
        %v1403 = vmul.f32 %v1062, %v1390
        %v1404 = vmul.f32 %v1061, %v1395
        %1413 = vrot.lane.b32.xlu0 %v1038, 32
        %v1414 = vpop.permute.xlu0 %1413
        %1415 = vrot.lane.b32.xlu0 %v1039, 32
        %v1416 = vpop.permute.xlu0 %1415
        %1417 = vrot.lane.b32.xlu0 %v1040, 32
        %v1418 = vpop.permute.xlu0 %1417
        %1419 = vrot.lane.b32.xlu0 %v1041, 32
        %v1420 = vpop.permute.xlu0 %1419
        %1421 = vrot.lane.b32.xlu0 %v1042, 32
        %v1422 = vpop.permute.xlu0 %1421
        %1423 = vrot.lane.b32.xlu0 %v1043, 32
        %v1424 = vpop.permute.xlu0 %1423
        %1425 = vrot.lane.b32.xlu0 %v1044, 32
        %v1426 = vpop.permute.xlu0 %1425
        %1427 = vrot.lane.b32.xlu0 %v1045, 32
        %v1428 = vpop.permute.xlu0 %1427
        %1445 = vrot.lane.b32.xlu0 %v1112, 64
        %v1446 = vpop.permute.xlu0 %1445
        %1447 = vrot.lane.b32.xlu0 %v1113, 64
        %v1448 = vpop.permute.xlu0 %1447
        %1449 = vrot.lane.b32.xlu0 %v1114, 64
        %v1450 = vpop.permute.xlu0 %1449
        %1451 = vrot.lane.b32.xlu0 %v1115, 64
        %v1452 = vpop.permute.xlu0 %1451
        %1453 = vrot.lane.b32.xlu0 %v1116, 64
        %v1454 = vpop.permute.xlu0 %1453
        %1455 = vrot.lane.b32.xlu0 %v1117, 64
        %v1456 = vpop.permute.xlu0 %1455
        %1457 = vrot.lane.b32.xlu0 %v1118, 64
        %v1458 = vpop.permute.xlu0 %1457
        %1459 = vrot.lane.b32.xlu0 %v1119, 64
        %v1460 = vpop.permute.xlu0 %1459
        %1477 = vrot.lane.b32.xlu0 %v1169, 96
        %v1478 = vpop.permute.xlu0 %1477
        %1479 = vrot.lane.b32.xlu0 %v1170, 96
        %v1480 = vpop.permute.xlu0 %1479
        %1481 = vrot.lane.b32.xlu0 %v1171, 96
        %v1482 = vpop.permute.xlu0 %1481
        %1483 = vrot.lane.b32.xlu0 %v1172, 96
        %v1484 = vpop.permute.xlu0 %1483
        %1485 = vrot.lane.b32.xlu0 %v1173, 96
        %v1486 = vpop.permute.xlu0 %1485
        %1487 = vrot.lane.b32.xlu0 %v1174, 96
        %v1488 = vpop.permute.xlu0 %1487
        %1489 = vrot.lane.b32.xlu0 %v1175, 96
        %v1490 = vpop.permute.xlu0 %1489
        %1491 = vrot.lane.b32.xlu0 %v1176, 96
        %v1492 = vpop.permute.xlu0 %1491
        %1509 = vrot.lane.b32.xlu0 %v1226, 32
        %v1510 = vpop.permute.xlu0 %1509
        %1511 = vrot.lane.b32.xlu0 %v1227, 32
        %v1512 = vpop.permute.xlu0 %1511
        %1513 = vrot.lane.b32.xlu0 %v1228, 32
        %v1514 = vpop.permute.xlu0 %1513
        %1515 = vrot.lane.b32.xlu0 %v1229, 32
        %v1516 = vpop.permute.xlu0 %1515
        %1517 = vrot.lane.b32.xlu0 %v1230, 32
        %v1518 = vpop.permute.xlu0 %1517
        %1519 = vrot.lane.b32.xlu0 %v1231, 32
        %v1520 = vpop.permute.xlu0 %1519
        %1521 = vrot.lane.b32.xlu0 %v1232, 32
        %v1522 = vpop.permute.xlu0 %1521
        %1523 = vrot.lane.b32.xlu0 %v1233, 32
        %v1524 = vpop.permute.xlu0 %1523
        %1541 = vrot.lane.b32.xlu0 %v1283, 64
        %v1542 = vpop.permute.xlu0 %1541
        %1543 = vrot.lane.b32.xlu0 %v1284, 64
        %v1544 = vpop.permute.xlu0 %1543
        %1545 = vrot.lane.b32.xlu0 %v1285, 64
        %v1546 = vpop.permute.xlu0 %1545
        %1547 = vrot.lane.b32.xlu0 %v1286, 64
        %v1548 = vpop.permute.xlu0 %1547
        %1549 = vrot.lane.b32.xlu0 %v1287, 64
        %v1550 = vpop.permute.xlu0 %1549
        %1551 = vrot.lane.b32.xlu0 %v1288, 64
        %v1552 = vpop.permute.xlu0 %1551
        %1553 = vrot.lane.b32.xlu0 %v1289, 64
        %v1554 = vpop.permute.xlu0 %1553
        %1555 = vrot.lane.b32.xlu0 %v1290, 64
        %v1556 = vpop.permute.xlu0 %1555
        %1573 = vrot.lane.b32.xlu0 %v1340, 96
        %v1574 = vpop.permute.xlu0 %1573
        %1575 = vrot.lane.b32.xlu0 %v1341, 96
        %v1576 = vpop.permute.xlu0 %1575
        %1577 = vrot.lane.b32.xlu0 %v1342, 96
        %v1578 = vpop.permute.xlu0 %1577
        %1579 = vrot.lane.b32.xlu0 %v1343, 96
        %v1580 = vpop.permute.xlu0 %1579
        %1581 = vrot.lane.b32.xlu0 %v1344, 96
        %v1582 = vpop.permute.xlu0 %1581
        %1583 = vrot.lane.b32.xlu0 %v1345, 96
        %v1584 = vpop.permute.xlu0 %1583
        %1585 = vrot.lane.b32.xlu0 %v1346, 96
        %v1586 = vpop.permute.xlu0 %1585
        %1587 = vrot.lane.b32.xlu0 %v1347, 96
        %v1588 = vpop.permute.xlu0 %1587
        %v1597 = vsel %vm577, %v981, %v1414
        %v1598 = vsel %vm577, %v982, %v1416
        %v1599 = vsel %vm577, %v983, %v1418
        %v1600 = vsel %vm577, %v984, %v1420
        %v1601 = vsel %vm577, %v985, %v1422
        %v1602 = vsel %vm577, %v986, %v1424
        %v1603 = vsel %vm577, %v987, %v1426
        %v1604 = vsel %vm577, %v988, %v1428
        %v1605 = vsel %vm588, %v1597, %v1446
        %v1606 = vsel %vm588, %v1598, %v1448
        %v1607 = vsel %vm588, %v1599, %v1450
        %v1608 = vsel %vm588, %v1600, %v1452
        %v1609 = vsel %vm588, %v1601, %v1454
        %v1610 = vsel %vm588, %v1602, %v1456
        %v1611 = vsel %vm588, %v1603, %v1458
        %v1612 = vsel %vm588, %v1604, %v1460
        %vm1613 = vcmask 785408
        %v1614 = vsel %vm1613, %v1605, %v1478
        %v1615 = vsel %vm1613, %v1606, %v1480
        %v1616 = vsel %vm1613, %v1607, %v1482
        %v1617 = vsel %vm1613, %v1608, %v1484
        %v1618 = vsel %vm1613, %v1609, %v1486
        %v1619 = vsel %vm1613, %v1610, %v1488
        %v1620 = vsel %vm1613, %v1611, %v1490
        %v1621 = vsel %vm1613, %v1612, %v1492
        %v1622 = vsel %vm577, %v906, %v1510
        %v1623 = vsel %vm577, %v907, %v1512
        %v1624 = vsel %vm577, %v908, %v1514
        %v1625 = vsel %vm577, %v909, %v1516
        %v1626 = vsel %vm577, %v910, %v1518
        %v1627 = vsel %vm577, %v911, %v1520
        %v1628 = vsel %vm577, %v912, %v1522
        %v1629 = vsel %vm577, %v913, %v1524
        %v1630 = vsel %vm588, %v1622, %v1542
        %v1631 = vsel %vm588, %v1623, %v1544
        %v1632 = vsel %vm588, %v1624, %v1546
        %v1633 = vsel %vm588, %v1625, %v1548
        %v1634 = vsel %vm588, %v1626, %v1550
        %v1635 = vsel %vm588, %v1627, %v1552
        %v1636 = vsel %vm588, %v1628, %v1554
        %v1637 = vsel %vm588, %v1629, %v1556
        %v1638 = vsel %vm1613, %v1630, %v1574
        %v1639 = vsel %vm1613, %v1631, %v1576
        %v1640 = vsel %vm1613, %v1632, %v1578
        %v1641 = vsel %vm1613, %v1633, %v1580
        %v1642 = vsel %vm1613, %v1634, %v1582
        %v1643 = vsel %vm1613, %v1635, %v1584
        %v1644 = vsel %vm1613, %v1636, %v1586
        %v1645 = vsel %vm1613, %v1637, %v1588
        %v1646 = vpack.c.bf16 %v1615, %v1614
        %v1647 = vpack.c.bf16 %v1639, %v1638
        %v1648 = vpack.c.bf16 %v1398, %v1397
        %v1649 = vpack.c.bf16 %v1617, %v1616
        %v1650 = vpack.c.bf16 %v1641, %v1640
        %v1651 = vpack.c.bf16 %v1400, %v1399
        %v1652 = vpack.c.bf16 %v1619, %v1618
        %v1653 = vpack.c.bf16 %v1643, %v1642
        %v1654 = vpack.c.bf16 %v1402, %v1401
        %v1655 = vpack.c.bf16 %v1621, %v1620
        %v1656 = vpack.c.bf16 %v1645, %v1644
        %v1657 = vpack.c.bf16 %v1404, %v1403
        %v1658 = vld [vmem:[%s8] sm:$0xf]
        %v1659 = vld [vmem:[%s8 + $0x4] sm:$0xf]
        %v1660 = vld [vmem:[%s8 + $0x8] sm:$0xf]
        %v1661 = vld [vmem:[%s8 + $0xc] sm:$0xf]
        %v1662 = vld [vmem:[%s8 + $0x10] sm:$0xf]
        %v1663 = vld [vmem:[%s8 + $0x14] sm:$0xf]
        %v1664 = vld [vmem:[%s8 + $0x18] sm:$0xf]
        %v1665 = vld [vmem:[%s8 + $0x1c] sm:$0xf]
        %v1666 = vld [vmem:[%s8 + $0x20] sm:$0xf]
        %v1667 = vld [vmem:[%s8 + $0x24] sm:$0xf]
        %v1668 = vld [vmem:[%s8 + $0x28] sm:$0xf]
        %v1669 = vld [vmem:[%s8 + $0x2c] sm:$0xf]
        %v1670 = vld [vmem:[%s8 + $0x30] sm:$0xf]
        %v1671 = vld [vmem:[%s8 + $0x34] sm:$0xf]
        %v1672 = vld [vmem:[%s8 + $0x38] sm:$0xf]
        %v1673 = vld [vmem:[%s8 + $0x3c] sm:$0xf]
        %v1674 = vld [vmem:[%s8 + $0x40] sm:$0xf]
        %v1675 = vld [vmem:[%s8 + $0x44] sm:$0xf]
        %v1676 = vld [vmem:[%s8 + $0x48] sm:$0xf]
        %v1677 = vld [vmem:[%s8 + $0x4c] sm:$0xf]
        %v1678 = vld [vmem:[%s8 + $0x50] sm:$0xf]
        %v1679 = vld [vmem:[%s8 + $0x54] sm:$0xf]
        %v1680 = vld [vmem:[%s8 + $0x58] sm:$0xf]
        %v1681 = vld [vmem:[%s8 + $0x5c] sm:$0xf]
        %v1682 = vld [vmem:[%s8 + $0x60] sm:$0xf]
        %v1683 = vld [vmem:[%s8 + $0x64] sm:$0xf]
        %v1684 = vld [vmem:[%s8 + $0x68] sm:$0xf]
        %v1685 = vld [vmem:[%s8 + $0x6c] sm:$0xf]
        %v1686 = vld [vmem:[%s8 + $0x70] sm:$0xf]
        %v1687 = vld [vmem:[%s8 + $0x74] sm:$0xf]
        %v1688 = vld [vmem:[%s8 + $0x78] sm:$0xf]
        %v1689 = vld [vmem:[%s8 + $0x7c] sm:$0xf]
        %v1690 = vld [vmem:[%s8 + $0x80] sm:$0xf]
        %v1691 = vld [vmem:[%s8 + $0x84] sm:$0xf]
        %v1692 = vld [vmem:[%s8 + $0x88] sm:$0xf]
        %v1693 = vld [vmem:[%s8 + $0x8c] sm:$0xf]
        %v1694 = vld [vmem:[%s9] sm:$0x1]
        %v1696 = vlaneseq
        %v1697 = vshrl.u32 %v1696, 7
        %v1698 = vsub.s32 0, %v1697
        %v1699 = vrot.slane %v1694, %v1698
        %v1737 = vunpack.c.l.b16 %v1658
        %v1738 = vunpack.c.l.b16 %v1659
        %v1739 = vunpack.c.l.b16 %v1660
        %v1740 = vunpack.c.l.b16 %v1661
        %v1741 = vunpack.c.l.b16 %v1662
        %v1742 = vunpack.c.l.b16 %v1663
        %v1743 = vunpack.c.l.b16 %v1664
        %v1744 = vunpack.c.l.b16 %v1665
        %v1745 = vunpack.c.l.b16 %v1666
        %v1746 = vunpack.c.l.b16 %v1667
        %v1747 = vunpack.c.l.b16 %v1668
        %v1748 = vunpack.c.l.b16 %v1669
        %v1749 = vunpack.c.l.b16 %v1670
        %v1750 = vunpack.c.l.b16 %v1671
        %v1751 = vunpack.c.l.b16 %v1672
        %v1752 = vunpack.c.l.b16 %v1673
        %v1753 = vunpack.c.l.b16 %v1674
        %v1754 = vunpack.c.l.b16 %v1675
        %v1755 = vunpack.c.l.b16 %v1676
        %v1756 = vunpack.c.l.b16 %v1677
        %v1757 = vunpack.c.l.b16 %v1678
        %v1758 = vunpack.c.l.b16 %v1679
        %v1759 = vunpack.c.l.b16 %v1680
        %v1760 = vunpack.c.l.b16 %v1681
        %v1761 = vunpack.c.l.b16 %v1682
        %v1762 = vunpack.c.l.b16 %v1683
        %v1763 = vunpack.c.l.b16 %v1684
        %v1764 = vunpack.c.l.b16 %v1685
        %v1765 = vunpack.c.l.b16 %v1686
        %v1766 = vunpack.c.l.b16 %v1687
        %v1767 = vunpack.c.l.b16 %v1688
        %v1768 = vunpack.c.l.b16 %v1689
        %v1769 = vunpack.c.l.b16 %v1690
        %v1770 = vunpack.c.l.b16 %v1691
        %v1771 = vunpack.c.l.b16 %v1692
        %v1772 = vunpack.c.l.b16 %v1693
        %v1773 = vpack.c.b16 %v1738, %v1737
        %v1774 = vpack.c.b16 %v1740, %v1739
        %v1775 = vpack.c.b16 %v1742, %v1741
        %v1776 = vpack.c.b16 %v1744, %v1743
        %v1777 = vpack.c.b16 %v1746, %v1745
        %v1778 = vpack.c.b16 %v1748, %v1747
        %v1779 = vpack.c.b16 %v1750, %v1749
        %v1780 = vpack.c.b16 %v1752, %v1751
        %v1781 = vpack.c.b16 %v1754, %v1753
        %v1782 = vpack.c.b16 %v1756, %v1755
        %v1783 = vpack.c.b16 %v1758, %v1757
        %v1784 = vpack.c.b16 %v1760, %v1759
        %v1785 = vpack.c.b16 %v1762, %v1761
        %v1786 = vpack.c.b16 %v1764, %v1763
        %v1787 = vpack.c.b16 %v1766, %v1765
        %v1788 = vpack.c.b16 %v1768, %v1767
        %v1789 = vpack.c.b16 %v1770, %v1769
        %v1790 = vpack.c.b16 %v1772, %v1771
        %v1810 = vsel %vm577, %v1648, 0
        %v1813 = vsel %vm577, %v1651, 0
        %v1816 = vsel %vm577, %v1654, 0
        %v1819 = vsel %vm577, %v1657, 0
        %1821 = vmatprep.subr.bf16.mxu0 0
        %1822 = vmatpush1.bf16.msra.mxu0 %v1780
        %1823 = vmatprep.subr.bf16.mxu0 0
        %1824 = vmatpush1.bf16.msra.mxu0 %v1779
        %1825 = vmatprep.subr.bf16.mxu0 0
        %1826 = vmatpush1.bf16.msra.mxu0 %v1778
        %1827 = vmatprep.subr.bf16.mxu0 0
        %1828 = vmatpush1.bf16.msra.mxu0 %v1777
        %1829 = vmatprep.subr.bf16.mxu0 0
        %1830 = vmatpush1.bf16.msra.mxu0 %v1776
        %1831 = vmatprep.subr.bf16.mxu0 0
        %1832 = vmatpush1.bf16.msra.mxu0 %v1775
        %1833 = vmatprep.subr.bf16.mxu0 0
        %1834 = vmatpush1.bf16.msra.mxu0 %v1774
        %1835 = vmatprep.subr.bf16.mxu0 0
        %1836 = vmatpush1.bf16.msra.mxu0 %v1773
        %1837 = vmatprep.subr.bf16.mxu0 0
        %1838 = vmatpush2.bf16.msra.mxu0 %v1788
        %1839 = vmatprep.subr.bf16.mxu0 0
        %1840 = vmatpush2.bf16.msra.mxu0 %v1787
        %1841 = vmatprep.subr.bf16.mxu0 0
        %1842 = vmatpush2.bf16.msra.mxu0 %v1786
        %1843 = vmatprep.subr.bf16.mxu0 0
        %1844 = vmatpush2.bf16.msra.mxu0 %v1785
        %1845 = vmatprep.subr.bf16.mxu0 0
        %1846 = vmatpush2.bf16.msra.mxu0 %v1784
        %1847 = vmatprep.subr.bf16.mxu0 0
        %1848 = vmatpush2.bf16.msra.mxu0 %v1783
        %1849 = vmatprep.subr.bf16.mxu0 0
        %1850 = vmatpush2.bf16.msra.mxu0 %v1782
        %1851 = vmatprep.subr.bf16.mxu0 0
        %1852 = vmatpush2.bf16.msra.mxu0 %v1781
        %1853 = vmatprep.mubr.bf16.mxu0 %v1647
        %1854 = vmatmul.mubr.bf16.gmra.mxu0 %v1646
        %v1855 = vpop.f32.mrf.mxu0
        %v1856 = vadd.f32 %v1699, %v1855
        %v1857 = vpop.f32.mrf.mxu0
        %v1858 = vpop.f32.mrf.mxu0
        %v1859 = vadd.f32 %v1699, %v1858
        %v1860 = vpop.f32.mrf.mxu0
        %1861 = vmatprep.mubr.bf16.mxu0 %v1650
        %1862 = vmatmul.mubr.bf16.gmra.mxu0 %v1649
        %v1863 = vpop.f32.mrf.mxu0
        %v1864 = vadd.f32 %v1699, %v1863
        %v1865 = vpop.f32.mrf.mxu0
        %v1866 = vpop.f32.mrf.mxu0
        %v1867 = vadd.f32 %v1699, %v1866
        %v1868 = vpop.f32.mrf.mxu0
        %1869 = vmatprep.mubr.bf16.mxu0 %v1653
        %1870 = vmatmul.mubr.bf16.gmra.mxu0 %v1652
        %v1871 = vpop.f32.mrf.mxu0
        %v1872 = vadd.f32 %v1699, %v1871
        %v1873 = vpop.f32.mrf.mxu0
        %v1874 = vpop.f32.mrf.mxu0
        %v1875 = vadd.f32 %v1699, %v1874
        %v1876 = vpop.f32.mrf.mxu0
        %1877 = vmatprep.mubr.bf16.mxu0 %v1656
        %1878 = vmatmul.mubr.bf16.gmra.mxu0 %v1655
        %v1879 = vpop.f32.mrf.mxu0
        %v1880 = vadd.f32 %v1699, %v1879
        %v1881 = vpop.f32.mrf.mxu0
        %v1882 = vpop.f32.mrf.mxu0
        %v1883 = vadd.f32 %v1699, %v1882
        %v1884 = vpop.f32.mrf.mxu0
        %1885 = vdwg.mxu0
        %1886 = vmatprep.subr.bf16.mxu0 0
        %1887 = vmatpush1.bf16.msra.mxu0 0
        %1888 = vmatprep.subr.bf16.mxu0 0
        %1889 = vmatpush1.bf16.msra.mxu0 0
        %1890 = vmatprep.subr.bf16.mxu0 0
        %1891 = vmatpush1.bf16.msra.mxu0 0
        %1892 = vmatprep.subr.bf16.mxu0 0
        %1893 = vmatpush1.bf16.msra.mxu0 0
        %1894 = vmatprep.subr.bf16.mxu0 0
        %1895 = vmatpush1.bf16.msra.mxu0 0
        %1896 = vmatprep.subr.bf16.mxu0 0
        %1897 = vmatpush1.bf16.msra.mxu0 0
        %1898 = vmatprep.subr.bf16.mxu0 0
        %1899 = vmatpush1.bf16.msra.mxu0 %v1790
        %1900 = vmatprep.subr.bf16.mxu0 0
        %1901 = vmatpush1.bf16.msra.mxu0 %v1789
        %1902 = vmatprep.subr.bf16.mxu0 0
        %1903 = vmatpush2.bf16.msra.mxu0 0
        %1904 = vmatprep.subr.bf16.mxu0 0
        %1905 = vmatpush2.bf16.msra.mxu0 0
        %1906 = vmatprep.subr.bf16.mxu0 0
        %1907 = vmatpush2.bf16.msra.mxu0 0
        %1908 = vmatprep.subr.bf16.mxu0 0
        %1909 = vmatpush2.bf16.msra.mxu0 0
        %1910 = vmatprep.subr.bf16.mxu0 0
        %1911 = vmatpush2.bf16.msra.mxu0 0
        %1912 = vmatprep.subr.bf16.mxu0 0
        %1913 = vmatpush2.bf16.msra.mxu0 0
        %1914 = vmatprep.subr.bf16.mxu0 0
        %1915 = vmatpush2.bf16.msra.mxu0 0
        %1916 = vmatprep.subr.bf16.mxu0 0
        %1917 = vmatpush2.bf16.msra.mxu0 0
        %1918 = vmatprep.mubr.bf16.mxu0 0
        %1919 = vmatmul.mubr.bf16.gmra.mxu0 %v1810
        %v1920 = vpop.f32.mrf.mxu0
        %v1921 = vadd.f32 %v1856, %v1920
        %v1922 = vpop.f32.mrf.mxu0
        %v1923 = vpop.f32.mrf.mxu0
        %v1924 = vadd.f32 %v1859, %v1923
        %v1925 = vpop.f32.mrf.mxu0
        %1926 = vmatprep.mubr.bf16.mxu0 0
        %1927 = vmatmul.mubr.bf16.gmra.mxu0 %v1813
        %v1928 = vpop.f32.mrf.mxu0
        %v1929 = vadd.f32 %v1864, %v1928
        %v1930 = vpop.f32.mrf.mxu0
        %v1931 = vpop.f32.mrf.mxu0
        %v1932 = vadd.f32 %v1867, %v1931
        %v1933 = vpop.f32.mrf.mxu0
        %1934 = vmatprep.mubr.bf16.mxu0 0
        %1935 = vmatmul.mubr.bf16.gmra.mxu0 %v1816
        %v1936 = vpop.f32.mrf.mxu0
        %v1937 = vadd.f32 %v1872, %v1936
        %v1938 = vpop.f32.mrf.mxu0
        %v1939 = vpop.f32.mrf.mxu0
        %v1940 = vadd.f32 %v1875, %v1939
        %v1941 = vpop.f32.mrf.mxu0
        %1942 = vmatprep.mubr.bf16.mxu0 0
        %1943 = vmatmul.mubr.bf16.gmra.mxu0 %v1819
        %v1944 = vpop.f32.mrf.mxu0
        %v1945 = vadd.f32 %v1880, %v1944
        %v1946 = vpop.f32.mrf.mxu0
        %v1947 = vpop.f32.mrf.mxu0
        %v1948 = vadd.f32 %v1883, %v1947
        %v1949 = vpop.f32.mrf.mxu0
        %1950 = vdwg.mxu0
        %v1951 = vlaneseq
        %v1952 = vshrl.u32 %v1951, 7
        %v1953 = vsub.s32 0, %v1952
        %v1954 = vrot.slane %v659, %v1953
        %v1955 = vadd.f32 %v1921, %v1954
        %v1956 = vadd.f32 %v1924, %v1954
        %v1957 = vadd.f32 %v1929, %v1954
        %v1958 = vadd.f32 %v1932, %v1954
        %v1959 = vadd.f32 %v1937, %v1954
        %v1960 = vadd.f32 %v1940, %v1954
        %v1961 = vadd.f32 %v1945, %v1954
        %v1962 = vadd.f32 %v1948, %v1954
        %s1963 = scalar_lea.vmem %s7, 2
        %v1964 = vld [vmem:[%s1963] sm:$0x1]
        %s1965 = scalar_lea.vmem %s7, 3
        %v1966 = vld [vmem:[%s1965] sm:$0x1]
        %v1967 = vsel %vm577, %v1955, 0.0
        %v1968 = vsel %vm577, %v1956, 0.0
        %v1969 = vadd.f32 %v1967, %v1968
        %v1970 = vsel %vm577, %v1957, 0.0
        %v1971 = vadd.f32 %v1969, %v1970
        %v1972 = vsel %vm577, %v1958, 0.0
        %v1973 = vadd.f32 %v1971, %v1972
        %v1974 = vsel %vm577, %v1959, 0.0
        %v1975 = vadd.f32 %v1973, %v1974
        %v1976 = vsel %vm577, %v1960, 0.0
        %v1977 = vadd.f32 %v1975, %v1976
        %v1978 = vsel %vm577, %v1961, 0.0
        %v1979 = vadd.f32 %v1977, %v1978
        %v1980 = vsel %vm577, %v1962, 0.0
        %v1981 = vadd.f32 %v1979, %v1980
        %v1982 = vrot.slane %v1981, 4
        %v1983 = vadd.f32 %v1981, %v1982
        %v1984 = vrot.slane %v1983, 2
        %v1985 = vadd.f32 %v1983, %v1984
        %v1986 = vrot.slane %v1985, 1
        %v1987 = vadd.f32 %v1985, %v1986
        %v1988 = vmul.f32 %v1955, %v1955
        %v1989 = vmul.f32 %v1956, %v1956
        %v1990 = vmul.f32 %v1957, %v1957
        %v1991 = vmul.f32 %v1958, %v1958
        %v1992 = vmul.f32 %v1959, %v1959
        %v1993 = vmul.f32 %v1960, %v1960
        %v1994 = vmul.f32 %v1961, %v1961
        %v1995 = vmul.f32 %v1962, %v1962
        %v1996 = vsel %vm577, %v1988, 0.0
        %v1997 = vsel %vm577, %v1989, 0.0
        %v1998 = vadd.f32 %v1996, %v1997
        %v1999 = vsel %vm577, %v1990, 0.0
        %v2000 = vadd.f32 %v1998, %v1999
        %v2001 = vsel %vm577, %v1991, 0.0
        %v2002 = vadd.f32 %v2000, %v2001
        %v2003 = vsel %vm577, %v1992, 0.0
        %v2004 = vadd.f32 %v2002, %v2003
        %v2005 = vsel %vm577, %v1993, 0.0
        %v2006 = vadd.f32 %v2004, %v2005
        %v2007 = vsel %vm577, %v1994, 0.0
        %v2008 = vadd.f32 %v2006, %v2007
        %v2009 = vsel %vm577, %v1995, 0.0
        %v2010 = vadd.f32 %v2008, %v2009
        %v2011 = vrot.slane %v2010, 4
        %v2012 = vadd.f32 %v2010, %v2011
        %v2013 = vrot.slane %v2012, 2
        %v2014 = vadd.f32 %v2012, %v2013
        %v2015 = vrot.slane %v2014, 1
        %v2016 = vadd.f32 %v2014, %v2015
        %v2017 = vsel %vm723, %v1987, %v2016
        %v2019 = vsel %vm577, %v2017, 0
        %2021 = vmatprep.subr.mxu0 0.0
        %2022 = vmatpush1.msra.mxu0 0.0
        %2023 = vmatprep.subr.mxu0 0.0
        %2024 = vmatpush1.msra.mxu0 0.0
        %2025 = vmatprep.subr.mxu0 0.0
        %2026 = vmatpush1.msra.mxu0 0.0
        %2027 = vmatprep.subr.mxu0 0.0
        %2028 = vmatpush1.msra.mxu0 0.0
        %2029 = vmatprep.subr.mxu0 0.0
        %2030 = vmatpush1.msra.mxu0 0.0
        %2031 = vmatprep.subr.mxu0 0.0
        %2032 = vmatpush1.msra.mxu0 0.0
        %2033 = vmatprep.subr.mxu0 0.0
        %2034 = vmatpush1.msra.mxu0 0.0
        %2035 = vmatprep.subr.mxu0 0.0
        %2036 = vmatpush1.msra.mxu0 0.0
        %2037 = vmatprep.subr.mxu0 0.0
        %2038 = vmatpush1.msra.mxu0 0.0
        %2039 = vmatprep.subr.mxu0 0.0
        %2040 = vmatpush1.msra.mxu0 0.0
        %2041 = vmatprep.subr.mxu0 0.0
        %2042 = vmatpush1.msra.mxu0 0.0
        %2043 = vmatprep.subr.mxu0 0.0
        %2044 = vmatpush1.msra.mxu0 0.0
        %2045 = vmatprep.subr.mxu0 0.0
        %2046 = vmatpush1.msra.mxu0 %v552
        %2047 = vmatprep.subr.mxu0 0.0
        %2048 = vmatpush1.msra.mxu0 %v551
        %2049 = vmatprep.subr.mxu0 0.0
        %2050 = vmatpush1.msra.mxu0 %v550
        %2051 = vmatprep.subr.mxu0 0.0
        %2052 = vmatpush1.msra.mxu0 %v549
        %2053 = vmatprep.subr.mxu0 0.0
        %2054 = vmatpush2.msra.mxu0 0.0
        %2055 = vmatprep.subr.mxu0 0.0
        %2056 = vmatpush2.msra.mxu0 0.0
        %2057 = vmatprep.subr.mxu0 0.0
        %2058 = vmatpush2.msra.mxu0 0.0
        %2059 = vmatprep.subr.mxu0 0.0
        %2060 = vmatpush2.msra.mxu0 0.0
        %2061 = vmatprep.subr.mxu0 0.0
        %2062 = vmatpush2.msra.mxu0 0.0
        %2063 = vmatprep.subr.mxu0 0.0
        %2064 = vmatpush2.msra.mxu0 0.0
        %2065 = vmatprep.subr.mxu0 0.0
        %2066 = vmatpush2.msra.mxu0 0.0
        %2067 = vmatprep.subr.mxu0 0.0
        %2068 = vmatpush2.msra.mxu0 0.0
        %2069 = vmatprep.subr.mxu0 0.0
        %2070 = vmatpush2.msra.mxu0 0.0
        %2071 = vmatprep.subr.mxu0 0.0
        %2072 = vmatpush2.msra.mxu0 0.0
        %2073 = vmatprep.subr.mxu0 0.0
        %2074 = vmatpush2.msra.mxu0 0.0
        %2075 = vmatprep.subr.mxu0 0.0
        %2076 = vmatpush2.msra.mxu0 0.0
        %2077 = vmatprep.subr.mxu0 0.0
        %2078 = vmatpush2.msra.mxu0 0.0
        %2079 = vmatprep.subr.mxu0 0.0
        %2080 = vmatpush2.msra.mxu0 0.0
        %2081 = vmatprep.subr.mxu0 0.0
        %2082 = vmatpush2.msra.mxu0 0.0
        %2083 = vmatprep.subr.mxu0 0.0
        %2084 = vmatpush2.msra.mxu0 0.0
        %2085 = vmatprep.mubr.f32.mxu0 0.0
        %2086 = vmatmul.mubr.f32.gmra.mxu0 %v2019
        %v2087 = vpop.f32.mrf.mxu0
        %v2088 = vadd.f32 0.0, %v2087
        %v2089 = vpop.f32.mrf.mxu0
        %2090 = vdwg.mxu0
        %v2091 = vmul.f32 %v2088, %v2088
        %v2093 = vrot.slane %v2091, 7
        %v2095 = vsub.f32 %v2088, %v2093
        %v2096 = vmax.f32 %v2095, 0.0
        %v2097 = vlaneseq
        %v2098 = vshrl.u32 %v2097, 7
        %v2099 = vsub.s32 0, %v2098
        %v2100 = vrot.slane %v2088, %v2099
        %v2101 = vsub.f32 %v1955, %v2100
        %v2102 = vsub.f32 %v1956, %v2100
        %v2103 = vsub.f32 %v1957, %v2100
        %v2104 = vsub.f32 %v1958, %v2100
        %v2105 = vsub.f32 %v1959, %v2100
        %v2106 = vsub.f32 %v1960, %v2100
        %v2107 = vsub.f32 %v1961, %v2100
        %v2108 = vsub.f32 %v1962, %v2100
        %v2109 = vadd.f32 %v2096, 1e-06
        %v2110 = vrsqrt.pop %v2109
        %v2111 = vlaneseq
        %v2112 = vshrl.u32 %v2111, 7
        %v2113 = vsub.s32 1, %v2112
        %v2114 = vrot.slane %v2110, %v2113
        %v2115 = vmul.f32 %v2101, %v2114
        %v2116 = vmul.f32 %v2102, %v2114
        %v2117 = vmul.f32 %v2103, %v2114
        %v2118 = vmul.f32 %v2104, %v2114
        %v2119 = vmul.f32 %v2105, %v2114
        %v2120 = vmul.f32 %v2106, %v2114
        %v2121 = vmul.f32 %v2107, %v2114
        %v2122 = vmul.f32 %v2108, %v2114
        %v2124 = vlaneseq
        %v2125 = vshrl.u32 %v2124, 7
        %v2126 = vsub.s32 0, %v2125
        %v2127 = vrot.slane %v1964, %v2126
        %v2129 = vmul.f32 %v2115, %v2127
        %v2130 = vmul.f32 %v2116, %v2127
        %v2131 = vmul.f32 %v2117, %v2127
        %v2132 = vmul.f32 %v2118, %v2127
        %v2133 = vmul.f32 %v2119, %v2127
        %v2134 = vmul.f32 %v2120, %v2127
        %v2135 = vmul.f32 %v2121, %v2127
        %v2136 = vmul.f32 %v2122, %v2127
        %v2138 = vlaneseq
        %v2139 = vshrl.u32 %v2138, 7
        %v2140 = vsub.s32 0, %v2139
        %v2141 = vrot.slane %v1966, %v2140
        %v2143 = vadd.f32 %v2129, %v2141
        %v2144 = vadd.f32 %v2130, %v2141
        %v2145 = vadd.f32 %v2131, %v2141
        %v2146 = vadd.f32 %v2132, %v2141
        %v2147 = vadd.f32 %v2133, %v2141
        %v2148 = vadd.f32 %v2134, %v2141
        %v2149 = vadd.f32 %v2135, %v2141
        %v2150 = vadd.f32 %v2136, %v2141
        %v2151 = vxor.u32 %v2143, 2147483648
        %v2152 = vxor.u32 %v2144, 2147483648
        %v2153 = vxor.u32 %v2145, 2147483648
        %v2154 = vxor.u32 %v2146, 2147483648
        %v2155 = vxor.u32 %v2147, 2147483648
        %v2156 = vxor.u32 %v2148, 2147483648
        %v2157 = vxor.u32 %v2149, 2147483648
        %v2158 = vxor.u32 %v2150, 2147483648
        %v2159 = vmul.f32 %v2151, 1.442695
        %v2160 = vpow.pop %v2159
        %v2161 = vmul.f32 %v2152, 1.442695
        %v2162 = vpow.pop %v2161
        %v2163 = vmul.f32 %v2153, 1.442695
        %v2164 = vpow.pop %v2163
        %v2165 = vmul.f32 %v2154, 1.442695
        %v2166 = vpow.pop %v2165
        %v2167 = vmul.f32 %v2155, 1.442695
        %v2168 = vpow.pop %v2167
        %v2169 = vmul.f32 %v2156, 1.442695
        %v2170 = vpow.pop %v2169
        %v2171 = vmul.f32 %v2157, 1.442695
        %v2172 = vpow.pop %v2171
        %v2173 = vmul.f32 %v2158, 1.442695
        %v2174 = vpow.pop %v2173
        %v2175 = vadd.f32 %v2160, 1.0
        %v2176 = vadd.f32 %v2162, 1.0
        %v2177 = vadd.f32 %v2164, 1.0
        %v2178 = vadd.f32 %v2166, 1.0
        %v2179 = vadd.f32 %v2168, 1.0
        %v2180 = vadd.f32 %v2170, 1.0
        %v2181 = vadd.f32 %v2172, 1.0
        %v2182 = vadd.f32 %v2174, 1.0
        %v2183 = vrcp.pop %v2175
        %v2184 = vmul.f32 1.0, %v2183
        %v2185 = vrcp.pop %v2176
        %v2186 = vmul.f32 1.0, %v2185
        %v2187 = vrcp.pop %v2177
        %v2188 = vmul.f32 1.0, %v2187
        %v2189 = vrcp.pop %v2178
        %v2190 = vmul.f32 1.0, %v2189
        %v2191 = vrcp.pop %v2179
        %v2192 = vmul.f32 1.0, %v2191
        %v2193 = vrcp.pop %v2180
        %v2194 = vmul.f32 1.0, %v2193
        %v2195 = vrcp.pop %v2181
        %v2196 = vmul.f32 1.0, %v2195
        %v2197 = vrcp.pop %v2182
        %v2198 = vmul.f32 1.0, %v2197
        %v2199 = vmul.f32 %v2143, %v2184
        %v2200 = vmul.f32 %v2144, %v2186
        %v2201 = vmul.f32 %v2145, %v2188
        %v2202 = vmul.f32 %v2146, %v2190
        %v2203 = vmul.f32 %v2147, %v2192
        %v2204 = vmul.f32 %v2148, %v2194
        %v2205 = vmul.f32 %v2149, %v2196
        %v2206 = vmul.f32 %v2150, %v2198
        %v2207 = vrot.slane %v2199, 7
        %v2208 = vrot.slane %v2200, 7
        %v2209 = vrot.slane %v2201, 7
        %v2210 = vrot.slane %v2202, 7
        %v2211 = vrot.slane %v2203, 7
        %v2212 = vrot.slane %v2204, 7
        %v2213 = vrot.slane %v2205, 7
        %v2214 = vrot.slane %v2206, 7
        %v2215 = vsel %vm924, %v2213, %v2214
        %v2216 = vsel %vm924, %v2212, %v2213
        %v2217 = vsel %vm924, %v2211, %v2212
        %v2218 = vsel %vm924, %v2210, %v2211
        %v2219 = vsel %vm924, %v2209, %v2210
        %v2220 = vsel %vm924, %v2208, %v2209
        %v2221 = vsel %vm924, %v2207, %v2208
        %v2222 = vsel %vm924, %v2214, %v2207
        %v2223 = vmul.f32 %v2215, %v944
        %v2224 = vmul.f32 %v2222, %v949
        %v2225 = vmul.f32 %v2221, %v954
        %v2226 = vmul.f32 %v2220, %v959
        %v2227 = vmul.f32 %v2219, %v964
        %v2228 = vmul.f32 %v2218, %v969
        %v2229 = vmul.f32 %v2217, %v974
        %v2230 = vmul.f32 %v2216, %v979
        %v2231 = vmul.f32 %v2206, %v1001
        %v2232 = vmul.f32 %v2199, %v1006
        %v2233 = vmul.f32 %v2200, %v1011
        %v2234 = vmul.f32 %v2201, %v1016
        %v2235 = vmul.f32 %v2202, %v1021
        %v2236 = vmul.f32 %v2203, %v1026
        %v2237 = vmul.f32 %v2204, %v1031
        %v2238 = vmul.f32 %v2205, %v1036
        %v2239 = vrot.slane %v2199, 1
        %v2240 = vrot.slane %v2200, 1
        %v2241 = vrot.slane %v2201, 1
        %v2242 = vrot.slane %v2202, 1
        %v2243 = vrot.slane %v2203, 1
        %v2244 = vrot.slane %v2204, 1
        %v2245 = vrot.slane %v2205, 1
        %v2246 = vrot.slane %v2206, 1
        %v2247 = vsel %vm1054, %v2245, %v2246
        %v2248 = vsel %vm1054, %v2244, %v2245
        %v2249 = vsel %vm1054, %v2243, %v2244
        %v2250 = vsel %vm1054, %v2242, %v2243
        %v2251 = vsel %vm1054, %v2241, %v2242
        %v2252 = vsel %vm1054, %v2240, %v2241
        %v2253 = vsel %vm1054, %v2239, %v2240
        %v2254 = vsel %vm1054, %v2246, %v2239
        %v2255 = vmul.f32 %v2254, %v1075
        %v2256 = vmul.f32 %v2253, %v1080
        %v2257 = vmul.f32 %v2252, %v1085
        %v2258 = vmul.f32 %v2251, %v1090
        %v2259 = vmul.f32 %v2250, %v1095
        %v2260 = vmul.f32 %v2249, %v1100
        %v2261 = vmul.f32 %v2248, %v1105
        %v2262 = vmul.f32 %v2247, %v1110
        %v2263 = vmul.f32 %v2222, %v1132
        %v2264 = vmul.f32 %v2221, %v1137
        %v2265 = vmul.f32 %v2220, %v1142
        %v2266 = vmul.f32 %v2219, %v1147
        %v2267 = vmul.f32 %v2218, %v1152
        %v2268 = vmul.f32 %v2217, %v1157
        %v2269 = vmul.f32 %v2216, %v1162
        %v2270 = vmul.f32 %v2215, %v1167
        %v2271 = vmul.f32 %v2253, %v1189
        %v2272 = vmul.f32 %v2252, %v1194
        %v2273 = vmul.f32 %v2251, %v1199
        %v2274 = vmul.f32 %v2250, %v1204
        %v2275 = vmul.f32 %v2249, %v1209
        %v2276 = vmul.f32 %v2248, %v1214
        %v2277 = vmul.f32 %v2247, %v1219
        %v2278 = vmul.f32 %v2254, %v1224
        %v2279 = vmul.f32 %v2221, %v1246
        %v2280 = vmul.f32 %v2220, %v1251
        %v2281 = vmul.f32 %v2219, %v1256
        %v2282 = vmul.f32 %v2218, %v1261
        %v2283 = vmul.f32 %v2217, %v1266
        %v2284 = vmul.f32 %v2216, %v1271
        %v2285 = vmul.f32 %v2215, %v1276
        %v2286 = vmul.f32 %v2222, %v1281
        %v2287 = vmul.f32 %v2200, %v1303
        %v2288 = vmul.f32 %v2201, %v1308
        %v2289 = vmul.f32 %v2202, %v1313
        %v2290 = vmul.f32 %v2203, %v1318
        %v2291 = vmul.f32 %v2204, %v1323
        %v2292 = vmul.f32 %v2205, %v1328
        %v2293 = vmul.f32 %v2206, %v1333
        %v2294 = vmul.f32 %v2199, %v1338
        %v2295 = vmul.f32 %v2252, %v1360
        %v2296 = vmul.f32 %v2251, %v1365
        %v2297 = vmul.f32 %v2250, %v1370
        %v2298 = vmul.f32 %v2249, %v1375
        %v2299 = vmul.f32 %v2248, %v1380
        %v2300 = vmul.f32 %v2247, %v1385
        %v2301 = vmul.f32 %v2254, %v1390
        %v2302 = vmul.f32 %v2253, %v1395
        %2311 = vrot.lane.b32.xlu0 %v2231, 32
        %v2312 = vpop.permute.xlu0 %2311
        %2313 = vrot.lane.b32.xlu0 %v2232, 32
        %v2314 = vpop.permute.xlu0 %2313
        %2315 = vrot.lane.b32.xlu0 %v2233, 32
        %v2316 = vpop.permute.xlu0 %2315
        %2317 = vrot.lane.b32.xlu0 %v2234, 32
        %v2318 = vpop.permute.xlu0 %2317
        %2319 = vrot.lane.b32.xlu0 %v2235, 32
        %v2320 = vpop.permute.xlu0 %2319
        %2321 = vrot.lane.b32.xlu0 %v2236, 32
        %v2322 = vpop.permute.xlu0 %2321
        %2323 = vrot.lane.b32.xlu0 %v2237, 32
        %v2324 = vpop.permute.xlu0 %2323
        %2325 = vrot.lane.b32.xlu0 %v2238, 32
        %v2326 = vpop.permute.xlu0 %2325
        %2343 = vrot.lane.b32.xlu0 %v2255, 64
        %v2344 = vpop.permute.xlu0 %2343
        %2345 = vrot.lane.b32.xlu0 %v2256, 64
        %v2346 = vpop.permute.xlu0 %2345
        %2347 = vrot.lane.b32.xlu0 %v2257, 64
        %v2348 = vpop.permute.xlu0 %2347
        %2349 = vrot.lane.b32.xlu0 %v2258, 64
        %v2350 = vpop.permute.xlu0 %2349
        %2351 = vrot.lane.b32.xlu0 %v2259, 64
        %v2352 = vpop.permute.xlu0 %2351
        %2353 = vrot.lane.b32.xlu0 %v2260, 64
        %v2354 = vpop.permute.xlu0 %2353
        %2355 = vrot.lane.b32.xlu0 %v2261, 64
        %v2356 = vpop.permute.xlu0 %2355
        %2357 = vrot.lane.b32.xlu0 %v2262, 64
        %v2358 = vpop.permute.xlu0 %2357
        %2375 = vrot.lane.b32.xlu0 %v2263, 96
        %v2376 = vpop.permute.xlu0 %2375
        %2377 = vrot.lane.b32.xlu0 %v2264, 96
        %v2378 = vpop.permute.xlu0 %2377
        %2379 = vrot.lane.b32.xlu0 %v2265, 96
        %v2380 = vpop.permute.xlu0 %2379
        %2381 = vrot.lane.b32.xlu0 %v2266, 96
        %v2382 = vpop.permute.xlu0 %2381
        %2383 = vrot.lane.b32.xlu0 %v2267, 96
        %v2384 = vpop.permute.xlu0 %2383
        %2385 = vrot.lane.b32.xlu0 %v2268, 96
        %v2386 = vpop.permute.xlu0 %2385
        %2387 = vrot.lane.b32.xlu0 %v2269, 96
        %v2388 = vpop.permute.xlu0 %2387
        %2389 = vrot.lane.b32.xlu0 %v2270, 96
        %v2390 = vpop.permute.xlu0 %2389
        %2407 = vrot.lane.b32.xlu0 %v2271, 32
        %v2408 = vpop.permute.xlu0 %2407
        %2409 = vrot.lane.b32.xlu0 %v2272, 32
        %v2410 = vpop.permute.xlu0 %2409
        %2411 = vrot.lane.b32.xlu0 %v2273, 32
        %v2412 = vpop.permute.xlu0 %2411
        %2413 = vrot.lane.b32.xlu0 %v2274, 32
        %v2414 = vpop.permute.xlu0 %2413
        %2415 = vrot.lane.b32.xlu0 %v2275, 32
        %v2416 = vpop.permute.xlu0 %2415
        %2417 = vrot.lane.b32.xlu0 %v2276, 32
        %v2418 = vpop.permute.xlu0 %2417
        %2419 = vrot.lane.b32.xlu0 %v2277, 32
        %v2420 = vpop.permute.xlu0 %2419
        %2421 = vrot.lane.b32.xlu0 %v2278, 32
        %v2422 = vpop.permute.xlu0 %2421
        %2439 = vrot.lane.b32.xlu0 %v2279, 64
        %v2440 = vpop.permute.xlu0 %2439
        %2441 = vrot.lane.b32.xlu0 %v2280, 64
        %v2442 = vpop.permute.xlu0 %2441
        %2443 = vrot.lane.b32.xlu0 %v2281, 64
        %v2444 = vpop.permute.xlu0 %2443
        %2445 = vrot.lane.b32.xlu0 %v2282, 64
        %v2446 = vpop.permute.xlu0 %2445
        %2447 = vrot.lane.b32.xlu0 %v2283, 64
        %v2448 = vpop.permute.xlu0 %2447
        %2449 = vrot.lane.b32.xlu0 %v2284, 64
        %v2450 = vpop.permute.xlu0 %2449
        %2451 = vrot.lane.b32.xlu0 %v2285, 64
        %v2452 = vpop.permute.xlu0 %2451
        %2453 = vrot.lane.b32.xlu0 %v2286, 64
        %v2454 = vpop.permute.xlu0 %2453
        %2471 = vrot.lane.b32.xlu0 %v2287, 96
        %v2472 = vpop.permute.xlu0 %2471
        %2473 = vrot.lane.b32.xlu0 %v2288, 96
        %v2474 = vpop.permute.xlu0 %2473
        %2475 = vrot.lane.b32.xlu0 %v2289, 96
        %v2476 = vpop.permute.xlu0 %2475
        %2477 = vrot.lane.b32.xlu0 %v2290, 96
        %v2478 = vpop.permute.xlu0 %2477
        %2479 = vrot.lane.b32.xlu0 %v2291, 96
        %v2480 = vpop.permute.xlu0 %2479
        %2481 = vrot.lane.b32.xlu0 %v2292, 96
        %v2482 = vpop.permute.xlu0 %2481
        %2483 = vrot.lane.b32.xlu0 %v2293, 96
        %v2484 = vpop.permute.xlu0 %2483
        %2485 = vrot.lane.b32.xlu0 %v2294, 96
        %v2486 = vpop.permute.xlu0 %2485
        %v2495 = vsel %vm577, %v2223, %v2312
        %v2496 = vsel %vm577, %v2224, %v2314
        %v2497 = vsel %vm577, %v2225, %v2316
        %v2498 = vsel %vm577, %v2226, %v2318
        %v2499 = vsel %vm577, %v2227, %v2320
        %v2500 = vsel %vm577, %v2228, %v2322
        %v2501 = vsel %vm577, %v2229, %v2324
        %v2502 = vsel %vm577, %v2230, %v2326
        %v2503 = vsel %vm588, %v2495, %v2344
        %v2504 = vsel %vm588, %v2496, %v2346
        %v2505 = vsel %vm588, %v2497, %v2348
        %v2506 = vsel %vm588, %v2498, %v2350
        %v2507 = vsel %vm588, %v2499, %v2352
        %v2508 = vsel %vm588, %v2500, %v2354
        %v2509 = vsel %vm588, %v2501, %v2356
        %v2510 = vsel %vm588, %v2502, %v2358
        %v2511 = vsel %vm1613, %v2503, %v2376
        %v2512 = vsel %vm1613, %v2504, %v2378
        %v2513 = vsel %vm1613, %v2505, %v2380
        %v2514 = vsel %vm1613, %v2506, %v2382
        %v2515 = vsel %vm1613, %v2507, %v2384
        %v2516 = vsel %vm1613, %v2508, %v2386
        %v2517 = vsel %vm1613, %v2509, %v2388
        %v2518 = vsel %vm1613, %v2510, %v2390
        %v2519 = vsel %vm577, %v2199, %v2408
        %v2520 = vsel %vm577, %v2200, %v2410
        %v2521 = vsel %vm577, %v2201, %v2412
        %v2522 = vsel %vm577, %v2202, %v2414
        %v2523 = vsel %vm577, %v2203, %v2416
        %v2524 = vsel %vm577, %v2204, %v2418
        %v2525 = vsel %vm577, %v2205, %v2420
        %v2526 = vsel %vm577, %v2206, %v2422
        %v2527 = vsel %vm588, %v2519, %v2440
        %v2528 = vsel %vm588, %v2520, %v2442
        %v2529 = vsel %vm588, %v2521, %v2444
        %v2530 = vsel %vm588, %v2522, %v2446
        %v2531 = vsel %vm588, %v2523, %v2448
        %v2532 = vsel %vm588, %v2524, %v2450
        %v2533 = vsel %vm588, %v2525, %v2452
        %v2534 = vsel %vm588, %v2526, %v2454
        %v2535 = vsel %vm1613, %v2527, %v2472
        %v2536 = vsel %vm1613, %v2528, %v2474
        %v2537 = vsel %vm1613, %v2529, %v2476
        %v2538 = vsel %vm1613, %v2530, %v2478
        %v2539 = vsel %vm1613, %v2531, %v2480
        %v2540 = vsel %vm1613, %v2532, %v2482
        %v2541 = vsel %vm1613, %v2533, %v2484
        %v2542 = vsel %vm1613, %v2534, %v2486
        %v2543 = vpack.c.bf16 %v2512, %v2511
        %v2544 = vpack.c.bf16 %v2536, %v2535
        %v2545 = vpack.c.bf16 %v2296, %v2295
        %v2546 = vpack.c.bf16 %v2514, %v2513
        %v2547 = vpack.c.bf16 %v2538, %v2537
        %v2548 = vpack.c.bf16 %v2298, %v2297
        %v2549 = vpack.c.bf16 %v2516, %v2515
        %v2550 = vpack.c.bf16 %v2540, %v2539
        %v2551 = vpack.c.bf16 %v2300, %v2299
        %v2552 = vpack.c.bf16 %v2518, %v2517
        %v2553 = vpack.c.bf16 %v2542, %v2541
        %v2554 = vpack.c.bf16 %v2302, %v2301
        %s2555 = scalar_lea.vmem %s8, 144
        %v2556 = vld [vmem:[%s2555] sm:$0xf]
        %v2557 = vld [vmem:[%s2555 + $0x4] sm:$0xf]
        %v2558 = vld [vmem:[%s2555 + $0x8] sm:$0xf]
        %v2559 = vld [vmem:[%s2555 + $0xc] sm:$0xf]
        %v2560 = vld [vmem:[%s2555 + $0x10] sm:$0xf]
        %v2561 = vld [vmem:[%s2555 + $0x14] sm:$0xf]
        %v2562 = vld [vmem:[%s2555 + $0x18] sm:$0xf]
        %v2563 = vld [vmem:[%s2555 + $0x1c] sm:$0xf]
        %v2564 = vld [vmem:[%s2555 + $0x20] sm:$0xf]
        %v2565 = vld [vmem:[%s2555 + $0x24] sm:$0xf]
        %v2566 = vld [vmem:[%s2555 + $0x28] sm:$0xf]
        %v2567 = vld [vmem:[%s2555 + $0x2c] sm:$0xf]
        %v2568 = vld [vmem:[%s2555 + $0x30] sm:$0xf]
        %v2569 = vld [vmem:[%s2555 + $0x34] sm:$0xf]
        %v2570 = vld [vmem:[%s2555 + $0x38] sm:$0xf]
        %v2571 = vld [vmem:[%s2555 + $0x3c] sm:$0xf]
        %v2572 = vld [vmem:[%s2555 + $0x40] sm:$0xf]
        %v2573 = vld [vmem:[%s2555 + $0x44] sm:$0xf]
        %v2574 = vld [vmem:[%s2555 + $0x48] sm:$0xf]
        %v2575 = vld [vmem:[%s2555 + $0x4c] sm:$0xf]
        %v2576 = vld [vmem:[%s2555 + $0x50] sm:$0xf]
        %v2577 = vld [vmem:[%s2555 + $0x54] sm:$0xf]
        %v2578 = vld [vmem:[%s2555 + $0x58] sm:$0xf]
        %v2579 = vld [vmem:[%s2555 + $0x5c] sm:$0xf]
        %v2580 = vld [vmem:[%s2555 + $0x60] sm:$0xf]
        %v2581 = vld [vmem:[%s2555 + $0x64] sm:$0xf]
        %v2582 = vld [vmem:[%s2555 + $0x68] sm:$0xf]
        %v2583 = vld [vmem:[%s2555 + $0x6c] sm:$0xf]
        %v2584 = vld [vmem:[%s2555 + $0x70] sm:$0xf]
        %v2585 = vld [vmem:[%s2555 + $0x74] sm:$0xf]
        %v2586 = vld [vmem:[%s2555 + $0x78] sm:$0xf]
        %v2587 = vld [vmem:[%s2555 + $0x7c] sm:$0xf]
        %v2588 = vld [vmem:[%s2555 + $0x80] sm:$0xf]
        %v2589 = vld [vmem:[%s2555 + $0x84] sm:$0xf]
        %v2590 = vld [vmem:[%s2555 + $0x88] sm:$0xf]
        %v2591 = vld [vmem:[%s2555 + $0x8c] sm:$0xf]
        %s2592 = scalar_lea.vmem %s9, 1
        %v2593 = vld [vmem:[%s2592] sm:$0x1]
        %v2595 = vlaneseq
        %v2596 = vshrl.u32 %v2595, 7
        %v2597 = vsub.s32 0, %v2596
        %v2598 = vrot.slane %v2593, %v2597
        %v2636 = vunpack.c.l.b16 %v2556
        %v2637 = vunpack.c.l.b16 %v2557
        %v2638 = vunpack.c.l.b16 %v2558
        %v2639 = vunpack.c.l.b16 %v2559
        %v2640 = vunpack.c.l.b16 %v2560
        %v2641 = vunpack.c.l.b16 %v2561
        %v2642 = vunpack.c.l.b16 %v2562
        %v2643 = vunpack.c.l.b16 %v2563
        %v2644 = vunpack.c.l.b16 %v2564
        %v2645 = vunpack.c.l.b16 %v2565
        %v2646 = vunpack.c.l.b16 %v2566
        %v2647 = vunpack.c.l.b16 %v2567
        %v2648 = vunpack.c.l.b16 %v2568
        %v2649 = vunpack.c.l.b16 %v2569
        %v2650 = vunpack.c.l.b16 %v2570
        %v2651 = vunpack.c.l.b16 %v2571
        %v2652 = vunpack.c.l.b16 %v2572
        %v2653 = vunpack.c.l.b16 %v2573
        %v2654 = vunpack.c.l.b16 %v2574
        %v2655 = vunpack.c.l.b16 %v2575
        %v2656 = vunpack.c.l.b16 %v2576
        %v2657 = vunpack.c.l.b16 %v2577
        %v2658 = vunpack.c.l.b16 %v2578
        %v2659 = vunpack.c.l.b16 %v2579
        %v2660 = vunpack.c.l.b16 %v2580
        %v2661 = vunpack.c.l.b16 %v2581
        %v2662 = vunpack.c.l.b16 %v2582
        %v2663 = vunpack.c.l.b16 %v2583
        %v2664 = vunpack.c.l.b16 %v2584
        %v2665 = vunpack.c.l.b16 %v2585
        %v2666 = vunpack.c.l.b16 %v2586
        %v2667 = vunpack.c.l.b16 %v2587
        %v2668 = vunpack.c.l.b16 %v2588
        %v2669 = vunpack.c.l.b16 %v2589
        %v2670 = vunpack.c.l.b16 %v2590
        %v2671 = vunpack.c.l.b16 %v2591
        %v2672 = vpack.c.b16 %v2637, %v2636
        %v2673 = vpack.c.b16 %v2639, %v2638
        %v2674 = vpack.c.b16 %v2641, %v2640
        %v2675 = vpack.c.b16 %v2643, %v2642
        %v2676 = vpack.c.b16 %v2645, %v2644
        %v2677 = vpack.c.b16 %v2647, %v2646
        %v2678 = vpack.c.b16 %v2649, %v2648
        %v2679 = vpack.c.b16 %v2651, %v2650
        %v2680 = vpack.c.b16 %v2653, %v2652
        %v2681 = vpack.c.b16 %v2655, %v2654
        %v2682 = vpack.c.b16 %v2657, %v2656
        %v2683 = vpack.c.b16 %v2659, %v2658
        %v2684 = vpack.c.b16 %v2661, %v2660
        %v2685 = vpack.c.b16 %v2663, %v2662
        %v2686 = vpack.c.b16 %v2665, %v2664
        %v2687 = vpack.c.b16 %v2667, %v2666
        %v2688 = vpack.c.b16 %v2669, %v2668
        %v2689 = vpack.c.b16 %v2671, %v2670
        %v2709 = vsel %vm577, %v2545, 0
        %v2712 = vsel %vm577, %v2548, 0
        %v2715 = vsel %vm577, %v2551, 0
        %v2718 = vsel %vm577, %v2554, 0
        %2720 = vmatprep.subr.bf16.mxu0 0
        %2721 = vmatpush1.bf16.msra.mxu0 %v2679
        %2722 = vmatprep.subr.bf16.mxu0 0
        %2723 = vmatpush1.bf16.msra.mxu0 %v2678
        %2724 = vmatprep.subr.bf16.mxu0 0
        %2725 = vmatpush1.bf16.msra.mxu0 %v2677
        %2726 = vmatprep.subr.bf16.mxu0 0
        %2727 = vmatpush1.bf16.msra.mxu0 %v2676
        %2728 = vmatprep.subr.bf16.mxu0 0
        %2729 = vmatpush1.bf16.msra.mxu0 %v2675
        %2730 = vmatprep.subr.bf16.mxu0 0
        %2731 = vmatpush1.bf16.msra.mxu0 %v2674
        %2732 = vmatprep.subr.bf16.mxu0 0
        %2733 = vmatpush1.bf16.msra.mxu0 %v2673
        %2734 = vmatprep.subr.bf16.mxu0 0
        %2735 = vmatpush1.bf16.msra.mxu0 %v2672
        %2736 = vmatprep.subr.bf16.mxu0 0
        %2737 = vmatpush2.bf16.msra.mxu0 %v2687
        %2738 = vmatprep.subr.bf16.mxu0 0
        %2739 = vmatpush2.bf16.msra.mxu0 %v2686
        %2740 = vmatprep.subr.bf16.mxu0 0
        %2741 = vmatpush2.bf16.msra.mxu0 %v2685
        %2742 = vmatprep.subr.bf16.mxu0 0
        %2743 = vmatpush2.bf16.msra.mxu0 %v2684
        %2744 = vmatprep.subr.bf16.mxu0 0
        %2745 = vmatpush2.bf16.msra.mxu0 %v2683
        %2746 = vmatprep.subr.bf16.mxu0 0
        %2747 = vmatpush2.bf16.msra.mxu0 %v2682
        %2748 = vmatprep.subr.bf16.mxu0 0
        %2749 = vmatpush2.bf16.msra.mxu0 %v2681
        %2750 = vmatprep.subr.bf16.mxu0 0
        %2751 = vmatpush2.bf16.msra.mxu0 %v2680
        %2752 = vmatprep.mubr.bf16.mxu0 %v2544
        %2753 = vmatmul.mubr.bf16.gmra.mxu0 %v2543
        %v2754 = vpop.f32.mrf.mxu0
        %v2755 = vadd.f32 %v2598, %v2754
        %v2756 = vpop.f32.mrf.mxu0
        %v2757 = vpop.f32.mrf.mxu0
        %v2758 = vadd.f32 %v2598, %v2757
        %v2759 = vpop.f32.mrf.mxu0
        %2760 = vmatprep.mubr.bf16.mxu0 %v2547
        %2761 = vmatmul.mubr.bf16.gmra.mxu0 %v2546
        %v2762 = vpop.f32.mrf.mxu0
        %v2763 = vadd.f32 %v2598, %v2762
        %v2764 = vpop.f32.mrf.mxu0
        %v2765 = vpop.f32.mrf.mxu0
        %v2766 = vadd.f32 %v2598, %v2765
        %v2767 = vpop.f32.mrf.mxu0
        %2768 = vmatprep.mubr.bf16.mxu0 %v2550
        %2769 = vmatmul.mubr.bf16.gmra.mxu0 %v2549
        %v2770 = vpop.f32.mrf.mxu0
        %v2771 = vadd.f32 %v2598, %v2770
        %v2772 = vpop.f32.mrf.mxu0
        %v2773 = vpop.f32.mrf.mxu0
        %v2774 = vadd.f32 %v2598, %v2773
        %v2775 = vpop.f32.mrf.mxu0
        %2776 = vmatprep.mubr.bf16.mxu0 %v2553
        %2777 = vmatmul.mubr.bf16.gmra.mxu0 %v2552
        %v2778 = vpop.f32.mrf.mxu0
        %v2779 = vadd.f32 %v2598, %v2778
        %v2780 = vpop.f32.mrf.mxu0
        %v2781 = vpop.f32.mrf.mxu0
        %v2782 = vadd.f32 %v2598, %v2781
        %v2783 = vpop.f32.mrf.mxu0
        %2784 = vdwg.mxu0
        %2785 = vmatprep.subr.bf16.mxu0 0
        %2786 = vmatpush1.bf16.msra.mxu0 0
        %2787 = vmatprep.subr.bf16.mxu0 0
        %2788 = vmatpush1.bf16.msra.mxu0 0
        %2789 = vmatprep.subr.bf16.mxu0 0
        %2790 = vmatpush1.bf16.msra.mxu0 0
        %2791 = vmatprep.subr.bf16.mxu0 0
        %2792 = vmatpush1.bf16.msra.mxu0 0
        %2793 = vmatprep.subr.bf16.mxu0 0
        %2794 = vmatpush1.bf16.msra.mxu0 0
        %2795 = vmatprep.subr.bf16.mxu0 0
        %2796 = vmatpush1.bf16.msra.mxu0 0
        %2797 = vmatprep.subr.bf16.mxu0 0
        %2798 = vmatpush1.bf16.msra.mxu0 %v2689
        %2799 = vmatprep.subr.bf16.mxu0 0
        %2800 = vmatpush1.bf16.msra.mxu0 %v2688
        %2801 = vmatprep.subr.bf16.mxu0 0
        %2802 = vmatpush2.bf16.msra.mxu0 0
        %2803 = vmatprep.subr.bf16.mxu0 0
        %2804 = vmatpush2.bf16.msra.mxu0 0
        %2805 = vmatprep.subr.bf16.mxu0 0
        %2806 = vmatpush2.bf16.msra.mxu0 0
        %2807 = vmatprep.subr.bf16.mxu0 0
        %2808 = vmatpush2.bf16.msra.mxu0 0
        %2809 = vmatprep.subr.bf16.mxu0 0
        %2810 = vmatpush2.bf16.msra.mxu0 0
        %2811 = vmatprep.subr.bf16.mxu0 0
        %2812 = vmatpush2.bf16.msra.mxu0 0
        %2813 = vmatprep.subr.bf16.mxu0 0
        %2814 = vmatpush2.bf16.msra.mxu0 0
        %2815 = vmatprep.subr.bf16.mxu0 0
        %2816 = vmatpush2.bf16.msra.mxu0 0
        %2817 = vmatprep.mubr.bf16.mxu0 0
        %2818 = vmatmul.mubr.bf16.gmra.mxu0 %v2709
        %v2819 = vpop.f32.mrf.mxu0
        %v2820 = vadd.f32 %v2755, %v2819
        %v2821 = vpop.f32.mrf.mxu0
        %v2822 = vpop.f32.mrf.mxu0
        %v2823 = vadd.f32 %v2758, %v2822
        %v2824 = vpop.f32.mrf.mxu0
        %2825 = vmatprep.mubr.bf16.mxu0 0
        %2826 = vmatmul.mubr.bf16.gmra.mxu0 %v2712
        %v2827 = vpop.f32.mrf.mxu0
        %v2828 = vadd.f32 %v2763, %v2827
        %v2829 = vpop.f32.mrf.mxu0
        %v2830 = vpop.f32.mrf.mxu0
        %v2831 = vadd.f32 %v2766, %v2830
        %v2832 = vpop.f32.mrf.mxu0
        %2833 = vmatprep.mubr.bf16.mxu0 0
        %2834 = vmatmul.mubr.bf16.gmra.mxu0 %v2715
        %v2835 = vpop.f32.mrf.mxu0
        %v2836 = vadd.f32 %v2771, %v2835
        %v2837 = vpop.f32.mrf.mxu0
        %v2838 = vpop.f32.mrf.mxu0
        %v2839 = vadd.f32 %v2774, %v2838
        %v2840 = vpop.f32.mrf.mxu0
        %2841 = vmatprep.mubr.bf16.mxu0 0
        %2842 = vmatmul.mubr.bf16.gmra.mxu0 %v2718
        %v2843 = vpop.f32.mrf.mxu0
        %v2844 = vadd.f32 %v2779, %v2843
        %v2845 = vpop.f32.mrf.mxu0
        %v2846 = vpop.f32.mrf.mxu0
        %v2847 = vadd.f32 %v2782, %v2846
        %v2848 = vpop.f32.mrf.mxu0
        %2849 = vdwg.mxu0
        %v2850 = vadd.f32 %v662, %v2820
        %v2851 = vadd.f32 %v663, %v2823
        %v2852 = vadd.f32 %v664, %v2828
        %v2853 = vadd.f32 %v665, %v2831
        %v2854 = vadd.f32 %v666, %v2836
        %v2855 = vadd.f32 %v667, %v2839
        %v2856 = vadd.f32 %v668, %v2844
        %v2857 = vadd.f32 %v669, %v2847
        %s2858 = scalar_lea.vmem %s7, 8
        %v2859 = vld [vmem:[%s2858] sm:$0x1]
        %s2860 = scalar_lea.vmem %s7, 9
        %v2861 = vld [vmem:[%s2860] sm:$0x1]
        %v2862 = vsel %vm577, %v2850, 0.0
        %v2863 = vsel %vm577, %v2851, 0.0
        %v2864 = vadd.f32 %v2862, %v2863
        %v2865 = vsel %vm577, %v2852, 0.0
        %v2866 = vadd.f32 %v2864, %v2865
        %v2867 = vsel %vm577, %v2853, 0.0
        %v2868 = vadd.f32 %v2866, %v2867
        %v2869 = vsel %vm577, %v2854, 0.0
        %v2870 = vadd.f32 %v2868, %v2869
        %v2871 = vsel %vm577, %v2855, 0.0
        %v2872 = vadd.f32 %v2870, %v2871
        %v2873 = vsel %vm577, %v2856, 0.0
        %v2874 = vadd.f32 %v2872, %v2873
        %v2875 = vsel %vm577, %v2857, 0.0
        %v2876 = vadd.f32 %v2874, %v2875
        %v2877 = vrot.slane %v2876, 4
        %v2878 = vadd.f32 %v2876, %v2877
        %v2879 = vrot.slane %v2878, 2
        %v2880 = vadd.f32 %v2878, %v2879
        %v2881 = vrot.slane %v2880, 1
        %v2882 = vadd.f32 %v2880, %v2881
        %v2883 = vmul.f32 %v2850, %v2850
        %v2884 = vmul.f32 %v2851, %v2851
        %v2885 = vmul.f32 %v2852, %v2852
        %v2886 = vmul.f32 %v2853, %v2853
        %v2887 = vmul.f32 %v2854, %v2854
        %v2888 = vmul.f32 %v2855, %v2855
        %v2889 = vmul.f32 %v2856, %v2856
        %v2890 = vmul.f32 %v2857, %v2857
        %v2891 = vsel %vm577, %v2883, 0.0
        %v2892 = vsel %vm577, %v2884, 0.0
        %v2893 = vadd.f32 %v2891, %v2892
        %v2894 = vsel %vm577, %v2885, 0.0
        %v2895 = vadd.f32 %v2893, %v2894
        %v2896 = vsel %vm577, %v2886, 0.0
        %v2897 = vadd.f32 %v2895, %v2896
        %v2898 = vsel %vm577, %v2887, 0.0
        %v2899 = vadd.f32 %v2897, %v2898
        %v2900 = vsel %vm577, %v2888, 0.0
        %v2901 = vadd.f32 %v2899, %v2900
        %v2902 = vsel %vm577, %v2889, 0.0
        %v2903 = vadd.f32 %v2901, %v2902
        %v2904 = vsel %vm577, %v2890, 0.0
        %v2905 = vadd.f32 %v2903, %v2904
        %v2906 = vrot.slane %v2905, 4
        %v2907 = vadd.f32 %v2905, %v2906
        %v2908 = vrot.slane %v2907, 2
        %v2909 = vadd.f32 %v2907, %v2908
        %v2910 = vrot.slane %v2909, 1
        %v2911 = vadd.f32 %v2909, %v2910
        %v2912 = vsel %vm723, %v2882, %v2911
        %v2914 = vsel %vm577, %v2912, 0
        %2916 = vmatprep.subr.mxu0 0.0
        %2917 = vmatpush1.msra.mxu0 0.0
        %2918 = vmatprep.subr.mxu0 0.0
        %2919 = vmatpush1.msra.mxu0 0.0
        %2920 = vmatprep.subr.mxu0 0.0
        %2921 = vmatpush1.msra.mxu0 0.0
        %2922 = vmatprep.subr.mxu0 0.0
        %2923 = vmatpush1.msra.mxu0 0.0
        %2924 = vmatprep.subr.mxu0 0.0
        %2925 = vmatpush1.msra.mxu0 0.0
        %2926 = vmatprep.subr.mxu0 0.0
        %2927 = vmatpush1.msra.mxu0 0.0
        %2928 = vmatprep.subr.mxu0 0.0
        %2929 = vmatpush1.msra.mxu0 0.0
        %2930 = vmatprep.subr.mxu0 0.0
        %2931 = vmatpush1.msra.mxu0 0.0
        %2932 = vmatprep.subr.mxu0 0.0
        %2933 = vmatpush1.msra.mxu0 0.0
        %2934 = vmatprep.subr.mxu0 0.0
        %2935 = vmatpush1.msra.mxu0 0.0
        %2936 = vmatprep.subr.mxu0 0.0
        %2937 = vmatpush1.msra.mxu0 0.0
        %2938 = vmatprep.subr.mxu0 0.0
        %2939 = vmatpush1.msra.mxu0 0.0
        %2940 = vmatprep.subr.mxu0 0.0
        %2941 = vmatpush1.msra.mxu0 %v552
        %2942 = vmatprep.subr.mxu0 0.0
        %2943 = vmatpush1.msra.mxu0 %v551
        %2944 = vmatprep.subr.mxu0 0.0
        %2945 = vmatpush1.msra.mxu0 %v550
        %2946 = vmatprep.subr.mxu0 0.0
        %2947 = vmatpush1.msra.mxu0 %v549
        %2948 = vmatprep.subr.mxu0 0.0
        %2949 = vmatpush2.msra.mxu0 0.0
        %2950 = vmatprep.subr.mxu0 0.0
        %2951 = vmatpush2.msra.mxu0 0.0
        %2952 = vmatprep.subr.mxu0 0.0
        %2953 = vmatpush2.msra.mxu0 0.0
        %2954 = vmatprep.subr.mxu0 0.0
        %2955 = vmatpush2.msra.mxu0 0.0
        %2956 = vmatprep.subr.mxu0 0.0
        %2957 = vmatpush2.msra.mxu0 0.0
        %2958 = vmatprep.subr.mxu0 0.0
        %2959 = vmatpush2.msra.mxu0 0.0
        %2960 = vmatprep.subr.mxu0 0.0
        %2961 = vmatpush2.msra.mxu0 0.0
        %2962 = vmatprep.subr.mxu0 0.0
        %2963 = vmatpush2.msra.mxu0 0.0
        %2964 = vmatprep.subr.mxu0 0.0
        %2965 = vmatpush2.msra.mxu0 0.0
        %2966 = vmatprep.subr.mxu0 0.0
        %2967 = vmatpush2.msra.mxu0 0.0
        %2968 = vmatprep.subr.mxu0 0.0
        %2969 = vmatpush2.msra.mxu0 0.0
        %2970 = vmatprep.subr.mxu0 0.0
        %2971 = vmatpush2.msra.mxu0 0.0
        %2972 = vmatprep.subr.mxu0 0.0
        %2973 = vmatpush2.msra.mxu0 0.0
        %2974 = vmatprep.subr.mxu0 0.0
        %2975 = vmatpush2.msra.mxu0 0.0
        %2976 = vmatprep.subr.mxu0 0.0
        %2977 = vmatpush2.msra.mxu0 0.0
        %2978 = vmatprep.subr.mxu0 0.0
        %2979 = vmatpush2.msra.mxu0 0.0
        %2980 = vmatprep.mubr.f32.mxu0 0.0
        %2981 = vmatmul.mubr.f32.gmra.mxu0 %v2914
        %v2982 = vpop.f32.mrf.mxu0
        %v2983 = vadd.f32 0.0, %v2982
        %v2984 = vpop.f32.mrf.mxu0
        %2985 = vdwg.mxu0
        %v2986 = vmul.f32 %v2983, %v2983
        %v2988 = vrot.slane %v2986, 7
        %v2990 = vsub.f32 %v2983, %v2988
        %v2991 = vmax.f32 %v2990, 0.0
        %v2992 = vlaneseq
        %v2993 = vshrl.u32 %v2992, 7
        %v2994 = vsub.s32 0, %v2993
        %v2995 = vrot.slane %v2983, %v2994
        %v2996 = vsub.f32 %v2850, %v2995
        %v2997 = vsub.f32 %v2851, %v2995
        %v2998 = vsub.f32 %v2852, %v2995
        %v2999 = vsub.f32 %v2853, %v2995
        %v3000 = vsub.f32 %v2854, %v2995
        %v3001 = vsub.f32 %v2855, %v2995
        %v3002 = vsub.f32 %v2856, %v2995
        %v3003 = vsub.f32 %v2857, %v2995
        %v3004 = vadd.f32 %v2991, 1e-06
        %v3005 = vrsqrt.pop %v3004
        %v3006 = vlaneseq
        %v3007 = vshrl.u32 %v3006, 7
        %v3008 = vsub.s32 1, %v3007
        %v3009 = vrot.slane %v3005, %v3008
        %v3010 = vmul.f32 %v2996, %v3009
        %v3011 = vmul.f32 %v2997, %v3009
        %v3012 = vmul.f32 %v2998, %v3009
        %v3013 = vmul.f32 %v2999, %v3009
        %v3014 = vmul.f32 %v3000, %v3009
        %v3015 = vmul.f32 %v3001, %v3009
        %v3016 = vmul.f32 %v3002, %v3009
        %v3017 = vmul.f32 %v3003, %v3009
        %v3019 = vlaneseq
        %v3020 = vshrl.u32 %v3019, 7
        %v3021 = vsub.s32 0, %v3020
        %v3022 = vrot.slane %v2859, %v3021
        %v3024 = vmul.f32 %v3010, %v3022
        %v3025 = vmul.f32 %v3011, %v3022
        %v3026 = vmul.f32 %v3012, %v3022
        %v3027 = vmul.f32 %v3013, %v3022
        %v3028 = vmul.f32 %v3014, %v3022
        %v3029 = vmul.f32 %v3015, %v3022
        %v3030 = vmul.f32 %v3016, %v3022
        %v3031 = vmul.f32 %v3017, %v3022
        %v3033 = vlaneseq
        %v3034 = vshrl.u32 %v3033, 7
        %v3035 = vsub.s32 0, %v3034
        %v3036 = vrot.slane %v2861, %v3035
        %v3038 = vadd.f32 %v3024, %v3036
        %v3039 = vadd.f32 %v3025, %v3036
        %v3040 = vadd.f32 %v3026, %v3036
        %v3041 = vadd.f32 %v3027, %v3036
        %v3042 = vadd.f32 %v3028, %v3036
        %v3043 = vadd.f32 %v3029, %v3036
        %v3044 = vadd.f32 %v3030, %v3036
        %v3045 = vadd.f32 %v3031, %v3036
        %v3046 = vpack.c.bf16 %v3039, %v3038
        %v3047 = vpack.c.bf16 %v3041, %v3040
        %v3048 = vpack.c.bf16 %v3043, %v3042
        %v3049 = vpack.c.bf16 %v3045, %v3044
        %v3050 = vld [vmem:[%s12] sm:$0xf]
        %v3051 = vld [vmem:[%s12 + $0x4] sm:$0xf]
        %v3052 = vld [vmem:[%s12 + $0x8] sm:$0xf]
        %v3053 = vld [vmem:[%s12 + $0xc] sm:$0xf]
        %v3054 = vld [vmem:[%s13] sm:$0x1]
        %v3056 = vlaneseq
        %v3057 = vshrl.u32 %v3056, 7
        %v3058 = vsub.s32 0, %v3057
        %v3059 = vrot.slane %v3054, %v3058
        %v3065 = vunpack.c.l.b16 %v3050
        %v3066 = vunpack.c.l.b16 %v3051
        %v3067 = vunpack.c.l.b16 %v3052
        %v3068 = vunpack.c.l.b16 %v3053
        %v3069 = vpack.c.b16 %v3066, %v3065
        %v3070 = vpack.c.b16 %v3068, %v3067
        %v3074 = vsel %vm577, %v3046, 0
        %v3077 = vsel %vm577, %v3047, 0
        %v3080 = vsel %vm577, %v3048, 0
        %v3083 = vsel %vm577, %v3049, 0
        %3085 = vmatprep.subr.bf16.mxu0 0
        %3086 = vmatpush1.bf16.msra.mxu0 0
        %3087 = vmatprep.subr.bf16.mxu0 0
        %3088 = vmatpush1.bf16.msra.mxu0 0
        %3089 = vmatprep.subr.bf16.mxu0 0
        %3090 = vmatpush1.bf16.msra.mxu0 0
        %3091 = vmatprep.subr.bf16.mxu0 0
        %3092 = vmatpush1.bf16.msra.mxu0 0
        %3093 = vmatprep.subr.bf16.mxu0 0
        %3094 = vmatpush1.bf16.msra.mxu0 0
        %3095 = vmatprep.subr.bf16.mxu0 0
        %3096 = vmatpush1.bf16.msra.mxu0 0
        %3097 = vmatprep.subr.bf16.mxu0 0
        %3098 = vmatpush1.bf16.msra.mxu0 %v3070
        %3099 = vmatprep.subr.bf16.mxu0 0
        %3100 = vmatpush1.bf16.msra.mxu0 %v3069
        %3101 = vmatprep.subr.bf16.mxu0 0
        %3102 = vmatpush2.bf16.msra.mxu0 0
        %3103 = vmatprep.subr.bf16.mxu0 0
        %3104 = vmatpush2.bf16.msra.mxu0 0
        %3105 = vmatprep.subr.bf16.mxu0 0
        %3106 = vmatpush2.bf16.msra.mxu0 0
        %3107 = vmatprep.subr.bf16.mxu0 0
        %3108 = vmatpush2.bf16.msra.mxu0 0
        %3109 = vmatprep.subr.bf16.mxu0 0
        %3110 = vmatpush2.bf16.msra.mxu0 0
        %3111 = vmatprep.subr.bf16.mxu0 0
        %3112 = vmatpush2.bf16.msra.mxu0 0
        %3113 = vmatprep.subr.bf16.mxu0 0
        %3114 = vmatpush2.bf16.msra.mxu0 0
        %3115 = vmatprep.subr.bf16.mxu0 0
        %3116 = vmatpush2.bf16.msra.mxu0 0
        %3117 = vmatprep.mubr.bf16.mxu0 0
        %3118 = vmatmul.mubr.bf16.gmra.mxu0 %v3074
        %v3119 = vpop.f32.mrf.mxu0
        %v3120 = vadd.f32 %v3059, %v3119
        %v3121 = vpop.f32.mrf.mxu0
        %v3122 = vpop.f32.mrf.mxu0
        %v3123 = vadd.f32 %v3059, %v3122
        %v3124 = vpop.f32.mrf.mxu0
        %3125 = vmatprep.mubr.bf16.mxu0 0
        %3126 = vmatmul.mubr.bf16.gmra.mxu0 %v3077
        %v3127 = vpop.f32.mrf.mxu0
        %v3128 = vadd.f32 %v3059, %v3127
        %v3129 = vpop.f32.mrf.mxu0
        %v3130 = vpop.f32.mrf.mxu0
        %v3131 = vadd.f32 %v3059, %v3130
        %v3132 = vpop.f32.mrf.mxu0
        %3133 = vmatprep.mubr.bf16.mxu0 0
        %3134 = vmatmul.mubr.bf16.gmra.mxu0 %v3080
        %v3135 = vpop.f32.mrf.mxu0
        %v3136 = vadd.f32 %v3059, %v3135
        %v3137 = vpop.f32.mrf.mxu0
        %v3138 = vpop.f32.mrf.mxu0
        %v3139 = vadd.f32 %v3059, %v3138
        %v3140 = vpop.f32.mrf.mxu0
        %3141 = vmatprep.mubr.bf16.mxu0 0
        %3142 = vmatmul.mubr.bf16.gmra.mxu0 %v3083
        %v3143 = vpop.f32.mrf.mxu0
        %v3144 = vadd.f32 %v3059, %v3143
        %v3145 = vpop.f32.mrf.mxu0
        %v3146 = vpop.f32.mrf.mxu0
        %v3147 = vadd.f32 %v3059, %v3146
        %v3148 = vpop.f32.mrf.mxu0
        %3149 = vdwg.mxu0
        %v3150 = vld [vmem:[%s5] sm:$0xff]
        %v3151 = vld [vmem:[%s5 + $0x8] sm:$0xff]
        %v3152 = vld [vmem:[%s5 + $0x10] sm:$0xff]
        %v3153 = vld [vmem:[%s5 + $0x18] sm:$0xff]
        %v3154 = vld [vmem:[%s5 + $0x20] sm:$0xff]
        %v3155 = vld [vmem:[%s5 + $0x28] sm:$0xff]
        %v3156 = vld [vmem:[%s5 + $0x30] sm:$0xff]
        %v3157 = vld [vmem:[%s5 + $0x38] sm:$0xff]
        %v3158 = vld [vmem:[%s5 + $0x40] sm:$0xff]
        %v3159 = vld [vmem:[%s5 + $0x48] sm:$0xff]
        %v3160 = vld [vmem:[%s5 + $0x50] sm:$0xff]
        %v3161 = vld [vmem:[%s5 + $0x58] sm:$0xff]
        %v3162 = vld [vmem:[%s5 + $0x60] sm:$0xff]
        %v3163 = vld [vmem:[%s5 + $0x68] sm:$0xff]
        %v3164 = vld [vmem:[%s5 + $0x70] sm:$0xff]
        %v3165 = vld [vmem:[%s5 + $0x78] sm:$0xff]
        %v3166 = vld [vmem:[%s5 + $0x80] sm:$0xff]
        %v3167 = vld [vmem:[%s5 + $0x88] sm:$0xff]
        %v3168 = vld [vmem:[%s5 + $0x90] sm:$0xff]
        %v3169 = vld [vmem:[%s5 + $0x98] sm:$0xff]
        %v3170 = vld [vmem:[%s5 + $0xa0] sm:$0xff]
        %v3171 = vld [vmem:[%s5 + $0xa8] sm:$0xff]
        %v3172 = vld [vmem:[%s5 + $0xb0] sm:$0xff]
        %v3173 = vld [vmem:[%s5 + $0xb8] sm:$0xff]
        %v3174 = vld [vmem:[%s5 + $0xc0] sm:$0xff]
        %v3175 = vld [vmem:[%s5 + $0xc8] sm:$0xff]
        %v3176 = vld [vmem:[%s5 + $0xd0] sm:$0xff]
        %v3177 = vld [vmem:[%s5 + $0xd8] sm:$0xff]
        %v3178 = vld [vmem:[%s5 + $0xe0] sm:$0xff]
        %v3179 = vld [vmem:[%s5 + $0xe8] sm:$0xff]
        %v3180 = vld [vmem:[%s5 + $0xf0] sm:$0xff]
        %v3181 = vld [vmem:[%s5 + $0xf8] sm:$0xff]
        %v3182 = vmul.f32 %v3120, %v3150
        %v3183 = vmul.f32 %v3123, %v3151
        %v3184 = vmul.f32 %v3128, %v3152
        %v3185 = vmul.f32 %v3131, %v3153
        %v3186 = vmul.f32 %v3136, %v3154
        %v3187 = vmul.f32 %v3139, %v3155
        %v3188 = vmul.f32 %v3144, %v3156
        %v3189 = vmul.f32 %v3147, %v3157
        %v3190 = vmul.f32 %v3120, %v3158
        %v3191 = vmul.f32 %v3123, %v3159
        %v3192 = vmul.f32 %v3128, %v3160
        %v3193 = vmul.f32 %v3131, %v3161
        %v3194 = vmul.f32 %v3136, %v3162
        %v3195 = vmul.f32 %v3139, %v3163
        %v3196 = vmul.f32 %v3144, %v3164
        %v3197 = vmul.f32 %v3147, %v3165
        %v3198 = vmul.f32 %v3120, %v3166
        %v3199 = vmul.f32 %v3123, %v3167
        %v3200 = vmul.f32 %v3128, %v3168
        %v3201 = vmul.f32 %v3131, %v3169
        %v3202 = vmul.f32 %v3136, %v3170
        %v3203 = vmul.f32 %v3139, %v3171
        %v3204 = vmul.f32 %v3144, %v3172
        %v3205 = vmul.f32 %v3147, %v3173
        %v3206 = vmul.f32 %v3120, %v3174
        %v3207 = vmul.f32 %v3123, %v3175
        %v3208 = vmul.f32 %v3128, %v3176
        %v3209 = vmul.f32 %v3131, %v3177
        %v3210 = vmul.f32 %v3136, %v3178
        %v3211 = vmul.f32 %v3139, %v3179
        %v3212 = vmul.f32 %v3144, %v3180
        %v3213 = vmul.f32 %v3147, %v3181
        %v3214 = vpack.c.bf16 %v3183, %v3182
        %v3215 = vpack.c.bf16 %v3185, %v3184
        %v3216 = vpack.c.bf16 %v3187, %v3186
        %v3217 = vpack.c.bf16 %v3189, %v3188
        %v3218 = vpack.c.bf16 %v3191, %v3190
        %v3219 = vpack.c.bf16 %v3193, %v3192
        %v3220 = vpack.c.bf16 %v3195, %v3194
        %v3221 = vpack.c.bf16 %v3197, %v3196
        %v3222 = vpack.c.bf16 %v3199, %v3198
        %v3223 = vpack.c.bf16 %v3201, %v3200
        %v3224 = vpack.c.bf16 %v3203, %v3202
        %v3225 = vpack.c.bf16 %v3205, %v3204
        %v3226 = vpack.c.bf16 %v3207, %v3206
        %v3227 = vpack.c.bf16 %v3209, %v3208
        %v3228 = vpack.c.bf16 %v3211, %v3210
        %v3229 = vpack.c.bf16 %v3213, %v3212
        %v3230 = vpack.c.bf16 %v3123, %v3120
        %v3231 = vpack.c.bf16 %v3131, %v3128
        %v3232 = vpack.c.bf16 %v3139, %v3136
        %v3233 = vpack.c.bf16 %v3147, %v3144
        %3238 = vrot.lane.b32.xlu0 %v3230, 96
        %v3239 = vpop.permute.xlu0 %3238
        %3240 = vrot.lane.b32.xlu0 %v3231, 96
        %v3241 = vpop.permute.xlu0 %3240
        %3242 = vrot.lane.b32.xlu0 %v3232, 96
        %v3243 = vpop.permute.xlu0 %3242
        %3244 = vrot.lane.b32.xlu0 %v3233, 96
        %v3245 = vpop.permute.xlu0 %3244
        %v3247 = vsel %vm577, %v3214, 0
        %v3250 = vsel %vm577, %v3215, 0
        %v3253 = vsel %vm577, %v3216, 0
        %v3256 = vsel %vm577, %v3217, 0
        %v3259 = vsel %vm577, %v3218, 0
        %v3262 = vsel %vm577, %v3219, 0
        %v3265 = vsel %vm577, %v3220, 0
        %v3268 = vsel %vm577, %v3221, 0
        %v3271 = vsel %vm577, %v3222, 0
        %v3274 = vsel %vm577, %v3223, 0
        %v3277 = vsel %vm577, %v3224, 0
        %v3280 = vsel %vm577, %v3225, 0
        %v3283 = vsel %vm577, %v3226, 0
        %v3286 = vsel %vm577, %v3227, 0
        %v3289 = vsel %vm577, %v3228, 0
        %v3292 = vsel %vm577, %v3229, 0
        %v3295 = vsel %vm577, %v3239, 0
        %v3298 = vsel %vm577, %v3241, 0
        %v3301 = vsel %vm577, %v3243, 0
        %v3304 = vsel %vm577, %v3245, 0
        %3306 = vmatprep.subr.bf16.mxu0 0
        %3307 = vmatpush1.bf16.xpose.msra.mxu0 0
        %3308 = vmatprep.subr.bf16.mxu0 0
        %3309 = vmatpush1.bf16.xpose.msra.mxu0 0
        %3310 = vmatprep.subr.bf16.mxu0 0
        %3311 = vmatpush1.bf16.xpose.msra.mxu0 0
        %3312 = vmatprep.subr.bf16.mxu0 0
        %3313 = vmatpush1.bf16.xpose.msra.mxu0 0
        %3314 = vmatprep.subr.bf16.mxu0 0
        %3315 = vmatpush1.bf16.xpose.msra.mxu0 %v3304
        %3316 = vmatprep.subr.bf16.mxu0 0
        %3317 = vmatpush1.bf16.xpose.msra.mxu0 %v3301
        %3318 = vmatprep.subr.bf16.mxu0 0
        %3319 = vmatpush1.bf16.xpose.msra.mxu0 %v3298
        %3320 = vmatprep.subr.bf16.mxu0 0
        %3321 = vmatpush1.bf16.xpose.msra.mxu0 %v3295
        %3322 = vmatprep.subr.bf16.mxu0 0
        %3323 = vmatpush2.bf16.xpose.msra.mxu0 0
        %3324 = vmatprep.subr.bf16.mxu0 0
        %3325 = vmatpush2.bf16.xpose.msra.mxu0 0
        %3326 = vmatprep.subr.bf16.mxu0 0
        %3327 = vmatpush2.bf16.xpose.msra.mxu0 0
        %3328 = vmatprep.subr.bf16.mxu0 0
        %3329 = vmatpush2.bf16.xpose.msra.mxu0 0
        %3330 = vmatprep.subr.bf16.mxu0 0
        %3331 = vmatpush2.bf16.xpose.msra.mxu0 0
        %3332 = vmatprep.subr.bf16.mxu0 0
        %3333 = vmatpush2.bf16.xpose.msra.mxu0 0
        %3334 = vmatprep.subr.bf16.mxu0 0
        %3335 = vmatpush2.bf16.xpose.msra.mxu0 0
        %3336 = vmatprep.subr.bf16.mxu0 0
        %3337 = vmatpush2.bf16.xpose.msra.mxu0 0
        %3338 = vmatprep.mubr.bf16.mxu0 0
        %3339 = vmatmul.mubr.bf16.gmra.mxu0 %v3247
        %v3340 = vpop.f32.mrf.mxu0
        %v3341 = vadd.f32 0.0, %v3340
        %v3342 = vpop.f32.mrf.mxu0
        %v3343 = vpop.f32.mrf.mxu0
        %v3344 = vadd.f32 0.0, %v3343
        %v3345 = vpop.f32.mrf.mxu0
        %3346 = vmatprep.mubr.bf16.mxu0 0
        %3347 = vmatmul.mubr.bf16.gmra.mxu0 %v3250
        %v3348 = vpop.f32.mrf.mxu0
        %v3349 = vadd.f32 0.0, %v3348
        %v3350 = vpop.f32.mrf.mxu0
        %v3351 = vpop.f32.mrf.mxu0
        %v3352 = vadd.f32 0.0, %v3351
        %v3353 = vpop.f32.mrf.mxu0
        %3354 = vmatprep.mubr.bf16.mxu0 0
        %3355 = vmatmul.mubr.bf16.gmra.mxu0 %v3253
        %v3356 = vpop.f32.mrf.mxu0
        %v3357 = vadd.f32 0.0, %v3356
        %v3358 = vpop.f32.mrf.mxu0
        %v3359 = vpop.f32.mrf.mxu0
        %v3360 = vadd.f32 0.0, %v3359
        %v3361 = vpop.f32.mrf.mxu0
        %3362 = vmatprep.mubr.bf16.mxu0 0
        %3363 = vmatmul.mubr.bf16.gmra.mxu0 %v3256
        %v3364 = vpop.f32.mrf.mxu0
        %v3365 = vadd.f32 0.0, %v3364
        %v3366 = vpop.f32.mrf.mxu0
        %v3367 = vpop.f32.mrf.mxu0
        %v3368 = vadd.f32 0.0, %v3367
        %v3369 = vpop.f32.mrf.mxu0
        %3370 = vmatprep.mubr.bf16.mxu0 0
        %3371 = vmatmul.mubr.bf16.gmra.mxu0 %v3259
        %v3372 = vpop.f32.mrf.mxu0
        %v3373 = vadd.f32 0.0, %v3372
        %v3374 = vpop.f32.mrf.mxu0
        %v3375 = vpop.f32.mrf.mxu0
        %v3376 = vadd.f32 0.0, %v3375
        %v3377 = vpop.f32.mrf.mxu0
        %3378 = vmatprep.mubr.bf16.mxu0 0
        %3379 = vmatmul.mubr.bf16.gmra.mxu0 %v3262
        %v3380 = vpop.f32.mrf.mxu0
        %v3381 = vadd.f32 0.0, %v3380
        %v3382 = vpop.f32.mrf.mxu0
        %v3383 = vpop.f32.mrf.mxu0
        %v3384 = vadd.f32 0.0, %v3383
        %v3385 = vpop.f32.mrf.mxu0
        %3386 = vmatprep.mubr.bf16.mxu0 0
        %3387 = vmatmul.mubr.bf16.gmra.mxu0 %v3265
        %v3388 = vpop.f32.mrf.mxu0
        %v3389 = vadd.f32 0.0, %v3388
        %v3390 = vpop.f32.mrf.mxu0
        %v3391 = vpop.f32.mrf.mxu0
        %v3392 = vadd.f32 0.0, %v3391
        %v3393 = vpop.f32.mrf.mxu0
        %3394 = vmatprep.mubr.bf16.mxu0 0
        %3395 = vmatmul.mubr.bf16.gmra.mxu0 %v3268
        %v3396 = vpop.f32.mrf.mxu0
        %v3397 = vadd.f32 0.0, %v3396
        %v3398 = vpop.f32.mrf.mxu0
        %v3399 = vpop.f32.mrf.mxu0
        %v3400 = vadd.f32 0.0, %v3399
        %v3401 = vpop.f32.mrf.mxu0
        %3402 = vmatprep.mubr.bf16.mxu0 0
        %3403 = vmatmul.mubr.bf16.gmra.mxu0 %v3271
        %v3404 = vpop.f32.mrf.mxu0
        %v3405 = vadd.f32 0.0, %v3404
        %v3406 = vpop.f32.mrf.mxu0
        %v3407 = vpop.f32.mrf.mxu0
        %v3408 = vadd.f32 0.0, %v3407
        %v3409 = vpop.f32.mrf.mxu0
        %3410 = vmatprep.mubr.bf16.mxu0 0
        %3411 = vmatmul.mubr.bf16.gmra.mxu0 %v3274
        %v3412 = vpop.f32.mrf.mxu0
        %v3413 = vadd.f32 0.0, %v3412
        %v3414 = vpop.f32.mrf.mxu0
        %v3415 = vpop.f32.mrf.mxu0
        %v3416 = vadd.f32 0.0, %v3415
        %v3417 = vpop.f32.mrf.mxu0
        %3418 = vmatprep.mubr.bf16.mxu0 0
        %3419 = vmatmul.mubr.bf16.gmra.mxu0 %v3277
        %v3420 = vpop.f32.mrf.mxu0
        %v3421 = vadd.f32 0.0, %v3420
        %v3422 = vpop.f32.mrf.mxu0
        %v3423 = vpop.f32.mrf.mxu0
        %v3424 = vadd.f32 0.0, %v3423
        %v3425 = vpop.f32.mrf.mxu0
        %3426 = vmatprep.mubr.bf16.mxu0 0
        %3427 = vmatmul.mubr.bf16.gmra.mxu0 %v3280
        %v3428 = vpop.f32.mrf.mxu0
        %v3429 = vadd.f32 0.0, %v3428
        %v3430 = vpop.f32.mrf.mxu0
        %v3431 = vpop.f32.mrf.mxu0
        %v3432 = vadd.f32 0.0, %v3431
        %v3433 = vpop.f32.mrf.mxu0
        %3434 = vmatprep.mubr.bf16.mxu0 0
        %3435 = vmatmul.mubr.bf16.gmra.mxu0 %v3283
        %v3436 = vpop.f32.mrf.mxu0
        %v3437 = vadd.f32 0.0, %v3436
        %v3438 = vpop.f32.mrf.mxu0
        %v3439 = vpop.f32.mrf.mxu0
        %v3440 = vadd.f32 0.0, %v3439
        %v3441 = vpop.f32.mrf.mxu0
        %3442 = vmatprep.mubr.bf16.mxu0 0
        %3443 = vmatmul.mubr.bf16.gmra.mxu0 %v3286
        %v3444 = vpop.f32.mrf.mxu0
        %v3445 = vadd.f32 0.0, %v3444
        %v3446 = vpop.f32.mrf.mxu0
        %v3447 = vpop.f32.mrf.mxu0
        %v3448 = vadd.f32 0.0, %v3447
        %v3449 = vpop.f32.mrf.mxu0
        %3450 = vmatprep.mubr.bf16.mxu0 0
        %3451 = vmatmul.mubr.bf16.gmra.mxu0 %v3289
        %v3452 = vpop.f32.mrf.mxu0
        %v3453 = vadd.f32 0.0, %v3452
        %v3454 = vpop.f32.mrf.mxu0
        %v3455 = vpop.f32.mrf.mxu0
        %v3456 = vadd.f32 0.0, %v3455
        %v3457 = vpop.f32.mrf.mxu0
        %3458 = vmatprep.mubr.bf16.mxu0 0
        %3459 = vmatmul.mubr.bf16.gmra.mxu0 %v3292
        %v3460 = vpop.f32.mrf.mxu0
        %v3461 = vadd.f32 0.0, %v3460
        %v3462 = vpop.f32.mrf.mxu0
        %v3463 = vpop.f32.mrf.mxu0
        %v3464 = vadd.f32 0.0, %v3463
        %v3465 = vpop.f32.mrf.mxu0
        %3466 = vdwg.mxu0
        %v3467 = vsel %vm588, %v3341, -inf
        %3468 = vmax.xlane.f32.xlu0 %v3467
        %v3469 = vpop.xlane.xlu0 %3468
        %v3470 = vsel %vm588, %v3344, -inf
        %3471 = vmax.xlane.f32.xlu0 %v3470
        %v3472 = vpop.xlane.xlu0 %3471
        %v3473 = vsel %vm588, %v3349, -inf
        %3474 = vmax.xlane.f32.xlu0 %v3473
        %v3475 = vpop.xlane.xlu0 %3474
        %v3476 = vsel %vm588, %v3352, -inf
        %3477 = vmax.xlane.f32.xlu0 %v3476
        %v3478 = vpop.xlane.xlu0 %3477
        %v3479 = vsel %vm588, %v3357, -inf
        %3480 = vmax.xlane.f32.xlu0 %v3479
        %v3481 = vpop.xlane.xlu0 %3480
        %v3482 = vsel %vm588, %v3360, -inf
        %3483 = vmax.xlane.f32.xlu0 %v3482
        %v3484 = vpop.xlane.xlu0 %3483
        %v3485 = vsel %vm588, %v3365, -inf
        %3486 = vmax.xlane.f32.xlu0 %v3485
        %v3487 = vpop.xlane.xlu0 %3486
        %v3488 = vsel %vm588, %v3368, -inf
        %3489 = vmax.xlane.f32.xlu0 %v3488
        %v3490 = vpop.xlane.xlu0 %3489
        %v3491 = vsel %vm588, %v3373, -inf
        %3492 = vmax.xlane.f32.xlu0 %v3491
        %v3493 = vpop.xlane.xlu0 %3492
        %v3494 = vsel %vm588, %v3376, -inf
        %3495 = vmax.xlane.f32.xlu0 %v3494
        %v3496 = vpop.xlane.xlu0 %3495
        %v3497 = vsel %vm588, %v3381, -inf
        %3498 = vmax.xlane.f32.xlu0 %v3497
        %v3499 = vpop.xlane.xlu0 %3498
        %v3500 = vsel %vm588, %v3384, -inf
        %3501 = vmax.xlane.f32.xlu0 %v3500
        %v3502 = vpop.xlane.xlu0 %3501
        %v3503 = vsel %vm588, %v3389, -inf
        %3504 = vmax.xlane.f32.xlu0 %v3503
        %v3505 = vpop.xlane.xlu0 %3504
        %v3506 = vsel %vm588, %v3392, -inf
        %3507 = vmax.xlane.f32.xlu0 %v3506
        %v3508 = vpop.xlane.xlu0 %3507
        %v3509 = vsel %vm588, %v3397, -inf
        %3510 = vmax.xlane.f32.xlu0 %v3509
        %v3511 = vpop.xlane.xlu0 %3510
        %v3512 = vsel %vm588, %v3400, -inf
        %3513 = vmax.xlane.f32.xlu0 %v3512
        %v3514 = vpop.xlane.xlu0 %3513
        %v3515 = vsel %vm588, %v3405, -inf
        %3516 = vmax.xlane.f32.xlu0 %v3515
        %v3517 = vpop.xlane.xlu0 %3516
        %v3518 = vsel %vm588, %v3408, -inf
        %3519 = vmax.xlane.f32.xlu0 %v3518
        %v3520 = vpop.xlane.xlu0 %3519
        %v3521 = vsel %vm588, %v3413, -inf
        %3522 = vmax.xlane.f32.xlu0 %v3521
        %v3523 = vpop.xlane.xlu0 %3522
        %v3524 = vsel %vm588, %v3416, -inf
        %3525 = vmax.xlane.f32.xlu0 %v3524
        %v3526 = vpop.xlane.xlu0 %3525
        %v3527 = vsel %vm588, %v3421, -inf
        %3528 = vmax.xlane.f32.xlu0 %v3527
        %v3529 = vpop.xlane.xlu0 %3528
        %v3530 = vsel %vm588, %v3424, -inf
        %3531 = vmax.xlane.f32.xlu0 %v3530
        %v3532 = vpop.xlane.xlu0 %3531
        %v3533 = vsel %vm588, %v3429, -inf
        %3534 = vmax.xlane.f32.xlu0 %v3533
        %v3535 = vpop.xlane.xlu0 %3534
        %v3536 = vsel %vm588, %v3432, -inf
        %3537 = vmax.xlane.f32.xlu0 %v3536
        %v3538 = vpop.xlane.xlu0 %3537
        %v3539 = vsel %vm588, %v3437, -inf
        %3540 = vmax.xlane.f32.xlu0 %v3539
        %v3541 = vpop.xlane.xlu0 %3540
        %v3542 = vsel %vm588, %v3440, -inf
        %3543 = vmax.xlane.f32.xlu0 %v3542
        %v3544 = vpop.xlane.xlu0 %3543
        %v3545 = vsel %vm588, %v3445, -inf
        %3546 = vmax.xlane.f32.xlu0 %v3545
        %v3547 = vpop.xlane.xlu0 %3546
        %v3548 = vsel %vm588, %v3448, -inf
        %3549 = vmax.xlane.f32.xlu0 %v3548
        %v3550 = vpop.xlane.xlu0 %3549
        %v3551 = vsel %vm588, %v3453, -inf
        %3552 = vmax.xlane.f32.xlu0 %v3551
        %v3553 = vpop.xlane.xlu0 %3552
        %v3554 = vsel %vm588, %v3456, -inf
        %3555 = vmax.xlane.f32.xlu0 %v3554
        %v3556 = vpop.xlane.xlu0 %3555
        %v3557 = vsel %vm588, %v3461, -inf
        %3558 = vmax.xlane.f32.xlu0 %v3557
        %v3559 = vpop.xlane.xlu0 %3558
        %v3560 = vsel %vm588, %v3464, -inf
        %3561 = vmax.xlane.f32.xlu0 %v3560
        %v3562 = vpop.xlane.xlu0 %3561
        %v3563 = vsub.f32 %v3341, %v3469
        %v3564 = vsub.f32 %v3344, %v3472
        %v3565 = vsub.f32 %v3349, %v3475
        %v3566 = vsub.f32 %v3352, %v3478
        %v3567 = vsub.f32 %v3357, %v3481
        %v3568 = vsub.f32 %v3360, %v3484
        %v3569 = vsub.f32 %v3365, %v3487
        %v3570 = vsub.f32 %v3368, %v3490
        %v3571 = vsub.f32 %v3373, %v3493
        %v3572 = vsub.f32 %v3376, %v3496
        %v3573 = vsub.f32 %v3381, %v3499
        %v3574 = vsub.f32 %v3384, %v3502
        %v3575 = vsub.f32 %v3389, %v3505
        %v3576 = vsub.f32 %v3392, %v3508
        %v3577 = vsub.f32 %v3397, %v3511
        %v3578 = vsub.f32 %v3400, %v3514
        %v3579 = vsub.f32 %v3405, %v3517
        %v3580 = vsub.f32 %v3408, %v3520
        %v3581 = vsub.f32 %v3413, %v3523
        %v3582 = vsub.f32 %v3416, %v3526
        %v3583 = vsub.f32 %v3421, %v3529
        %v3584 = vsub.f32 %v3424, %v3532
        %v3585 = vsub.f32 %v3429, %v3535
        %v3586 = vsub.f32 %v3432, %v3538
        %v3587 = vsub.f32 %v3437, %v3541
        %v3588 = vsub.f32 %v3440, %v3544
        %v3589 = vsub.f32 %v3445, %v3547
        %v3590 = vsub.f32 %v3448, %v3550
        %v3591 = vsub.f32 %v3453, %v3553
        %v3592 = vsub.f32 %v3456, %v3556
        %v3593 = vsub.f32 %v3461, %v3559
        %v3594 = vsub.f32 %v3464, %v3562
        %v3595 = vmul.f32 %v3563, 1.442695
        %v3596 = vpow.pop %v3595
        %v3597 = vmul.f32 %v3564, 1.442695
        %v3598 = vpow.pop %v3597
        %v3599 = vmul.f32 %v3565, 1.442695
        %v3600 = vpow.pop %v3599
        %v3601 = vmul.f32 %v3566, 1.442695
        %v3602 = vpow.pop %v3601
        %v3603 = vmul.f32 %v3567, 1.442695
        %v3604 = vpow.pop %v3603
        %v3605 = vmul.f32 %v3568, 1.442695
        %v3606 = vpow.pop %v3605
        %v3607 = vmul.f32 %v3569, 1.442695
        %v3608 = vpow.pop %v3607
        %v3609 = vmul.f32 %v3570, 1.442695
        %v3610 = vpow.pop %v3609
        %v3611 = vmul.f32 %v3571, 1.442695
        %v3612 = vpow.pop %v3611
        %v3613 = vmul.f32 %v3572, 1.442695
        %v3614 = vpow.pop %v3613
        %v3615 = vmul.f32 %v3573, 1.442695
        %v3616 = vpow.pop %v3615
        %v3617 = vmul.f32 %v3574, 1.442695
        %v3618 = vpow.pop %v3617
        %v3619 = vmul.f32 %v3575, 1.442695
        %v3620 = vpow.pop %v3619
        %v3621 = vmul.f32 %v3576, 1.442695
        %v3622 = vpow.pop %v3621
        %v3623 = vmul.f32 %v3577, 1.442695
        %v3624 = vpow.pop %v3623
        %v3625 = vmul.f32 %v3578, 1.442695
        %v3626 = vpow.pop %v3625
        %v3627 = vmul.f32 %v3579, 1.442695
        %v3628 = vpow.pop %v3627
        %v3629 = vmul.f32 %v3580, 1.442695
        %v3630 = vpow.pop %v3629
        %v3631 = vmul.f32 %v3581, 1.442695
        %v3632 = vpow.pop %v3631
        %v3633 = vmul.f32 %v3582, 1.442695
        %v3634 = vpow.pop %v3633
        %v3635 = vmul.f32 %v3583, 1.442695
        %v3636 = vpow.pop %v3635
        %v3637 = vmul.f32 %v3584, 1.442695
        %v3638 = vpow.pop %v3637
        %v3639 = vmul.f32 %v3585, 1.442695
        %v3640 = vpow.pop %v3639
        %v3641 = vmul.f32 %v3586, 1.442695
        %v3642 = vpow.pop %v3641
        %v3643 = vmul.f32 %v3587, 1.442695
        %v3644 = vpow.pop %v3643
        %v3645 = vmul.f32 %v3588, 1.442695
        %v3646 = vpow.pop %v3645
        %v3647 = vmul.f32 %v3589, 1.442695
        %v3648 = vpow.pop %v3647
        %v3649 = vmul.f32 %v3590, 1.442695
        %v3650 = vpow.pop %v3649
        %v3651 = vmul.f32 %v3591, 1.442695
        %v3652 = vpow.pop %v3651
        %v3653 = vmul.f32 %v3592, 1.442695
        %v3654 = vpow.pop %v3653
        %v3655 = vmul.f32 %v3593, 1.442695
        %v3656 = vpow.pop %v3655
        %v3657 = vmul.f32 %v3594, 1.442695
        %v3658 = vpow.pop %v3657
        %v3659 = vsel %vm588, %v3596, 0.0
        %3660 = vadd.xlane.f32.xlu0 %v3659
        %v3661 = vpop.xlane.xlu0 %3660
        %v3662 = vsel %vm588, %v3598, 0.0
        %3663 = vadd.xlane.f32.xlu0 %v3662
        %v3664 = vpop.xlane.xlu0 %3663
        %v3665 = vsel %vm588, %v3600, 0.0
        %3666 = vadd.xlane.f32.xlu0 %v3665
        %v3667 = vpop.xlane.xlu0 %3666
        %v3668 = vsel %vm588, %v3602, 0.0
        %3669 = vadd.xlane.f32.xlu0 %v3668
        %v3670 = vpop.xlane.xlu0 %3669
        %v3671 = vsel %vm588, %v3604, 0.0
        %3672 = vadd.xlane.f32.xlu0 %v3671
        %v3673 = vpop.xlane.xlu0 %3672
        %v3674 = vsel %vm588, %v3606, 0.0
        %3675 = vadd.xlane.f32.xlu0 %v3674
        %v3676 = vpop.xlane.xlu0 %3675
        %v3677 = vsel %vm588, %v3608, 0.0
        %3678 = vadd.xlane.f32.xlu0 %v3677
        %v3679 = vpop.xlane.xlu0 %3678
        %v3680 = vsel %vm588, %v3610, 0.0
        %3681 = vadd.xlane.f32.xlu0 %v3680
        %v3682 = vpop.xlane.xlu0 %3681
        %v3683 = vsel %vm588, %v3612, 0.0
        %3684 = vadd.xlane.f32.xlu0 %v3683
        %v3685 = vpop.xlane.xlu0 %3684
        %v3686 = vsel %vm588, %v3614, 0.0
        %3687 = vadd.xlane.f32.xlu0 %v3686
        %v3688 = vpop.xlane.xlu0 %3687
        %v3689 = vsel %vm588, %v3616, 0.0
        %3690 = vadd.xlane.f32.xlu0 %v3689
        %v3691 = vpop.xlane.xlu0 %3690
        %v3692 = vsel %vm588, %v3618, 0.0
        %3693 = vadd.xlane.f32.xlu0 %v3692
        %v3694 = vpop.xlane.xlu0 %3693
        %v3695 = vsel %vm588, %v3620, 0.0
        %3696 = vadd.xlane.f32.xlu0 %v3695
        %v3697 = vpop.xlane.xlu0 %3696
        %v3698 = vsel %vm588, %v3622, 0.0
        %3699 = vadd.xlane.f32.xlu0 %v3698
        %v3700 = vpop.xlane.xlu0 %3699
        %v3701 = vsel %vm588, %v3624, 0.0
        %3702 = vadd.xlane.f32.xlu0 %v3701
        %v3703 = vpop.xlane.xlu0 %3702
        %v3704 = vsel %vm588, %v3626, 0.0
        %3705 = vadd.xlane.f32.xlu0 %v3704
        %v3706 = vpop.xlane.xlu0 %3705
        %v3707 = vsel %vm588, %v3628, 0.0
        %3708 = vadd.xlane.f32.xlu0 %v3707
        %v3709 = vpop.xlane.xlu0 %3708
        %v3710 = vsel %vm588, %v3630, 0.0
        %3711 = vadd.xlane.f32.xlu0 %v3710
        %v3712 = vpop.xlane.xlu0 %3711
        %v3713 = vsel %vm588, %v3632, 0.0
        %3714 = vadd.xlane.f32.xlu0 %v3713
        %v3715 = vpop.xlane.xlu0 %3714
        %v3716 = vsel %vm588, %v3634, 0.0
        %3717 = vadd.xlane.f32.xlu0 %v3716
        %v3718 = vpop.xlane.xlu0 %3717
        %v3719 = vsel %vm588, %v3636, 0.0
        %3720 = vadd.xlane.f32.xlu0 %v3719
        %v3721 = vpop.xlane.xlu0 %3720
        %v3722 = vsel %vm588, %v3638, 0.0
        %3723 = vadd.xlane.f32.xlu0 %v3722
        %v3724 = vpop.xlane.xlu0 %3723
        %v3725 = vsel %vm588, %v3640, 0.0
        %3726 = vadd.xlane.f32.xlu0 %v3725
        %v3727 = vpop.xlane.xlu0 %3726
        %v3728 = vsel %vm588, %v3642, 0.0
        %3729 = vadd.xlane.f32.xlu0 %v3728
        %v3730 = vpop.xlane.xlu0 %3729
        %v3731 = vsel %vm588, %v3644, 0.0
        %3732 = vadd.xlane.f32.xlu0 %v3731
        %v3733 = vpop.xlane.xlu0 %3732
        %v3734 = vsel %vm588, %v3646, 0.0
        %3735 = vadd.xlane.f32.xlu0 %v3734
        %v3736 = vpop.xlane.xlu0 %3735
        %v3737 = vsel %vm588, %v3648, 0.0
        %3738 = vadd.xlane.f32.xlu0 %v3737
        %v3739 = vpop.xlane.xlu0 %3738
        %v3740 = vsel %vm588, %v3650, 0.0
        %3741 = vadd.xlane.f32.xlu0 %v3740
        %v3742 = vpop.xlane.xlu0 %3741
        %v3743 = vsel %vm588, %v3652, 0.0
        %3744 = vadd.xlane.f32.xlu0 %v3743
        %v3745 = vpop.xlane.xlu0 %3744
        %v3746 = vsel %vm588, %v3654, 0.0
        %3747 = vadd.xlane.f32.xlu0 %v3746
        %v3748 = vpop.xlane.xlu0 %3747
        %v3749 = vsel %vm588, %v3656, 0.0
        %3750 = vadd.xlane.f32.xlu0 %v3749
        %v3751 = vpop.xlane.xlu0 %3750
        %v3752 = vsel %vm588, %v3658, 0.0
        %3753 = vadd.xlane.f32.xlu0 %v3752
        %v3754 = vpop.xlane.xlu0 %3753
        %v3755 = vrcp.pop %v3661
        %v3756 = vmul.f32 %v3596, %v3755
        %v3757 = vrcp.pop %v3664
        %v3758 = vmul.f32 %v3598, %v3757
        %v3759 = vrcp.pop %v3667
        %v3760 = vmul.f32 %v3600, %v3759
        %v3761 = vrcp.pop %v3670
        %v3762 = vmul.f32 %v3602, %v3761
        %v3763 = vrcp.pop %v3673
        %v3764 = vmul.f32 %v3604, %v3763
        %v3765 = vrcp.pop %v3676
        %v3766 = vmul.f32 %v3606, %v3765
        %v3767 = vrcp.pop %v3679
        %v3768 = vmul.f32 %v3608, %v3767
        %v3769 = vrcp.pop %v3682
        %v3770 = vmul.f32 %v3610, %v3769
        %v3771 = vrcp.pop %v3685
        %v3772 = vmul.f32 %v3612, %v3771
        %v3773 = vrcp.pop %v3688
        %v3774 = vmul.f32 %v3614, %v3773
        %v3775 = vrcp.pop %v3691
        %v3776 = vmul.f32 %v3616, %v3775
        %v3777 = vrcp.pop %v3694
        %v3778 = vmul.f32 %v3618, %v3777
        %v3779 = vrcp.pop %v3697
        %v3780 = vmul.f32 %v3620, %v3779
        %v3781 = vrcp.pop %v3700
        %v3782 = vmul.f32 %v3622, %v3781
        %v3783 = vrcp.pop %v3703
        %v3784 = vmul.f32 %v3624, %v3783
        %v3785 = vrcp.pop %v3706
        %v3786 = vmul.f32 %v3626, %v3785
        %v3787 = vrcp.pop %v3709
        %v3788 = vmul.f32 %v3628, %v3787
        %v3789 = vrcp.pop %v3712
        %v3790 = vmul.f32 %v3630, %v3789
        %v3791 = vrcp.pop %v3715
        %v3792 = vmul.f32 %v3632, %v3791
        %v3793 = vrcp.pop %v3718
        %v3794 = vmul.f32 %v3634, %v3793
        %v3795 = vrcp.pop %v3721
        %v3796 = vmul.f32 %v3636, %v3795
        %v3797 = vrcp.pop %v3724
        %v3798 = vmul.f32 %v3638, %v3797
        %v3799 = vrcp.pop %v3727
        %v3800 = vmul.f32 %v3640, %v3799
        %v3801 = vrcp.pop %v3730
        %v3802 = vmul.f32 %v3642, %v3801
        %v3803 = vrcp.pop %v3733
        %v3804 = vmul.f32 %v3644, %v3803
        %v3805 = vrcp.pop %v3736
        %v3806 = vmul.f32 %v3646, %v3805
        %v3807 = vrcp.pop %v3739
        %v3808 = vmul.f32 %v3648, %v3807
        %v3809 = vrcp.pop %v3742
        %v3810 = vmul.f32 %v3650, %v3809
        %v3811 = vrcp.pop %v3745
        %v3812 = vmul.f32 %v3652, %v3811
        %v3813 = vrcp.pop %v3748
        %v3814 = vmul.f32 %v3654, %v3813
        %v3815 = vrcp.pop %v3751
        %v3816 = vmul.f32 %v3656, %v3815
        %v3817 = vrcp.pop %v3754
        %v3818 = vmul.f32 %v3658, %v3817
        %v3819 = vpack.c.bf16 %v3758, %v3756
        %v3820 = vpack.c.bf16 %v3762, %v3760
        %v3821 = vpack.c.bf16 %v3766, %v3764
        %v3822 = vpack.c.bf16 %v3770, %v3768
        %v3823 = vpack.c.bf16 %v3774, %v3772
        %v3824 = vpack.c.bf16 %v3778, %v3776
        %v3825 = vpack.c.bf16 %v3782, %v3780
        %v3826 = vpack.c.bf16 %v3786, %v3784
        %v3827 = vpack.c.bf16 %v3790, %v3788
        %v3828 = vpack.c.bf16 %v3794, %v3792
        %v3829 = vpack.c.bf16 %v3798, %v3796
        %v3830 = vpack.c.bf16 %v3802, %v3800
        %v3831 = vpack.c.bf16 %v3806, %v3804
        %v3832 = vpack.c.bf16 %v3810, %v3808
        %v3833 = vpack.c.bf16 %v3814, %v3812
        %v3834 = vpack.c.bf16 %v3818, %v3816
        %3835 = vrot.lane.b32.xlu0 %v3230, 64
        %v3836 = vpop.permute.xlu0 %3835
        %3837 = vrot.lane.b32.xlu0 %v3231, 64
        %v3838 = vpop.permute.xlu0 %3837
        %3839 = vrot.lane.b32.xlu0 %v3232, 64
        %v3840 = vpop.permute.xlu0 %3839
        %3841 = vrot.lane.b32.xlu0 %v3233, 64
        %v3842 = vpop.permute.xlu0 %3841
        %v3848 = vsel %vm588, %v3819, 0
        %v3851 = vsel %vm588, %v3820, 0
        %v3854 = vsel %vm588, %v3821, 0
        %v3857 = vsel %vm588, %v3822, 0
        %v3860 = vsel %vm588, %v3823, 0
        %v3863 = vsel %vm588, %v3824, 0
        %v3866 = vsel %vm588, %v3825, 0
        %v3869 = vsel %vm588, %v3826, 0
        %v3872 = vsel %vm588, %v3827, 0
        %v3875 = vsel %vm588, %v3828, 0
        %v3878 = vsel %vm588, %v3829, 0
        %v3881 = vsel %vm588, %v3830, 0
        %v3884 = vsel %vm588, %v3831, 0
        %v3887 = vsel %vm588, %v3832, 0
        %v3890 = vsel %vm588, %v3833, 0
        %v3893 = vsel %vm588, %v3834, 0
        %3895 = vmatprep.subr.bf16.mxu0 0
        %3896 = vmatpush1.bf16.msra.mxu0 0
        %3897 = vmatprep.subr.bf16.mxu0 0
        %3898 = vmatpush1.bf16.msra.mxu0 0
        %3899 = vmatprep.subr.bf16.mxu0 0
        %3900 = vmatpush1.bf16.msra.mxu0 0
        %3901 = vmatprep.subr.bf16.mxu0 0
        %3902 = vmatpush1.bf16.msra.mxu0 0
        %3903 = vmatprep.subr.bf16.mxu0 0
        %3904 = vmatpush1.bf16.msra.mxu0 %v3842
        %3905 = vmatprep.subr.bf16.mxu0 0
        %3906 = vmatpush1.bf16.msra.mxu0 %v3840
        %3907 = vmatprep.subr.bf16.mxu0 0
        %3908 = vmatpush1.bf16.msra.mxu0 %v3838
        %3909 = vmatprep.subr.bf16.mxu0 0
        %3910 = vmatpush1.bf16.msra.mxu0 %v3836
        %3911 = vmatprep.subr.bf16.mxu0 0
        %3912 = vmatpush2.bf16.msra.mxu0 0
        %3913 = vmatprep.subr.bf16.mxu0 0
        %3914 = vmatpush2.bf16.msra.mxu0 0
        %3915 = vmatprep.subr.bf16.mxu0 0
        %3916 = vmatpush2.bf16.msra.mxu0 0
        %3917 = vmatprep.subr.bf16.mxu0 0
        %3918 = vmatpush2.bf16.msra.mxu0 0
        %3919 = vmatprep.subr.bf16.mxu0 0
        %3920 = vmatpush2.bf16.msra.mxu0 0
        %3921 = vmatprep.subr.bf16.mxu0 0
        %3922 = vmatpush2.bf16.msra.mxu0 0
        %3923 = vmatprep.subr.bf16.mxu0 0
        %3924 = vmatpush2.bf16.msra.mxu0 0
        %3925 = vmatprep.subr.bf16.mxu0 0
        %3926 = vmatpush2.bf16.msra.mxu0 0
        %3927 = vmatprep.mubr.bf16.mxu0 0
        %3928 = vmatmul.mubr.bf16.gmra.mxu0 %v3848
        %v3929 = vpop.f32.mrf.mxu0
        %v3930 = vadd.f32 0.0, %v3929
        %v3931 = vpop.f32.mrf.mxu0
        %v3932 = vpop.f32.mrf.mxu0
        %v3933 = vadd.f32 0.0, %v3932
        %v3934 = vpop.f32.mrf.mxu0
        %3935 = vmatprep.mubr.bf16.mxu0 0
        %3936 = vmatmul.mubr.bf16.gmra.mxu0 %v3851
        %v3937 = vpop.f32.mrf.mxu0
        %v3938 = vadd.f32 0.0, %v3937
        %v3939 = vpop.f32.mrf.mxu0
        %v3940 = vpop.f32.mrf.mxu0
        %v3941 = vadd.f32 0.0, %v3940
        %v3942 = vpop.f32.mrf.mxu0
        %3943 = vmatprep.mubr.bf16.mxu0 0
        %3944 = vmatmul.mubr.bf16.gmra.mxu0 %v3854
        %v3945 = vpop.f32.mrf.mxu0
        %v3946 = vadd.f32 0.0, %v3945
        %v3947 = vpop.f32.mrf.mxu0
        %v3948 = vpop.f32.mrf.mxu0
        %v3949 = vadd.f32 0.0, %v3948
        %v3950 = vpop.f32.mrf.mxu0
        %3951 = vmatprep.mubr.bf16.mxu0 0
        %3952 = vmatmul.mubr.bf16.gmra.mxu0 %v3857
        %v3953 = vpop.f32.mrf.mxu0
        %v3954 = vadd.f32 0.0, %v3953
        %v3955 = vpop.f32.mrf.mxu0
        %v3956 = vpop.f32.mrf.mxu0
        %v3957 = vadd.f32 0.0, %v3956
        %v3958 = vpop.f32.mrf.mxu0
        %3959 = vmatprep.mubr.bf16.mxu0 0
        %3960 = vmatmul.mubr.bf16.gmra.mxu0 %v3860
        %v3961 = vpop.f32.mrf.mxu0
        %v3962 = vadd.f32 0.0, %v3961
        %v3963 = vpop.f32.mrf.mxu0
        %v3964 = vpop.f32.mrf.mxu0
        %v3965 = vadd.f32 0.0, %v3964
        %v3966 = vpop.f32.mrf.mxu0
        %3967 = vmatprep.mubr.bf16.mxu0 0
        %3968 = vmatmul.mubr.bf16.gmra.mxu0 %v3863
        %v3969 = vpop.f32.mrf.mxu0
        %v3970 = vadd.f32 0.0, %v3969
        %v3971 = vpop.f32.mrf.mxu0
        %v3972 = vpop.f32.mrf.mxu0
        %v3973 = vadd.f32 0.0, %v3972
        %v3974 = vpop.f32.mrf.mxu0
        %3975 = vmatprep.mubr.bf16.mxu0 0
        %3976 = vmatmul.mubr.bf16.gmra.mxu0 %v3866
        %v3977 = vpop.f32.mrf.mxu0
        %v3978 = vadd.f32 0.0, %v3977
        %v3979 = vpop.f32.mrf.mxu0
        %v3980 = vpop.f32.mrf.mxu0
        %v3981 = vadd.f32 0.0, %v3980
        %v3982 = vpop.f32.mrf.mxu0
        %3983 = vmatprep.mubr.bf16.mxu0 0
        %3984 = vmatmul.mubr.bf16.gmra.mxu0 %v3869
        %v3985 = vpop.f32.mrf.mxu0
        %v3986 = vadd.f32 0.0, %v3985
        %v3987 = vpop.f32.mrf.mxu0
        %v3988 = vpop.f32.mrf.mxu0
        %v3989 = vadd.f32 0.0, %v3988
        %v3990 = vpop.f32.mrf.mxu0
        %3991 = vmatprep.mubr.bf16.mxu0 0
        %3992 = vmatmul.mubr.bf16.gmra.mxu0 %v3872
        %v3993 = vpop.f32.mrf.mxu0
        %v3994 = vadd.f32 0.0, %v3993
        %v3995 = vpop.f32.mrf.mxu0
        %v3996 = vpop.f32.mrf.mxu0
        %v3997 = vadd.f32 0.0, %v3996
        %v3998 = vpop.f32.mrf.mxu0
        %3999 = vmatprep.mubr.bf16.mxu0 0
        %4000 = vmatmul.mubr.bf16.gmra.mxu0 %v3875
        %v4001 = vpop.f32.mrf.mxu0
        %v4002 = vadd.f32 0.0, %v4001
        %v4003 = vpop.f32.mrf.mxu0
        %v4004 = vpop.f32.mrf.mxu0
        %v4005 = vadd.f32 0.0, %v4004
        %v4006 = vpop.f32.mrf.mxu0
        %4007 = vmatprep.mubr.bf16.mxu0 0
        %4008 = vmatmul.mubr.bf16.gmra.mxu0 %v3878
        %v4009 = vpop.f32.mrf.mxu0
        %v4010 = vadd.f32 0.0, %v4009
        %v4011 = vpop.f32.mrf.mxu0
        %v4012 = vpop.f32.mrf.mxu0
        %v4013 = vadd.f32 0.0, %v4012
        %v4014 = vpop.f32.mrf.mxu0
        %4015 = vmatprep.mubr.bf16.mxu0 0
        %4016 = vmatmul.mubr.bf16.gmra.mxu0 %v3881
        %v4017 = vpop.f32.mrf.mxu0
        %v4018 = vadd.f32 0.0, %v4017
        %v4019 = vpop.f32.mrf.mxu0
        %v4020 = vpop.f32.mrf.mxu0
        %v4021 = vadd.f32 0.0, %v4020
        %v4022 = vpop.f32.mrf.mxu0
        %4023 = vmatprep.mubr.bf16.mxu0 0
        %4024 = vmatmul.mubr.bf16.gmra.mxu0 %v3884
        %v4025 = vpop.f32.mrf.mxu0
        %v4026 = vadd.f32 0.0, %v4025
        %v4027 = vpop.f32.mrf.mxu0
        %v4028 = vpop.f32.mrf.mxu0
        %v4029 = vadd.f32 0.0, %v4028
        %v4030 = vpop.f32.mrf.mxu0
        %4031 = vmatprep.mubr.bf16.mxu0 0
        %4032 = vmatmul.mubr.bf16.gmra.mxu0 %v3887
        %v4033 = vpop.f32.mrf.mxu0
        %v4034 = vadd.f32 0.0, %v4033
        %v4035 = vpop.f32.mrf.mxu0
        %v4036 = vpop.f32.mrf.mxu0
        %v4037 = vadd.f32 0.0, %v4036
        %v4038 = vpop.f32.mrf.mxu0
        %4039 = vmatprep.mubr.bf16.mxu0 0
        %4040 = vmatmul.mubr.bf16.gmra.mxu0 %v3890
        %v4041 = vpop.f32.mrf.mxu0
        %v4042 = vadd.f32 0.0, %v4041
        %v4043 = vpop.f32.mrf.mxu0
        %v4044 = vpop.f32.mrf.mxu0
        %v4045 = vadd.f32 0.0, %v4044
        %v4046 = vpop.f32.mrf.mxu0
        %4047 = vmatprep.mubr.bf16.mxu0 0
        %4048 = vmatmul.mubr.bf16.gmra.mxu0 %v3893
        %v4049 = vpop.f32.mrf.mxu0
        %v4050 = vadd.f32 0.0, %v4049
        %v4051 = vpop.f32.mrf.mxu0
        %v4052 = vpop.f32.mrf.mxu0
        %v4053 = vadd.f32 0.0, %v4052
        %v4054 = vpop.f32.mrf.mxu0
        %4055 = vdwg.mxu0
        %v4056 = vld [vmem:[%s6] sm:$0x1]
        %v4057 = vld [vmem:[%s6 + $0x1] sm:$0x1]
        %v4058 = vld [vmem:[%s6 + $0x2] sm:$0x1]
        %v4059 = vld [vmem:[%s6 + $0x3] sm:$0x1]
        %v4064 = vlaneseq
        %v4065 = vshrl.u32 %v4064, 7
        %v4066 = vsub.s32 0, %v4065
        %v4067 = vrot.slane %v4056, %v4066
        %v4068 = vlaneseq
        %v4069 = vshrl.u32 %v4068, 7
        %v4070 = vsub.s32 0, %v4069
        %v4071 = vrot.slane %v4057, %v4070
        %v4072 = vlaneseq
        %v4073 = vshrl.u32 %v4072, 7
        %v4074 = vsub.s32 0, %v4073
        %v4075 = vrot.slane %v4058, %v4074
        %v4076 = vlaneseq
        %v4077 = vshrl.u32 %v4076, 7
        %v4078 = vsub.s32 0, %v4077
        %v4079 = vrot.slane %v4059, %v4078
        %v4084 = vmul.f32 %v3930, %v4067
        %v4085 = vmul.f32 %v3933, %v4067
        %v4086 = vmul.f32 %v3938, %v4067
        %v4087 = vmul.f32 %v3941, %v4067
        %v4088 = vmul.f32 %v3946, %v4067
        %v4089 = vmul.f32 %v3949, %v4067
        %v4090 = vmul.f32 %v3954, %v4067
        %v4091 = vmul.f32 %v3957, %v4067
        %v4092 = vmul.f32 %v3962, %v4071
        %v4093 = vmul.f32 %v3965, %v4071
        %v4094 = vmul.f32 %v3970, %v4071
        %v4095 = vmul.f32 %v3973, %v4071
        %v4096 = vmul.f32 %v3978, %v4071
        %v4097 = vmul.f32 %v3981, %v4071
        %v4098 = vmul.f32 %v3986, %v4071
        %v4099 = vmul.f32 %v3989, %v4071
        %v4100 = vmul.f32 %v3994, %v4075
        %v4101 = vmul.f32 %v3997, %v4075
        %v4102 = vmul.f32 %v4002, %v4075
        %v4103 = vmul.f32 %v4005, %v4075
        %v4104 = vmul.f32 %v4010, %v4075
        %v4105 = vmul.f32 %v4013, %v4075
        %v4106 = vmul.f32 %v4018, %v4075
        %v4107 = vmul.f32 %v4021, %v4075
        %v4108 = vmul.f32 %v4026, %v4079
        %v4109 = vmul.f32 %v4029, %v4079
        %v4110 = vmul.f32 %v4034, %v4079
        %v4111 = vmul.f32 %v4037, %v4079
        %v4112 = vmul.f32 %v4042, %v4079
        %v4113 = vmul.f32 %v4045, %v4079
        %v4114 = vmul.f32 %v4050, %v4079
        %v4115 = vmul.f32 %v4053, %v4079
        %v4116 = vsel %vm577, %v4084, 0.0
        %v4117 = vsel %vm577, %v4092, 0.0
        %v4118 = vadd.f32 %v4116, %v4117
        %v4119 = vsel %vm577, %v4100, 0.0
        %v4120 = vadd.f32 %v4118, %v4119
        %v4121 = vsel %vm577, %v4108, 0.0
        %v4122 = vadd.f32 %v4120, %v4121
        %v4123 = vsel %vm577, %v4085, 0.0
        %v4124 = vsel %vm577, %v4093, 0.0
        %v4125 = vadd.f32 %v4123, %v4124
        %v4126 = vsel %vm577, %v4101, 0.0
        %v4127 = vadd.f32 %v4125, %v4126
        %v4128 = vsel %vm577, %v4109, 0.0
        %v4129 = vadd.f32 %v4127, %v4128
        %v4130 = vsel %vm577, %v4086, 0.0
        %v4131 = vsel %vm577, %v4094, 0.0
        %v4132 = vadd.f32 %v4130, %v4131
        %v4133 = vsel %vm577, %v4102, 0.0
        %v4134 = vadd.f32 %v4132, %v4133
        %v4135 = vsel %vm577, %v4110, 0.0
        %v4136 = vadd.f32 %v4134, %v4135
        %v4137 = vsel %vm577, %v4087, 0.0
        %v4138 = vsel %vm577, %v4095, 0.0
        %v4139 = vadd.f32 %v4137, %v4138
        %v4140 = vsel %vm577, %v4103, 0.0
        %v4141 = vadd.f32 %v4139, %v4140
        %v4142 = vsel %vm577, %v4111, 0.0
        %v4143 = vadd.f32 %v4141, %v4142
        %v4144 = vsel %vm577, %v4088, 0.0
        %v4145 = vsel %vm577, %v4096, 0.0
        %v4146 = vadd.f32 %v4144, %v4145
        %v4147 = vsel %vm577, %v4104, 0.0
        %v4148 = vadd.f32 %v4146, %v4147
        %v4149 = vsel %vm577, %v4112, 0.0
        %v4150 = vadd.f32 %v4148, %v4149
        %v4151 = vsel %vm577, %v4089, 0.0
        %v4152 = vsel %vm577, %v4097, 0.0
        %v4153 = vadd.f32 %v4151, %v4152
        %v4154 = vsel %vm577, %v4105, 0.0
        %v4155 = vadd.f32 %v4153, %v4154
        %v4156 = vsel %vm577, %v4113, 0.0
        %v4157 = vadd.f32 %v4155, %v4156
        %v4158 = vsel %vm577, %v4090, 0.0
        %v4159 = vsel %vm577, %v4098, 0.0
        %v4160 = vadd.f32 %v4158, %v4159
        %v4161 = vsel %vm577, %v4106, 0.0
        %v4162 = vadd.f32 %v4160, %v4161
        %v4163 = vsel %vm577, %v4114, 0.0
        %v4164 = vadd.f32 %v4162, %v4163
        %v4165 = vsel %vm577, %v4091, 0.0
        %v4166 = vsel %vm577, %v4099, 0.0
        %v4167 = vadd.f32 %v4165, %v4166
        %v4168 = vsel %vm577, %v4107, 0.0
        %v4169 = vadd.f32 %v4167, %v4168
        %v4170 = vsel %vm577, %v4115, 0.0
        %v4171 = vadd.f32 %v4169, %v4170
        %v4172 = vpack.c.bf16 %v4129, %v4122
        %v4173 = vpack.c.bf16 %v4143, %v4136
        %v4174 = vpack.c.bf16 %v4157, %v4150
        %v4175 = vpack.c.bf16 %v4171, %v4164
        %v4176 = vld [vmem:[%s14] sm:$0xf]
        %v4177 = vld [vmem:[%s14 + $0x4] sm:$0xf]
        %v4178 = vld [vmem:[%s14 + $0x8] sm:$0xf]
        %v4179 = vld [vmem:[%s14 + $0xc] sm:$0xf]
        %v4180 = vld [vmem:[%s15] sm:$0x1]
        %v4182 = vlaneseq
        %v4183 = vshrl.u32 %v4182, 7
        %v4184 = vsub.s32 0, %v4183
        %v4185 = vrot.slane %v4180, %v4184
        %v4191 = vunpack.c.l.b16 %v4176
        %v4192 = vunpack.c.l.b16 %v4177
        %v4193 = vunpack.c.l.b16 %v4178
        %v4194 = vunpack.c.l.b16 %v4179
        %v4195 = vpack.c.b16 %v4192, %v4191
        %v4196 = vpack.c.b16 %v4194, %v4193
        %v4200 = vsel %vm577, %v4172, 0
        %v4203 = vsel %vm577, %v4173, 0
        %v4206 = vsel %vm577, %v4174, 0
        %v4209 = vsel %vm577, %v4175, 0
        %4211 = vmatprep.subr.bf16.mxu0 0
        %4212 = vmatpush1.bf16.msra.mxu0 0
        %4213 = vmatprep.subr.bf16.mxu0 0
        %4214 = vmatpush1.bf16.msra.mxu0 0
        %4215 = vmatprep.subr.bf16.mxu0 0
        %4216 = vmatpush1.bf16.msra.mxu0 0
        %4217 = vmatprep.subr.bf16.mxu0 0
        %4218 = vmatpush1.bf16.msra.mxu0 0
        %4219 = vmatprep.subr.bf16.mxu0 0
        %4220 = vmatpush1.bf16.msra.mxu0 0
        %4221 = vmatprep.subr.bf16.mxu0 0
        %4222 = vmatpush1.bf16.msra.mxu0 0
        %4223 = vmatprep.subr.bf16.mxu0 0
        %4224 = vmatpush1.bf16.msra.mxu0 %v4196
        %4225 = vmatprep.subr.bf16.mxu0 0
        %4226 = vmatpush1.bf16.msra.mxu0 %v4195
        %4227 = vmatprep.subr.bf16.mxu0 0
        %4228 = vmatpush2.bf16.msra.mxu0 0
        %4229 = vmatprep.subr.bf16.mxu0 0
        %4230 = vmatpush2.bf16.msra.mxu0 0
        %4231 = vmatprep.subr.bf16.mxu0 0
        %4232 = vmatpush2.bf16.msra.mxu0 0
        %4233 = vmatprep.subr.bf16.mxu0 0
        %4234 = vmatpush2.bf16.msra.mxu0 0
        %4235 = vmatprep.subr.bf16.mxu0 0
        %4236 = vmatpush2.bf16.msra.mxu0 0
        %4237 = vmatprep.subr.bf16.mxu0 0
        %4238 = vmatpush2.bf16.msra.mxu0 0
        %4239 = vmatprep.subr.bf16.mxu0 0
        %4240 = vmatpush2.bf16.msra.mxu0 0
        %4241 = vmatprep.subr.bf16.mxu0 0
        %4242 = vmatpush2.bf16.msra.mxu0 0
        %4243 = vmatprep.mubr.bf16.mxu0 0
        %4244 = vmatmul.mubr.bf16.gmra.mxu0 %v4200
        %v4245 = vpop.f32.mrf.mxu0
        %v4246 = vadd.f32 %v4185, %v4245
        %v4247 = vpop.f32.mrf.mxu0
        %v4248 = vpop.f32.mrf.mxu0
        %v4249 = vadd.f32 %v4185, %v4248
        %v4250 = vpop.f32.mrf.mxu0
        %4251 = vmatprep.mubr.bf16.mxu0 0
        %4252 = vmatmul.mubr.bf16.gmra.mxu0 %v4203
        %v4253 = vpop.f32.mrf.mxu0
        %v4254 = vadd.f32 %v4185, %v4253
        %v4255 = vpop.f32.mrf.mxu0
        %v4256 = vpop.f32.mrf.mxu0
        %v4257 = vadd.f32 %v4185, %v4256
        %v4258 = vpop.f32.mrf.mxu0
        %4259 = vmatprep.mubr.bf16.mxu0 0
        %4260 = vmatmul.mubr.bf16.gmra.mxu0 %v4206
        %v4261 = vpop.f32.mrf.mxu0
        %v4262 = vadd.f32 %v4185, %v4261
        %v4263 = vpop.f32.mrf.mxu0
        %v4264 = vpop.f32.mrf.mxu0
        %v4265 = vadd.f32 %v4185, %v4264
        %v4266 = vpop.f32.mrf.mxu0
        %4267 = vmatprep.mubr.bf16.mxu0 0
        %4268 = vmatmul.mubr.bf16.gmra.mxu0 %v4209
        %v4269 = vpop.f32.mrf.mxu0
        %v4270 = vadd.f32 %v4185, %v4269
        %v4271 = vpop.f32.mrf.mxu0
        %v4272 = vpop.f32.mrf.mxu0
        %v4273 = vadd.f32 %v4185, %v4272
        %v4274 = vpop.f32.mrf.mxu0
        %4275 = vdwg.mxu0
        %v4276 = vadd.f32 %v4246, %v2850
        %v4277 = vadd.f32 %v4249, %v2851
        %v4278 = vadd.f32 %v4254, %v2852
        %v4279 = vadd.f32 %v4257, %v2853
        %v4280 = vadd.f32 %v4262, %v2854
        %v4281 = vadd.f32 %v4265, %v2855
        %v4282 = vadd.f32 %v4270, %v2856
        %v4283 = vadd.f32 %v4273, %v2857
        %s4284 = scalar_lea.vmem %s7, 4
        %v4285 = vld [vmem:[%s4284] sm:$0x1]
        %s4286 = scalar_lea.vmem %s7, 5
        %v4287 = vld [vmem:[%s4286] sm:$0x1]
        %v4288 = vsel %vm577, %v4276, 0.0
        %v4289 = vsel %vm577, %v4277, 0.0
        %v4290 = vadd.f32 %v4288, %v4289
        %v4291 = vsel %vm577, %v4278, 0.0
        %v4292 = vadd.f32 %v4290, %v4291
        %v4293 = vsel %vm577, %v4279, 0.0
        %v4294 = vadd.f32 %v4292, %v4293
        %v4295 = vsel %vm577, %v4280, 0.0
        %v4296 = vadd.f32 %v4294, %v4295
        %v4297 = vsel %vm577, %v4281, 0.0
        %v4298 = vadd.f32 %v4296, %v4297
        %v4299 = vsel %vm577, %v4282, 0.0
        %v4300 = vadd.f32 %v4298, %v4299
        %v4301 = vsel %vm577, %v4283, 0.0
        %v4302 = vadd.f32 %v4300, %v4301
        %v4303 = vrot.slane %v4302, 4
        %v4304 = vadd.f32 %v4302, %v4303
        %v4305 = vrot.slane %v4304, 2
        %v4306 = vadd.f32 %v4304, %v4305
        %v4307 = vrot.slane %v4306, 1
        %v4308 = vadd.f32 %v4306, %v4307
        %v4309 = vmul.f32 %v4276, %v4276
        %v4310 = vmul.f32 %v4277, %v4277
        %v4311 = vmul.f32 %v4278, %v4278
        %v4312 = vmul.f32 %v4279, %v4279
        %v4313 = vmul.f32 %v4280, %v4280
        %v4314 = vmul.f32 %v4281, %v4281
        %v4315 = vmul.f32 %v4282, %v4282
        %v4316 = vmul.f32 %v4283, %v4283
        %v4317 = vsel %vm577, %v4309, 0.0
        %v4318 = vsel %vm577, %v4310, 0.0
        %v4319 = vadd.f32 %v4317, %v4318
        %v4320 = vsel %vm577, %v4311, 0.0
        %v4321 = vadd.f32 %v4319, %v4320
        %v4322 = vsel %vm577, %v4312, 0.0
        %v4323 = vadd.f32 %v4321, %v4322
        %v4324 = vsel %vm577, %v4313, 0.0
        %v4325 = vadd.f32 %v4323, %v4324
        %v4326 = vsel %vm577, %v4314, 0.0
        %v4327 = vadd.f32 %v4325, %v4326
        %v4328 = vsel %vm577, %v4315, 0.0
        %v4329 = vadd.f32 %v4327, %v4328
        %v4330 = vsel %vm577, %v4316, 0.0
        %v4331 = vadd.f32 %v4329, %v4330
        %v4332 = vrot.slane %v4331, 4
        %v4333 = vadd.f32 %v4331, %v4332
        %v4334 = vrot.slane %v4333, 2
        %v4335 = vadd.f32 %v4333, %v4334
        %v4336 = vrot.slane %v4335, 1
        %v4337 = vadd.f32 %v4335, %v4336
        %v4338 = vsel %vm723, %v4308, %v4337
        %v4340 = vsel %vm577, %v4338, 0
        %4342 = vmatprep.subr.mxu0 0.0
        %4343 = vmatpush1.msra.mxu0 0.0
        %4344 = vmatprep.subr.mxu0 0.0
        %4345 = vmatpush1.msra.mxu0 0.0
        %4346 = vmatprep.subr.mxu0 0.0
        %4347 = vmatpush1.msra.mxu0 0.0
        %4348 = vmatprep.subr.mxu0 0.0
        %4349 = vmatpush1.msra.mxu0 0.0
        %4350 = vmatprep.subr.mxu0 0.0
        %4351 = vmatpush1.msra.mxu0 0.0
        %4352 = vmatprep.subr.mxu0 0.0
        %4353 = vmatpush1.msra.mxu0 0.0
        %4354 = vmatprep.subr.mxu0 0.0
        %4355 = vmatpush1.msra.mxu0 0.0
        %4356 = vmatprep.subr.mxu0 0.0
        %4357 = vmatpush1.msra.mxu0 0.0
        %4358 = vmatprep.subr.mxu0 0.0
        %4359 = vmatpush1.msra.mxu0 0.0
        %4360 = vmatprep.subr.mxu0 0.0
        %4361 = vmatpush1.msra.mxu0 0.0
        %4362 = vmatprep.subr.mxu0 0.0
        %4363 = vmatpush1.msra.mxu0 0.0
        %4364 = vmatprep.subr.mxu0 0.0
        %4365 = vmatpush1.msra.mxu0 0.0
        %4366 = vmatprep.subr.mxu0 0.0
        %4367 = vmatpush1.msra.mxu0 %v552
        %4368 = vmatprep.subr.mxu0 0.0
        %4369 = vmatpush1.msra.mxu0 %v551
        %4370 = vmatprep.subr.mxu0 0.0
        %4371 = vmatpush1.msra.mxu0 %v550
        %4372 = vmatprep.subr.mxu0 0.0
        %4373 = vmatpush1.msra.mxu0 %v549
        %4374 = vmatprep.subr.mxu0 0.0
        %4375 = vmatpush2.msra.mxu0 0.0
        %4376 = vmatprep.subr.mxu0 0.0
        %4377 = vmatpush2.msra.mxu0 0.0
        %4378 = vmatprep.subr.mxu0 0.0
        %4379 = vmatpush2.msra.mxu0 0.0
        %4380 = vmatprep.subr.mxu0 0.0
        %4381 = vmatpush2.msra.mxu0 0.0
        %4382 = vmatprep.subr.mxu0 0.0
        %4383 = vmatpush2.msra.mxu0 0.0
        %4384 = vmatprep.subr.mxu0 0.0
        %4385 = vmatpush2.msra.mxu0 0.0
        %4386 = vmatprep.subr.mxu0 0.0
        %4387 = vmatpush2.msra.mxu0 0.0
        %4388 = vmatprep.subr.mxu0 0.0
        %4389 = vmatpush2.msra.mxu0 0.0
        %4390 = vmatprep.subr.mxu0 0.0
        %4391 = vmatpush2.msra.mxu0 0.0
        %4392 = vmatprep.subr.mxu0 0.0
        %4393 = vmatpush2.msra.mxu0 0.0
        %4394 = vmatprep.subr.mxu0 0.0
        %4395 = vmatpush2.msra.mxu0 0.0
        %4396 = vmatprep.subr.mxu0 0.0
        %4397 = vmatpush2.msra.mxu0 0.0
        %4398 = vmatprep.subr.mxu0 0.0
        %4399 = vmatpush2.msra.mxu0 0.0
        %4400 = vmatprep.subr.mxu0 0.0
        %4401 = vmatpush2.msra.mxu0 0.0
        %4402 = vmatprep.subr.mxu0 0.0
        %4403 = vmatpush2.msra.mxu0 0.0
        %4404 = vmatprep.subr.mxu0 0.0
        %4405 = vmatpush2.msra.mxu0 0.0
        %4406 = vmatprep.mubr.f32.mxu0 0.0
        %4407 = vmatmul.mubr.f32.gmra.mxu0 %v4340
        %v4408 = vpop.f32.mrf.mxu0
        %v4409 = vadd.f32 0.0, %v4408
        %v4410 = vpop.f32.mrf.mxu0
        %4411 = vdwg.mxu0
        %v4412 = vmul.f32 %v4409, %v4409
        %v4414 = vrot.slane %v4412, 7
        %v4416 = vsub.f32 %v4409, %v4414
        %v4417 = vmax.f32 %v4416, 0.0
        %v4418 = vlaneseq
        %v4419 = vshrl.u32 %v4418, 7
        %v4420 = vsub.s32 0, %v4419
        %v4421 = vrot.slane %v4409, %v4420
        %v4422 = vsub.f32 %v4276, %v4421
        %v4423 = vsub.f32 %v4277, %v4421
        %v4424 = vsub.f32 %v4278, %v4421
        %v4425 = vsub.f32 %v4279, %v4421
        %v4426 = vsub.f32 %v4280, %v4421
        %v4427 = vsub.f32 %v4281, %v4421
        %v4428 = vsub.f32 %v4282, %v4421
        %v4429 = vsub.f32 %v4283, %v4421
        %v4430 = vadd.f32 %v4417, 1e-06
        %v4431 = vrsqrt.pop %v4430
        %v4432 = vlaneseq
        %v4433 = vshrl.u32 %v4432, 7
        %v4434 = vsub.s32 1, %v4433
        %v4435 = vrot.slane %v4431, %v4434
        %v4436 = vmul.f32 %v4422, %v4435
        %v4437 = vmul.f32 %v4423, %v4435
        %v4438 = vmul.f32 %v4424, %v4435
        %v4439 = vmul.f32 %v4425, %v4435
        %v4440 = vmul.f32 %v4426, %v4435
        %v4441 = vmul.f32 %v4427, %v4435
        %v4442 = vmul.f32 %v4428, %v4435
        %v4443 = vmul.f32 %v4429, %v4435
        %v4445 = vlaneseq
        %v4446 = vshrl.u32 %v4445, 7
        %v4447 = vsub.s32 0, %v4446
        %v4448 = vrot.slane %v4285, %v4447
        %v4450 = vmul.f32 %v4436, %v4448
        %v4451 = vmul.f32 %v4437, %v4448
        %v4452 = vmul.f32 %v4438, %v4448
        %v4453 = vmul.f32 %v4439, %v4448
        %v4454 = vmul.f32 %v4440, %v4448
        %v4455 = vmul.f32 %v4441, %v4448
        %v4456 = vmul.f32 %v4442, %v4448
        %v4457 = vmul.f32 %v4443, %v4448
        %v4459 = vlaneseq
        %v4460 = vshrl.u32 %v4459, 7
        %v4461 = vsub.s32 0, %v4460
        %v4462 = vrot.slane %v4287, %v4461
        %v4464 = vadd.f32 %v4450, %v4462
        %v4465 = vadd.f32 %v4451, %v4462
        %v4466 = vadd.f32 %v4452, %v4462
        %v4467 = vadd.f32 %v4453, %v4462
        %v4468 = vadd.f32 %v4454, %v4462
        %v4469 = vadd.f32 %v4455, %v4462
        %v4470 = vadd.f32 %v4456, %v4462
        %v4471 = vadd.f32 %v4457, %v4462
        %v4472 = vxor.u32 %v4464, 2147483648
        %v4473 = vxor.u32 %v4465, 2147483648
        %v4474 = vxor.u32 %v4466, 2147483648
        %v4475 = vxor.u32 %v4467, 2147483648
        %v4476 = vxor.u32 %v4468, 2147483648
        %v4477 = vxor.u32 %v4469, 2147483648
        %v4478 = vxor.u32 %v4470, 2147483648
        %v4479 = vxor.u32 %v4471, 2147483648
        %v4480 = vmul.f32 %v4472, 1.442695
        %v4481 = vpow.pop %v4480
        %v4482 = vmul.f32 %v4473, 1.442695
        %v4483 = vpow.pop %v4482
        %v4484 = vmul.f32 %v4474, 1.442695
        %v4485 = vpow.pop %v4484
        %v4486 = vmul.f32 %v4475, 1.442695
        %v4487 = vpow.pop %v4486
        %v4488 = vmul.f32 %v4476, 1.442695
        %v4489 = vpow.pop %v4488
        %v4490 = vmul.f32 %v4477, 1.442695
        %v4491 = vpow.pop %v4490
        %v4492 = vmul.f32 %v4478, 1.442695
        %v4493 = vpow.pop %v4492
        %v4494 = vmul.f32 %v4479, 1.442695
        %v4495 = vpow.pop %v4494
        %v4496 = vadd.f32 %v4481, 1.0
        %v4497 = vadd.f32 %v4483, 1.0
        %v4498 = vadd.f32 %v4485, 1.0
        %v4499 = vadd.f32 %v4487, 1.0
        %v4500 = vadd.f32 %v4489, 1.0
        %v4501 = vadd.f32 %v4491, 1.0
        %v4502 = vadd.f32 %v4493, 1.0
        %v4503 = vadd.f32 %v4495, 1.0
        %v4504 = vrcp.pop %v4496
        %v4505 = vmul.f32 1.0, %v4504
        %v4506 = vrcp.pop %v4497
        %v4507 = vmul.f32 1.0, %v4506
        %v4508 = vrcp.pop %v4498
        %v4509 = vmul.f32 1.0, %v4508
        %v4510 = vrcp.pop %v4499
        %v4511 = vmul.f32 1.0, %v4510
        %v4512 = vrcp.pop %v4500
        %v4513 = vmul.f32 1.0, %v4512
        %v4514 = vrcp.pop %v4501
        %v4515 = vmul.f32 1.0, %v4514
        %v4516 = vrcp.pop %v4502
        %v4517 = vmul.f32 1.0, %v4516
        %v4518 = vrcp.pop %v4503
        %v4519 = vmul.f32 1.0, %v4518
        %v4520 = vmul.f32 %v4464, %v4505
        %v4521 = vmul.f32 %v4465, %v4507
        %v4522 = vmul.f32 %v4466, %v4509
        %v4523 = vmul.f32 %v4467, %v4511
        %v4524 = vmul.f32 %v4468, %v4513
        %v4525 = vmul.f32 %v4469, %v4515
        %v4526 = vmul.f32 %v4470, %v4517
        %v4527 = vmul.f32 %v4471, %v4519
        %v4528 = vrot.slane %v4520, 7
        %v4529 = vrot.slane %v4521, 7
        %v4530 = vrot.slane %v4522, 7
        %v4531 = vrot.slane %v4523, 7
        %v4532 = vrot.slane %v4524, 7
        %v4533 = vrot.slane %v4525, 7
        %v4534 = vrot.slane %v4526, 7
        %v4535 = vrot.slane %v4527, 7
        %v4536 = vsel %vm924, %v4534, %v4535
        %v4537 = vsel %vm924, %v4533, %v4534
        %v4538 = vsel %vm924, %v4532, %v4533
        %v4539 = vsel %vm924, %v4531, %v4532
        %v4540 = vsel %vm924, %v4530, %v4531
        %v4541 = vsel %vm924, %v4529, %v4530
        %v4542 = vsel %vm924, %v4528, %v4529
        %v4543 = vsel %vm924, %v4535, %v4528
        %v4544 = vmul.f32 %v4536, %v944
        %v4545 = vmul.f32 %v4543, %v949
        %v4546 = vmul.f32 %v4542, %v954
        %v4547 = vmul.f32 %v4541, %v959
        %v4548 = vmul.f32 %v4540, %v964
        %v4549 = vmul.f32 %v4539, %v969
        %v4550 = vmul.f32 %v4538, %v974
        %v4551 = vmul.f32 %v4537, %v979
        %v4552 = vmul.f32 %v4527, %v1001
        %v4553 = vmul.f32 %v4520, %v1006
        %v4554 = vmul.f32 %v4521, %v1011
        %v4555 = vmul.f32 %v4522, %v1016
        %v4556 = vmul.f32 %v4523, %v1021
        %v4557 = vmul.f32 %v4524, %v1026
        %v4558 = vmul.f32 %v4525, %v1031
        %v4559 = vmul.f32 %v4526, %v1036
        %v4560 = vrot.slane %v4520, 1
        %v4561 = vrot.slane %v4521, 1
        %v4562 = vrot.slane %v4522, 1
        %v4563 = vrot.slane %v4523, 1
        %v4564 = vrot.slane %v4524, 1
        %v4565 = vrot.slane %v4525, 1
        %v4566 = vrot.slane %v4526, 1
        %v4567 = vrot.slane %v4527, 1
        %v4568 = vsel %vm1054, %v4566, %v4567
        %v4569 = vsel %vm1054, %v4565, %v4566
        %v4570 = vsel %vm1054, %v4564, %v4565
        %v4571 = vsel %vm1054, %v4563, %v4564
        %v4572 = vsel %vm1054, %v4562, %v4563
        %v4573 = vsel %vm1054, %v4561, %v4562
        %v4574 = vsel %vm1054, %v4560, %v4561
        %v4575 = vsel %vm1054, %v4567, %v4560
        %v4576 = vmul.f32 %v4575, %v1075
        %v4577 = vmul.f32 %v4574, %v1080
        %v4578 = vmul.f32 %v4573, %v1085
        %v4579 = vmul.f32 %v4572, %v1090
        %v4580 = vmul.f32 %v4571, %v1095
        %v4581 = vmul.f32 %v4570, %v1100
        %v4582 = vmul.f32 %v4569, %v1105
        %v4583 = vmul.f32 %v4568, %v1110
        %v4584 = vmul.f32 %v4543, %v1132
        %v4585 = vmul.f32 %v4542, %v1137
        %v4586 = vmul.f32 %v4541, %v1142
        %v4587 = vmul.f32 %v4540, %v1147
        %v4588 = vmul.f32 %v4539, %v1152
        %v4589 = vmul.f32 %v4538, %v1157
        %v4590 = vmul.f32 %v4537, %v1162
        %v4591 = vmul.f32 %v4536, %v1167
        %v4592 = vmul.f32 %v4574, %v1189
        %v4593 = vmul.f32 %v4573, %v1194
        %v4594 = vmul.f32 %v4572, %v1199
        %v4595 = vmul.f32 %v4571, %v1204
        %v4596 = vmul.f32 %v4570, %v1209
        %v4597 = vmul.f32 %v4569, %v1214
        %v4598 = vmul.f32 %v4568, %v1219
        %v4599 = vmul.f32 %v4575, %v1224
        %v4600 = vmul.f32 %v4542, %v1246
        %v4601 = vmul.f32 %v4541, %v1251
        %v4602 = vmul.f32 %v4540, %v1256
        %v4603 = vmul.f32 %v4539, %v1261
        %v4604 = vmul.f32 %v4538, %v1266
        %v4605 = vmul.f32 %v4537, %v1271
        %v4606 = vmul.f32 %v4536, %v1276
        %v4607 = vmul.f32 %v4543, %v1281
        %v4608 = vmul.f32 %v4521, %v1303
        %v4609 = vmul.f32 %v4522, %v1308
        %v4610 = vmul.f32 %v4523, %v1313
        %v4611 = vmul.f32 %v4524, %v1318
        %v4612 = vmul.f32 %v4525, %v1323
        %v4613 = vmul.f32 %v4526, %v1328
        %v4614 = vmul.f32 %v4527, %v1333
        %v4615 = vmul.f32 %v4520, %v1338
        %v4616 = vmul.f32 %v4573, %v1360
        %v4617 = vmul.f32 %v4572, %v1365
        %v4618 = vmul.f32 %v4571, %v1370
        %v4619 = vmul.f32 %v4570, %v1375
        %v4620 = vmul.f32 %v4569, %v1380
        %v4621 = vmul.f32 %v4568, %v1385
        %v4622 = vmul.f32 %v4575, %v1390
        %v4623 = vmul.f32 %v4574, %v1395
        %4632 = vrot.lane.b32.xlu0 %v4552, 32
        %v4633 = vpop.permute.xlu0 %4632
        %4634 = vrot.lane.b32.xlu0 %v4553, 32
        %v4635 = vpop.permute.xlu0 %4634
        %4636 = vrot.lane.b32.xlu0 %v4554, 32
        %v4637 = vpop.permute.xlu0 %4636
        %4638 = vrot.lane.b32.xlu0 %v4555, 32
        %v4639 = vpop.permute.xlu0 %4638
        %4640 = vrot.lane.b32.xlu0 %v4556, 32
        %v4641 = vpop.permute.xlu0 %4640
        %4642 = vrot.lane.b32.xlu0 %v4557, 32
        %v4643 = vpop.permute.xlu0 %4642
        %4644 = vrot.lane.b32.xlu0 %v4558, 32
        %v4645 = vpop.permute.xlu0 %4644
        %4646 = vrot.lane.b32.xlu0 %v4559, 32
        %v4647 = vpop.permute.xlu0 %4646
        %4664 = vrot.lane.b32.xlu0 %v4576, 64
        %v4665 = vpop.permute.xlu0 %4664
        %4666 = vrot.lane.b32.xlu0 %v4577, 64
        %v4667 = vpop.permute.xlu0 %4666
        %4668 = vrot.lane.b32.xlu0 %v4578, 64
        %v4669 = vpop.permute.xlu0 %4668
        %4670 = vrot.lane.b32.xlu0 %v4579, 64
        %v4671 = vpop.permute.xlu0 %4670
        %4672 = vrot.lane.b32.xlu0 %v4580, 64
        %v4673 = vpop.permute.xlu0 %4672
        %4674 = vrot.lane.b32.xlu0 %v4581, 64
        %v4675 = vpop.permute.xlu0 %4674
        %4676 = vrot.lane.b32.xlu0 %v4582, 64
        %v4677 = vpop.permute.xlu0 %4676
        %4678 = vrot.lane.b32.xlu0 %v4583, 64
        %v4679 = vpop.permute.xlu0 %4678
        %4696 = vrot.lane.b32.xlu0 %v4584, 96
        %v4697 = vpop.permute.xlu0 %4696
        %4698 = vrot.lane.b32.xlu0 %v4585, 96
        %v4699 = vpop.permute.xlu0 %4698
        %4700 = vrot.lane.b32.xlu0 %v4586, 96
        %v4701 = vpop.permute.xlu0 %4700
        %4702 = vrot.lane.b32.xlu0 %v4587, 96
        %v4703 = vpop.permute.xlu0 %4702
        %4704 = vrot.lane.b32.xlu0 %v4588, 96
        %v4705 = vpop.permute.xlu0 %4704
        %4706 = vrot.lane.b32.xlu0 %v4589, 96
        %v4707 = vpop.permute.xlu0 %4706
        %4708 = vrot.lane.b32.xlu0 %v4590, 96
        %v4709 = vpop.permute.xlu0 %4708
        %4710 = vrot.lane.b32.xlu0 %v4591, 96
        %v4711 = vpop.permute.xlu0 %4710
        %4728 = vrot.lane.b32.xlu0 %v4592, 32
        %v4729 = vpop.permute.xlu0 %4728
        %4730 = vrot.lane.b32.xlu0 %v4593, 32
        %v4731 = vpop.permute.xlu0 %4730
        %4732 = vrot.lane.b32.xlu0 %v4594, 32
        %v4733 = vpop.permute.xlu0 %4732
        %4734 = vrot.lane.b32.xlu0 %v4595, 32
        %v4735 = vpop.permute.xlu0 %4734
        %4736 = vrot.lane.b32.xlu0 %v4596, 32
        %v4737 = vpop.permute.xlu0 %4736
        %4738 = vrot.lane.b32.xlu0 %v4597, 32
        %v4739 = vpop.permute.xlu0 %4738
        %4740 = vrot.lane.b32.xlu0 %v4598, 32
        %v4741 = vpop.permute.xlu0 %4740
        %4742 = vrot.lane.b32.xlu0 %v4599, 32
        %v4743 = vpop.permute.xlu0 %4742
        %4760 = vrot.lane.b32.xlu0 %v4600, 64
        %v4761 = vpop.permute.xlu0 %4760
        %4762 = vrot.lane.b32.xlu0 %v4601, 64
        %v4763 = vpop.permute.xlu0 %4762
        %4764 = vrot.lane.b32.xlu0 %v4602, 64
        %v4765 = vpop.permute.xlu0 %4764
        %4766 = vrot.lane.b32.xlu0 %v4603, 64
        %v4767 = vpop.permute.xlu0 %4766
        %4768 = vrot.lane.b32.xlu0 %v4604, 64
        %v4769 = vpop.permute.xlu0 %4768
        %4770 = vrot.lane.b32.xlu0 %v4605, 64
        %v4771 = vpop.permute.xlu0 %4770
        %4772 = vrot.lane.b32.xlu0 %v4606, 64
        %v4773 = vpop.permute.xlu0 %4772
        %4774 = vrot.lane.b32.xlu0 %v4607, 64
        %v4775 = vpop.permute.xlu0 %4774
        %4792 = vrot.lane.b32.xlu0 %v4608, 96
        %v4793 = vpop.permute.xlu0 %4792
        %4794 = vrot.lane.b32.xlu0 %v4609, 96
        %v4795 = vpop.permute.xlu0 %4794
        %4796 = vrot.lane.b32.xlu0 %v4610, 96
        %v4797 = vpop.permute.xlu0 %4796
        %4798 = vrot.lane.b32.xlu0 %v4611, 96
        %v4799 = vpop.permute.xlu0 %4798
        %4800 = vrot.lane.b32.xlu0 %v4612, 96
        %v4801 = vpop.permute.xlu0 %4800
        %4802 = vrot.lane.b32.xlu0 %v4613, 96
        %v4803 = vpop.permute.xlu0 %4802
        %4804 = vrot.lane.b32.xlu0 %v4614, 96
        %v4805 = vpop.permute.xlu0 %4804
        %4806 = vrot.lane.b32.xlu0 %v4615, 96
        %v4807 = vpop.permute.xlu0 %4806
        %v4816 = vsel %vm577, %v4544, %v4633
        %v4817 = vsel %vm577, %v4545, %v4635
        %v4818 = vsel %vm577, %v4546, %v4637
        %v4819 = vsel %vm577, %v4547, %v4639
        %v4820 = vsel %vm577, %v4548, %v4641
        %v4821 = vsel %vm577, %v4549, %v4643
        %v4822 = vsel %vm577, %v4550, %v4645
        %v4823 = vsel %vm577, %v4551, %v4647
        %v4824 = vsel %vm588, %v4816, %v4665
        %v4825 = vsel %vm588, %v4817, %v4667
        %v4826 = vsel %vm588, %v4818, %v4669
        %v4827 = vsel %vm588, %v4819, %v4671
        %v4828 = vsel %vm588, %v4820, %v4673
        %v4829 = vsel %vm588, %v4821, %v4675
        %v4830 = vsel %vm588, %v4822, %v4677
        %v4831 = vsel %vm588, %v4823, %v4679
        %v4832 = vsel %vm1613, %v4824, %v4697
        %v4833 = vsel %vm1613, %v4825, %v4699
        %v4834 = vsel %vm1613, %v4826, %v4701
        %v4835 = vsel %vm1613, %v4827, %v4703
        %v4836 = vsel %vm1613, %v4828, %v4705
        %v4837 = vsel %vm1613, %v4829, %v4707
        %v4838 = vsel %vm1613, %v4830, %v4709
        %v4839 = vsel %vm1613, %v4831, %v4711
        %v4840 = vsel %vm577, %v4520, %v4729
        %v4841 = vsel %vm577, %v4521, %v4731
        %v4842 = vsel %vm577, %v4522, %v4733
        %v4843 = vsel %vm577, %v4523, %v4735
        %v4844 = vsel %vm577, %v4524, %v4737
        %v4845 = vsel %vm577, %v4525, %v4739
        %v4846 = vsel %vm577, %v4526, %v4741
        %v4847 = vsel %vm577, %v4527, %v4743
        %v4848 = vsel %vm588, %v4840, %v4761
        %v4849 = vsel %vm588, %v4841, %v4763
        %v4850 = vsel %vm588, %v4842, %v4765
        %v4851 = vsel %vm588, %v4843, %v4767
        %v4852 = vsel %vm588, %v4844, %v4769
        %v4853 = vsel %vm588, %v4845, %v4771
        %v4854 = vsel %vm588, %v4846, %v4773
        %v4855 = vsel %vm588, %v4847, %v4775
        %v4856 = vsel %vm1613, %v4848, %v4793
        %v4857 = vsel %vm1613, %v4849, %v4795
        %v4858 = vsel %vm1613, %v4850, %v4797
        %v4859 = vsel %vm1613, %v4851, %v4799
        %v4860 = vsel %vm1613, %v4852, %v4801
        %v4861 = vsel %vm1613, %v4853, %v4803
        %v4862 = vsel %vm1613, %v4854, %v4805
        %v4863 = vsel %vm1613, %v4855, %v4807
        %v4864 = vpack.c.bf16 %v4833, %v4832
        %v4865 = vpack.c.bf16 %v4857, %v4856
        %v4866 = vpack.c.bf16 %v4617, %v4616
        %v4867 = vpack.c.bf16 %v4835, %v4834
        %v4868 = vpack.c.bf16 %v4859, %v4858
        %v4869 = vpack.c.bf16 %v4619, %v4618
        %v4870 = vpack.c.bf16 %v4837, %v4836
        %v4871 = vpack.c.bf16 %v4861, %v4860
        %v4872 = vpack.c.bf16 %v4621, %v4620
        %v4873 = vpack.c.bf16 %v4839, %v4838
        %v4874 = vpack.c.bf16 %v4863, %v4862
        %v4875 = vpack.c.bf16 %v4623, %v4622
        %s4876 = scalar_lea.vmem %s8, 288
        %v4877 = vld [vmem:[%s4876] sm:$0xf]
        %v4878 = vld [vmem:[%s4876 + $0x4] sm:$0xf]
        %v4879 = vld [vmem:[%s4876 + $0x8] sm:$0xf]
        %v4880 = vld [vmem:[%s4876 + $0xc] sm:$0xf]
        %v4881 = vld [vmem:[%s4876 + $0x10] sm:$0xf]
        %v4882 = vld [vmem:[%s4876 + $0x14] sm:$0xf]
        %v4883 = vld [vmem:[%s4876 + $0x18] sm:$0xf]
        %v4884 = vld [vmem:[%s4876 + $0x1c] sm:$0xf]
        %v4885 = vld [vmem:[%s4876 + $0x20] sm:$0xf]
        %v4886 = vld [vmem:[%s4876 + $0x24] sm:$0xf]
        %v4887 = vld [vmem:[%s4876 + $0x28] sm:$0xf]
        %v4888 = vld [vmem:[%s4876 + $0x2c] sm:$0xf]
        %v4889 = vld [vmem:[%s4876 + $0x30] sm:$0xf]
        %v4890 = vld [vmem:[%s4876 + $0x34] sm:$0xf]
        %v4891 = vld [vmem:[%s4876 + $0x38] sm:$0xf]
        %v4892 = vld [vmem:[%s4876 + $0x3c] sm:$0xf]
        %v4893 = vld [vmem:[%s4876 + $0x40] sm:$0xf]
        %v4894 = vld [vmem:[%s4876 + $0x44] sm:$0xf]
        %v4895 = vld [vmem:[%s4876 + $0x48] sm:$0xf]
        %v4896 = vld [vmem:[%s4876 + $0x4c] sm:$0xf]
        %v4897 = vld [vmem:[%s4876 + $0x50] sm:$0xf]
        %v4898 = vld [vmem:[%s4876 + $0x54] sm:$0xf]
        %v4899 = vld [vmem:[%s4876 + $0x58] sm:$0xf]
        %v4900 = vld [vmem:[%s4876 + $0x5c] sm:$0xf]
        %v4901 = vld [vmem:[%s4876 + $0x60] sm:$0xf]
        %v4902 = vld [vmem:[%s4876 + $0x64] sm:$0xf]
        %v4903 = vld [vmem:[%s4876 + $0x68] sm:$0xf]
        %v4904 = vld [vmem:[%s4876 + $0x6c] sm:$0xf]
        %v4905 = vld [vmem:[%s4876 + $0x70] sm:$0xf]
        %v4906 = vld [vmem:[%s4876 + $0x74] sm:$0xf]
        %v4907 = vld [vmem:[%s4876 + $0x78] sm:$0xf]
        %v4908 = vld [vmem:[%s4876 + $0x7c] sm:$0xf]
        %v4909 = vld [vmem:[%s4876 + $0x80] sm:$0xf]
        %v4910 = vld [vmem:[%s4876 + $0x84] sm:$0xf]
        %v4911 = vld [vmem:[%s4876 + $0x88] sm:$0xf]
        %v4912 = vld [vmem:[%s4876 + $0x8c] sm:$0xf]
        %s4913 = scalar_lea.vmem %s9, 2
        %v4914 = vld [vmem:[%s4913] sm:$0x1]
        %v4916 = vlaneseq
        %v4917 = vshrl.u32 %v4916, 7
        %v4918 = vsub.s32 0, %v4917
        %v4919 = vrot.slane %v4914, %v4918
        %v4957 = vunpack.c.l.b16 %v4877
        %v4958 = vunpack.c.l.b16 %v4878
        %v4959 = vunpack.c.l.b16 %v4879
        %v4960 = vunpack.c.l.b16 %v4880
        %v4961 = vunpack.c.l.b16 %v4881
        %v4962 = vunpack.c.l.b16 %v4882
        %v4963 = vunpack.c.l.b16 %v4883
        %v4964 = vunpack.c.l.b16 %v4884
        %v4965 = vunpack.c.l.b16 %v4885
        %v4966 = vunpack.c.l.b16 %v4886
        %v4967 = vunpack.c.l.b16 %v4887
        %v4968 = vunpack.c.l.b16 %v4888
        %v4969 = vunpack.c.l.b16 %v4889
        %v4970 = vunpack.c.l.b16 %v4890
        %v4971 = vunpack.c.l.b16 %v4891
        %v4972 = vunpack.c.l.b16 %v4892
        %v4973 = vunpack.c.l.b16 %v4893
        %v4974 = vunpack.c.l.b16 %v4894
        %v4975 = vunpack.c.l.b16 %v4895
        %v4976 = vunpack.c.l.b16 %v4896
        %v4977 = vunpack.c.l.b16 %v4897
        %v4978 = vunpack.c.l.b16 %v4898
        %v4979 = vunpack.c.l.b16 %v4899
        %v4980 = vunpack.c.l.b16 %v4900
        %v4981 = vunpack.c.l.b16 %v4901
        %v4982 = vunpack.c.l.b16 %v4902
        %v4983 = vunpack.c.l.b16 %v4903
        %v4984 = vunpack.c.l.b16 %v4904
        %v4985 = vunpack.c.l.b16 %v4905
        %v4986 = vunpack.c.l.b16 %v4906
        %v4987 = vunpack.c.l.b16 %v4907
        %v4988 = vunpack.c.l.b16 %v4908
        %v4989 = vunpack.c.l.b16 %v4909
        %v4990 = vunpack.c.l.b16 %v4910
        %v4991 = vunpack.c.l.b16 %v4911
        %v4992 = vunpack.c.l.b16 %v4912
        %v4993 = vpack.c.b16 %v4958, %v4957
        %v4994 = vpack.c.b16 %v4960, %v4959
        %v4995 = vpack.c.b16 %v4962, %v4961
        %v4996 = vpack.c.b16 %v4964, %v4963
        %v4997 = vpack.c.b16 %v4966, %v4965
        %v4998 = vpack.c.b16 %v4968, %v4967
        %v4999 = vpack.c.b16 %v4970, %v4969
        %v5000 = vpack.c.b16 %v4972, %v4971
        %v5001 = vpack.c.b16 %v4974, %v4973
        %v5002 = vpack.c.b16 %v4976, %v4975
        %v5003 = vpack.c.b16 %v4978, %v4977
        %v5004 = vpack.c.b16 %v4980, %v4979
        %v5005 = vpack.c.b16 %v4982, %v4981
        %v5006 = vpack.c.b16 %v4984, %v4983
        %v5007 = vpack.c.b16 %v4986, %v4985
        %v5008 = vpack.c.b16 %v4988, %v4987
        %v5009 = vpack.c.b16 %v4990, %v4989
        %v5010 = vpack.c.b16 %v4992, %v4991
        %v5030 = vsel %vm577, %v4866, 0
        %v5033 = vsel %vm577, %v4869, 0
        %v5036 = vsel %vm577, %v4872, 0
        %v5039 = vsel %vm577, %v4875, 0
        %5041 = vmatprep.subr.bf16.mxu0 0
        %5042 = vmatpush1.bf16.msra.mxu0 %v5000
        %5043 = vmatprep.subr.bf16.mxu0 0
        %5044 = vmatpush1.bf16.msra.mxu0 %v4999
        %5045 = vmatprep.subr.bf16.mxu0 0
        %5046 = vmatpush1.bf16.msra.mxu0 %v4998
        %5047 = vmatprep.subr.bf16.mxu0 0
        %5048 = vmatpush1.bf16.msra.mxu0 %v4997
        %5049 = vmatprep.subr.bf16.mxu0 0
        %5050 = vmatpush1.bf16.msra.mxu0 %v4996
        %5051 = vmatprep.subr.bf16.mxu0 0
        %5052 = vmatpush1.bf16.msra.mxu0 %v4995
        %5053 = vmatprep.subr.bf16.mxu0 0
        %5054 = vmatpush1.bf16.msra.mxu0 %v4994
        %5055 = vmatprep.subr.bf16.mxu0 0
        %5056 = vmatpush1.bf16.msra.mxu0 %v4993
        %5057 = vmatprep.subr.bf16.mxu0 0
        %5058 = vmatpush2.bf16.msra.mxu0 %v5008
        %5059 = vmatprep.subr.bf16.mxu0 0
        %5060 = vmatpush2.bf16.msra.mxu0 %v5007
        %5061 = vmatprep.subr.bf16.mxu0 0
        %5062 = vmatpush2.bf16.msra.mxu0 %v5006
        %5063 = vmatprep.subr.bf16.mxu0 0
        %5064 = vmatpush2.bf16.msra.mxu0 %v5005
        %5065 = vmatprep.subr.bf16.mxu0 0
        %5066 = vmatpush2.bf16.msra.mxu0 %v5004
        %5067 = vmatprep.subr.bf16.mxu0 0
        %5068 = vmatpush2.bf16.msra.mxu0 %v5003
        %5069 = vmatprep.subr.bf16.mxu0 0
        %5070 = vmatpush2.bf16.msra.mxu0 %v5002
        %5071 = vmatprep.subr.bf16.mxu0 0
        %5072 = vmatpush2.bf16.msra.mxu0 %v5001
        %5073 = vmatprep.mubr.bf16.mxu0 %v4865
        %5074 = vmatmul.mubr.bf16.gmra.mxu0 %v4864
        %v5075 = vpop.f32.mrf.mxu0
        %v5076 = vadd.f32 %v4919, %v5075
        %v5077 = vpop.f32.mrf.mxu0
        %v5078 = vpop.f32.mrf.mxu0
        %v5079 = vadd.f32 %v4919, %v5078
        %v5080 = vpop.f32.mrf.mxu0
        %5081 = vmatprep.mubr.bf16.mxu0 %v4868
        %5082 = vmatmul.mubr.bf16.gmra.mxu0 %v4867
        %v5083 = vpop.f32.mrf.mxu0
        %v5084 = vadd.f32 %v4919, %v5083
        %v5085 = vpop.f32.mrf.mxu0
        %v5086 = vpop.f32.mrf.mxu0
        %v5087 = vadd.f32 %v4919, %v5086
        %v5088 = vpop.f32.mrf.mxu0
        %5089 = vmatprep.mubr.bf16.mxu0 %v4871
        %5090 = vmatmul.mubr.bf16.gmra.mxu0 %v4870
        %v5091 = vpop.f32.mrf.mxu0
        %v5092 = vadd.f32 %v4919, %v5091
        %v5093 = vpop.f32.mrf.mxu0
        %v5094 = vpop.f32.mrf.mxu0
        %v5095 = vadd.f32 %v4919, %v5094
        %v5096 = vpop.f32.mrf.mxu0
        %5097 = vmatprep.mubr.bf16.mxu0 %v4874
        %5098 = vmatmul.mubr.bf16.gmra.mxu0 %v4873
        %v5099 = vpop.f32.mrf.mxu0
        %v5100 = vadd.f32 %v4919, %v5099
        %v5101 = vpop.f32.mrf.mxu0
        %v5102 = vpop.f32.mrf.mxu0
        %v5103 = vadd.f32 %v4919, %v5102
        %v5104 = vpop.f32.mrf.mxu0
        %5105 = vdwg.mxu0
        %5106 = vmatprep.subr.bf16.mxu0 0
        %5107 = vmatpush1.bf16.msra.mxu0 0
        %5108 = vmatprep.subr.bf16.mxu0 0
        %5109 = vmatpush1.bf16.msra.mxu0 0
        %5110 = vmatprep.subr.bf16.mxu0 0
        %5111 = vmatpush1.bf16.msra.mxu0 0
        %5112 = vmatprep.subr.bf16.mxu0 0
        %5113 = vmatpush1.bf16.msra.mxu0 0
        %5114 = vmatprep.subr.bf16.mxu0 0
        %5115 = vmatpush1.bf16.msra.mxu0 0
        %5116 = vmatprep.subr.bf16.mxu0 0
        %5117 = vmatpush1.bf16.msra.mxu0 0
        %5118 = vmatprep.subr.bf16.mxu0 0
        %5119 = vmatpush1.bf16.msra.mxu0 %v5010
        %5120 = vmatprep.subr.bf16.mxu0 0
        %5121 = vmatpush1.bf16.msra.mxu0 %v5009
        %5122 = vmatprep.subr.bf16.mxu0 0
        %5123 = vmatpush2.bf16.msra.mxu0 0
        %5124 = vmatprep.subr.bf16.mxu0 0
        %5125 = vmatpush2.bf16.msra.mxu0 0
        %5126 = vmatprep.subr.bf16.mxu0 0
        %5127 = vmatpush2.bf16.msra.mxu0 0
        %5128 = vmatprep.subr.bf16.mxu0 0
        %5129 = vmatpush2.bf16.msra.mxu0 0
        %5130 = vmatprep.subr.bf16.mxu0 0
        %5131 = vmatpush2.bf16.msra.mxu0 0
        %5132 = vmatprep.subr.bf16.mxu0 0
        %5133 = vmatpush2.bf16.msra.mxu0 0
        %5134 = vmatprep.subr.bf16.mxu0 0
        %5135 = vmatpush2.bf16.msra.mxu0 0
        %5136 = vmatprep.subr.bf16.mxu0 0
        %5137 = vmatpush2.bf16.msra.mxu0 0
        %5138 = vmatprep.mubr.bf16.mxu0 0
        %5139 = vmatmul.mubr.bf16.gmra.mxu0 %v5030
        %v5140 = vpop.f32.mrf.mxu0
        %v5141 = vadd.f32 %v5076, %v5140
        %v5142 = vpop.f32.mrf.mxu0
        %v5143 = vpop.f32.mrf.mxu0
        %v5144 = vadd.f32 %v5079, %v5143
        %v5145 = vpop.f32.mrf.mxu0
        %5146 = vmatprep.mubr.bf16.mxu0 0
        %5147 = vmatmul.mubr.bf16.gmra.mxu0 %v5033
        %v5148 = vpop.f32.mrf.mxu0
        %v5149 = vadd.f32 %v5084, %v5148
        %v5150 = vpop.f32.mrf.mxu0
        %v5151 = vpop.f32.mrf.mxu0
        %v5152 = vadd.f32 %v5087, %v5151
        %v5153 = vpop.f32.mrf.mxu0
        %5154 = vmatprep.mubr.bf16.mxu0 0
        %5155 = vmatmul.mubr.bf16.gmra.mxu0 %v5036
        %v5156 = vpop.f32.mrf.mxu0
        %v5157 = vadd.f32 %v5092, %v5156
        %v5158 = vpop.f32.mrf.mxu0
        %v5159 = vpop.f32.mrf.mxu0
        %v5160 = vadd.f32 %v5095, %v5159
        %v5161 = vpop.f32.mrf.mxu0
        %5162 = vmatprep.mubr.bf16.mxu0 0
        %5163 = vmatmul.mubr.bf16.gmra.mxu0 %v5039
        %v5164 = vpop.f32.mrf.mxu0
        %v5165 = vadd.f32 %v5100, %v5164
        %v5166 = vpop.f32.mrf.mxu0
        %v5167 = vpop.f32.mrf.mxu0
        %v5168 = vadd.f32 %v5103, %v5167
        %v5169 = vpop.f32.mrf.mxu0
        %5170 = vdwg.mxu0
        %5172 = vrot.lane.b32.xlu0 %v1954, 96
        %v5173 = vpop.permute.xlu0 %5172
        %v5175 = vadd.f32 %v5141, %v5173
        %v5176 = vadd.f32 %v5144, %v5173
        %v5177 = vadd.f32 %v5149, %v5173
        %v5178 = vadd.f32 %v5152, %v5173
        %v5179 = vadd.f32 %v5157, %v5173
        %v5180 = vadd.f32 %v5160, %v5173
        %v5181 = vadd.f32 %v5165, %v5173
        %v5182 = vadd.f32 %v5168, %v5173
        %s5183 = scalar_lea.vmem %s7, 6
        %v5184 = vld [vmem:[%s5183] sm:$0x1]
        %s5185 = scalar_lea.vmem %s7, 7
        %v5186 = vld [vmem:[%s5185] sm:$0x1]
        %v5187 = vsel %vm577, %v5175, 0.0
        %v5188 = vsel %vm577, %v5176, 0.0
        %v5189 = vadd.f32 %v5187, %v5188
        %v5190 = vsel %vm577, %v5177, 0.0
        %v5191 = vadd.f32 %v5189, %v5190
        %v5192 = vsel %vm577, %v5178, 0.0
        %v5193 = vadd.f32 %v5191, %v5192
        %v5194 = vsel %vm577, %v5179, 0.0
        %v5195 = vadd.f32 %v5193, %v5194
        %v5196 = vsel %vm577, %v5180, 0.0
        %v5197 = vadd.f32 %v5195, %v5196
        %v5198 = vsel %vm577, %v5181, 0.0
        %v5199 = vadd.f32 %v5197, %v5198
        %v5200 = vsel %vm577, %v5182, 0.0
        %v5201 = vadd.f32 %v5199, %v5200
        %v5202 = vrot.slane %v5201, 4
        %v5203 = vadd.f32 %v5201, %v5202
        %v5204 = vrot.slane %v5203, 2
        %v5205 = vadd.f32 %v5203, %v5204
        %v5206 = vrot.slane %v5205, 1
        %v5207 = vadd.f32 %v5205, %v5206
        %v5208 = vmul.f32 %v5175, %v5175
        %v5209 = vmul.f32 %v5176, %v5176
        %v5210 = vmul.f32 %v5177, %v5177
        %v5211 = vmul.f32 %v5178, %v5178
        %v5212 = vmul.f32 %v5179, %v5179
        %v5213 = vmul.f32 %v5180, %v5180
        %v5214 = vmul.f32 %v5181, %v5181
        %v5215 = vmul.f32 %v5182, %v5182
        %v5216 = vsel %vm577, %v5208, 0.0
        %v5217 = vsel %vm577, %v5209, 0.0
        %v5218 = vadd.f32 %v5216, %v5217
        %v5219 = vsel %vm577, %v5210, 0.0
        %v5220 = vadd.f32 %v5218, %v5219
        %v5221 = vsel %vm577, %v5211, 0.0
        %v5222 = vadd.f32 %v5220, %v5221
        %v5223 = vsel %vm577, %v5212, 0.0
        %v5224 = vadd.f32 %v5222, %v5223
        %v5225 = vsel %vm577, %v5213, 0.0
        %v5226 = vadd.f32 %v5224, %v5225
        %v5227 = vsel %vm577, %v5214, 0.0
        %v5228 = vadd.f32 %v5226, %v5227
        %v5229 = vsel %vm577, %v5215, 0.0
        %v5230 = vadd.f32 %v5228, %v5229
        %v5231 = vrot.slane %v5230, 4
        %v5232 = vadd.f32 %v5230, %v5231
        %v5233 = vrot.slane %v5232, 2
        %v5234 = vadd.f32 %v5232, %v5233
        %v5235 = vrot.slane %v5234, 1
        %v5236 = vadd.f32 %v5234, %v5235
        %v5237 = vsel %vm723, %v5207, %v5236
        %v5239 = vsel %vm577, %v5237, 0
        %5241 = vmatprep.subr.mxu0 0.0
        %5242 = vmatpush1.msra.mxu0 0.0
        %5243 = vmatprep.subr.mxu0 0.0
        %5244 = vmatpush1.msra.mxu0 0.0
        %5245 = vmatprep.subr.mxu0 0.0
        %5246 = vmatpush1.msra.mxu0 0.0
        %5247 = vmatprep.subr.mxu0 0.0
        %5248 = vmatpush1.msra.mxu0 0.0
        %5249 = vmatprep.subr.mxu0 0.0
        %5250 = vmatpush1.msra.mxu0 0.0
        %5251 = vmatprep.subr.mxu0 0.0
        %5252 = vmatpush1.msra.mxu0 0.0
        %5253 = vmatprep.subr.mxu0 0.0
        %5254 = vmatpush1.msra.mxu0 0.0
        %5255 = vmatprep.subr.mxu0 0.0
        %5256 = vmatpush1.msra.mxu0 0.0
        %5257 = vmatprep.subr.mxu0 0.0
        %5258 = vmatpush1.msra.mxu0 0.0
        %5259 = vmatprep.subr.mxu0 0.0
        %5260 = vmatpush1.msra.mxu0 0.0
        %5261 = vmatprep.subr.mxu0 0.0
        %5262 = vmatpush1.msra.mxu0 0.0
        %5263 = vmatprep.subr.mxu0 0.0
        %5264 = vmatpush1.msra.mxu0 0.0
        %5265 = vmatprep.subr.mxu0 0.0
        %5266 = vmatpush1.msra.mxu0 %v552
        %5267 = vmatprep.subr.mxu0 0.0
        %5268 = vmatpush1.msra.mxu0 %v551
        %5269 = vmatprep.subr.mxu0 0.0
        %5270 = vmatpush1.msra.mxu0 %v550
        %5271 = vmatprep.subr.mxu0 0.0
        %5272 = vmatpush1.msra.mxu0 %v549
        %5273 = vmatprep.subr.mxu0 0.0
        %5274 = vmatpush2.msra.mxu0 0.0
        %5275 = vmatprep.subr.mxu0 0.0
        %5276 = vmatpush2.msra.mxu0 0.0
        %5277 = vmatprep.subr.mxu0 0.0
        %5278 = vmatpush2.msra.mxu0 0.0
        %5279 = vmatprep.subr.mxu0 0.0
        %5280 = vmatpush2.msra.mxu0 0.0
        %5281 = vmatprep.subr.mxu0 0.0
        %5282 = vmatpush2.msra.mxu0 0.0
        %5283 = vmatprep.subr.mxu0 0.0
        %5284 = vmatpush2.msra.mxu0 0.0
        %5285 = vmatprep.subr.mxu0 0.0
        %5286 = vmatpush2.msra.mxu0 0.0
        %5287 = vmatprep.subr.mxu0 0.0
        %5288 = vmatpush2.msra.mxu0 0.0
        %5289 = vmatprep.subr.mxu0 0.0
        %5290 = vmatpush2.msra.mxu0 0.0
        %5291 = vmatprep.subr.mxu0 0.0
        %5292 = vmatpush2.msra.mxu0 0.0
        %5293 = vmatprep.subr.mxu0 0.0
        %5294 = vmatpush2.msra.mxu0 0.0
        %5295 = vmatprep.subr.mxu0 0.0
        %5296 = vmatpush2.msra.mxu0 0.0
        %5297 = vmatprep.subr.mxu0 0.0
        %5298 = vmatpush2.msra.mxu0 0.0
        %5299 = vmatprep.subr.mxu0 0.0
        %5300 = vmatpush2.msra.mxu0 0.0
        %5301 = vmatprep.subr.mxu0 0.0
        %5302 = vmatpush2.msra.mxu0 0.0
        %5303 = vmatprep.subr.mxu0 0.0
        %5304 = vmatpush2.msra.mxu0 0.0
        %5305 = vmatprep.mubr.f32.mxu0 0.0
        %5306 = vmatmul.mubr.f32.gmra.mxu0 %v5239
        %v5307 = vpop.f32.mrf.mxu0
        %v5308 = vadd.f32 0.0, %v5307
        %v5309 = vpop.f32.mrf.mxu0
        %5310 = vdwg.mxu0
        %v5311 = vmul.f32 %v5308, %v5308
        %v5313 = vrot.slane %v5311, 7
        %v5315 = vsub.f32 %v5308, %v5313
        %v5316 = vmax.f32 %v5315, 0.0
        %v5317 = vlaneseq
        %v5318 = vshrl.u32 %v5317, 7
        %v5319 = vsub.s32 0, %v5318
        %v5320 = vrot.slane %v5308, %v5319
        %v5321 = vsub.f32 %v5175, %v5320
        %v5322 = vsub.f32 %v5176, %v5320
        %v5323 = vsub.f32 %v5177, %v5320
        %v5324 = vsub.f32 %v5178, %v5320
        %v5325 = vsub.f32 %v5179, %v5320
        %v5326 = vsub.f32 %v5180, %v5320
        %v5327 = vsub.f32 %v5181, %v5320
        %v5328 = vsub.f32 %v5182, %v5320
        %v5329 = vadd.f32 %v5316, 1e-06
        %v5330 = vrsqrt.pop %v5329
        %v5331 = vlaneseq
        %v5332 = vshrl.u32 %v5331, 7
        %v5333 = vsub.s32 1, %v5332
        %v5334 = vrot.slane %v5330, %v5333
        %v5335 = vmul.f32 %v5321, %v5334
        %v5336 = vmul.f32 %v5322, %v5334
        %v5337 = vmul.f32 %v5323, %v5334
        %v5338 = vmul.f32 %v5324, %v5334
        %v5339 = vmul.f32 %v5325, %v5334
        %v5340 = vmul.f32 %v5326, %v5334
        %v5341 = vmul.f32 %v5327, %v5334
        %v5342 = vmul.f32 %v5328, %v5334
        %v5344 = vlaneseq
        %v5345 = vshrl.u32 %v5344, 7
        %v5346 = vsub.s32 0, %v5345
        %v5347 = vrot.slane %v5184, %v5346
        %v5349 = vmul.f32 %v5335, %v5347
        %v5350 = vmul.f32 %v5336, %v5347
        %v5351 = vmul.f32 %v5337, %v5347
        %v5352 = vmul.f32 %v5338, %v5347
        %v5353 = vmul.f32 %v5339, %v5347
        %v5354 = vmul.f32 %v5340, %v5347
        %v5355 = vmul.f32 %v5341, %v5347
        %v5356 = vmul.f32 %v5342, %v5347
        %v5358 = vlaneseq
        %v5359 = vshrl.u32 %v5358, 7
        %v5360 = vsub.s32 0, %v5359
        %v5361 = vrot.slane %v5186, %v5360
        %v5363 = vadd.f32 %v5349, %v5361
        %v5364 = vadd.f32 %v5350, %v5361
        %v5365 = vadd.f32 %v5351, %v5361
        %v5366 = vadd.f32 %v5352, %v5361
        %v5367 = vadd.f32 %v5353, %v5361
        %v5368 = vadd.f32 %v5354, %v5361
        %v5369 = vadd.f32 %v5355, %v5361
        %v5370 = vadd.f32 %v5356, %v5361
        %v5371 = vxor.u32 %v5363, 2147483648
        %v5372 = vxor.u32 %v5364, 2147483648
        %v5373 = vxor.u32 %v5365, 2147483648
        %v5374 = vxor.u32 %v5366, 2147483648
        %v5375 = vxor.u32 %v5367, 2147483648
        %v5376 = vxor.u32 %v5368, 2147483648
        %v5377 = vxor.u32 %v5369, 2147483648
        %v5378 = vxor.u32 %v5370, 2147483648
        %v5379 = vmul.f32 %v5371, 1.442695
        %v5380 = vpow.pop %v5379
        %v5381 = vmul.f32 %v5372, 1.442695
        %v5382 = vpow.pop %v5381
        %v5383 = vmul.f32 %v5373, 1.442695
        %v5384 = vpow.pop %v5383
        %v5385 = vmul.f32 %v5374, 1.442695
        %v5386 = vpow.pop %v5385
        %v5387 = vmul.f32 %v5375, 1.442695
        %v5388 = vpow.pop %v5387
        %v5389 = vmul.f32 %v5376, 1.442695
        %v5390 = vpow.pop %v5389
        %v5391 = vmul.f32 %v5377, 1.442695
        %v5392 = vpow.pop %v5391
        %v5393 = vmul.f32 %v5378, 1.442695
        %v5394 = vpow.pop %v5393
        %v5395 = vadd.f32 %v5380, 1.0
        %v5396 = vadd.f32 %v5382, 1.0
        %v5397 = vadd.f32 %v5384, 1.0
        %v5398 = vadd.f32 %v5386, 1.0
        %v5399 = vadd.f32 %v5388, 1.0
        %v5400 = vadd.f32 %v5390, 1.0
        %v5401 = vadd.f32 %v5392, 1.0
        %v5402 = vadd.f32 %v5394, 1.0
        %v5403 = vrcp.pop %v5395
        %v5404 = vmul.f32 1.0, %v5403
        %v5405 = vrcp.pop %v5396
        %v5406 = vmul.f32 1.0, %v5405
        %v5407 = vrcp.pop %v5397
        %v5408 = vmul.f32 1.0, %v5407
        %v5409 = vrcp.pop %v5398
        %v5410 = vmul.f32 1.0, %v5409
        %v5411 = vrcp.pop %v5399
        %v5412 = vmul.f32 1.0, %v5411
        %v5413 = vrcp.pop %v5400
        %v5414 = vmul.f32 1.0, %v5413
        %v5415 = vrcp.pop %v5401
        %v5416 = vmul.f32 1.0, %v5415
        %v5417 = vrcp.pop %v5402
        %v5418 = vmul.f32 1.0, %v5417
        %v5419 = vmul.f32 %v5363, %v5404
        %v5420 = vmul.f32 %v5364, %v5406
        %v5421 = vmul.f32 %v5365, %v5408
        %v5422 = vmul.f32 %v5366, %v5410
        %v5423 = vmul.f32 %v5367, %v5412
        %v5424 = vmul.f32 %v5368, %v5414
        %v5425 = vmul.f32 %v5369, %v5416
        %v5426 = vmul.f32 %v5370, %v5418
        %v5427 = vrot.slane %v5419, 7
        %v5428 = vrot.slane %v5420, 7
        %v5429 = vrot.slane %v5421, 7
        %v5430 = vrot.slane %v5422, 7
        %v5431 = vrot.slane %v5423, 7
        %v5432 = vrot.slane %v5424, 7
        %v5433 = vrot.slane %v5425, 7
        %v5434 = vrot.slane %v5426, 7
        %v5435 = vsel %vm924, %v5433, %v5434
        %v5436 = vsel %vm924, %v5432, %v5433
        %v5437 = vsel %vm924, %v5431, %v5432
        %v5438 = vsel %vm924, %v5430, %v5431
        %v5439 = vsel %vm924, %v5429, %v5430
        %v5440 = vsel %vm924, %v5428, %v5429
        %v5441 = vsel %vm924, %v5427, %v5428
        %v5442 = vsel %vm924, %v5434, %v5427
        %v5443 = vmul.f32 %v5435, %v944
        %v5444 = vmul.f32 %v5442, %v949
        %v5445 = vmul.f32 %v5441, %v954
        %v5446 = vmul.f32 %v5440, %v959
        %v5447 = vmul.f32 %v5439, %v964
        %v5448 = vmul.f32 %v5438, %v969
        %v5449 = vmul.f32 %v5437, %v974
        %v5450 = vmul.f32 %v5436, %v979
        %v5451 = vmul.f32 %v5426, %v1001
        %v5452 = vmul.f32 %v5419, %v1006
        %v5453 = vmul.f32 %v5420, %v1011
        %v5454 = vmul.f32 %v5421, %v1016
        %v5455 = vmul.f32 %v5422, %v1021
        %v5456 = vmul.f32 %v5423, %v1026
        %v5457 = vmul.f32 %v5424, %v1031
        %v5458 = vmul.f32 %v5425, %v1036
        %v5459 = vrot.slane %v5419, 1
        %v5460 = vrot.slane %v5420, 1
        %v5461 = vrot.slane %v5421, 1
        %v5462 = vrot.slane %v5422, 1
        %v5463 = vrot.slane %v5423, 1
        %v5464 = vrot.slane %v5424, 1
        %v5465 = vrot.slane %v5425, 1
        %v5466 = vrot.slane %v5426, 1
        %v5467 = vsel %vm1054, %v5465, %v5466
        %v5468 = vsel %vm1054, %v5464, %v5465
        %v5469 = vsel %vm1054, %v5463, %v5464
        %v5470 = vsel %vm1054, %v5462, %v5463
        %v5471 = vsel %vm1054, %v5461, %v5462
        %v5472 = vsel %vm1054, %v5460, %v5461
        %v5473 = vsel %vm1054, %v5459, %v5460
        %v5474 = vsel %vm1054, %v5466, %v5459
        %v5475 = vmul.f32 %v5474, %v1075
        %v5476 = vmul.f32 %v5473, %v1080
        %v5477 = vmul.f32 %v5472, %v1085
        %v5478 = vmul.f32 %v5471, %v1090
        %v5479 = vmul.f32 %v5470, %v1095
        %v5480 = vmul.f32 %v5469, %v1100
        %v5481 = vmul.f32 %v5468, %v1105
        %v5482 = vmul.f32 %v5467, %v1110
        %v5483 = vmul.f32 %v5442, %v1132
        %v5484 = vmul.f32 %v5441, %v1137
        %v5485 = vmul.f32 %v5440, %v1142
        %v5486 = vmul.f32 %v5439, %v1147
        %v5487 = vmul.f32 %v5438, %v1152
        %v5488 = vmul.f32 %v5437, %v1157
        %v5489 = vmul.f32 %v5436, %v1162
        %v5490 = vmul.f32 %v5435, %v1167
        %v5491 = vmul.f32 %v5473, %v1189
        %v5492 = vmul.f32 %v5472, %v1194
        %v5493 = vmul.f32 %v5471, %v1199
        %v5494 = vmul.f32 %v5470, %v1204
        %v5495 = vmul.f32 %v5469, %v1209
        %v5496 = vmul.f32 %v5468, %v1214
        %v5497 = vmul.f32 %v5467, %v1219
        %v5498 = vmul.f32 %v5474, %v1224
        %v5499 = vmul.f32 %v5441, %v1246
        %v5500 = vmul.f32 %v5440, %v1251
        %v5501 = vmul.f32 %v5439, %v1256
        %v5502 = vmul.f32 %v5438, %v1261
        %v5503 = vmul.f32 %v5437, %v1266
        %v5504 = vmul.f32 %v5436, %v1271
        %v5505 = vmul.f32 %v5435, %v1276
        %v5506 = vmul.f32 %v5442, %v1281
        %v5507 = vmul.f32 %v5420, %v1303
        %v5508 = vmul.f32 %v5421, %v1308
        %v5509 = vmul.f32 %v5422, %v1313
        %v5510 = vmul.f32 %v5423, %v1318
        %v5511 = vmul.f32 %v5424, %v1323
        %v5512 = vmul.f32 %v5425, %v1328
        %v5513 = vmul.f32 %v5426, %v1333
        %v5514 = vmul.f32 %v5419, %v1338
        %v5515 = vmul.f32 %v5472, %v1360
        %v5516 = vmul.f32 %v5471, %v1365
        %v5517 = vmul.f32 %v5470, %v1370
        %v5518 = vmul.f32 %v5469, %v1375
        %v5519 = vmul.f32 %v5468, %v1380
        %v5520 = vmul.f32 %v5467, %v1385
        %v5521 = vmul.f32 %v5474, %v1390
        %v5522 = vmul.f32 %v5473, %v1395
        %5531 = vrot.lane.b32.xlu0 %v5451, 32
        %v5532 = vpop.permute.xlu0 %5531
        %5533 = vrot.lane.b32.xlu0 %v5452, 32
        %v5534 = vpop.permute.xlu0 %5533
        %5535 = vrot.lane.b32.xlu0 %v5453, 32
        %v5536 = vpop.permute.xlu0 %5535
        %5537 = vrot.lane.b32.xlu0 %v5454, 32
        %v5538 = vpop.permute.xlu0 %5537
        %5539 = vrot.lane.b32.xlu0 %v5455, 32
        %v5540 = vpop.permute.xlu0 %5539
        %5541 = vrot.lane.b32.xlu0 %v5456, 32
        %v5542 = vpop.permute.xlu0 %5541
        %5543 = vrot.lane.b32.xlu0 %v5457, 32
        %v5544 = vpop.permute.xlu0 %5543
        %5545 = vrot.lane.b32.xlu0 %v5458, 32
        %v5546 = vpop.permute.xlu0 %5545
        %5563 = vrot.lane.b32.xlu0 %v5475, 64
        %v5564 = vpop.permute.xlu0 %5563
        %5565 = vrot.lane.b32.xlu0 %v5476, 64
        %v5566 = vpop.permute.xlu0 %5565
        %5567 = vrot.lane.b32.xlu0 %v5477, 64
        %v5568 = vpop.permute.xlu0 %5567
        %5569 = vrot.lane.b32.xlu0 %v5478, 64
        %v5570 = vpop.permute.xlu0 %5569
        %5571 = vrot.lane.b32.xlu0 %v5479, 64
        %v5572 = vpop.permute.xlu0 %5571
        %5573 = vrot.lane.b32.xlu0 %v5480, 64
        %v5574 = vpop.permute.xlu0 %5573
        %5575 = vrot.lane.b32.xlu0 %v5481, 64
        %v5576 = vpop.permute.xlu0 %5575
        %5577 = vrot.lane.b32.xlu0 %v5482, 64
        %v5578 = vpop.permute.xlu0 %5577
        %5595 = vrot.lane.b32.xlu0 %v5483, 96
        %v5596 = vpop.permute.xlu0 %5595
        %5597 = vrot.lane.b32.xlu0 %v5484, 96
        %v5598 = vpop.permute.xlu0 %5597
        %5599 = vrot.lane.b32.xlu0 %v5485, 96
        %v5600 = vpop.permute.xlu0 %5599
        %5601 = vrot.lane.b32.xlu0 %v5486, 96
        %v5602 = vpop.permute.xlu0 %5601
        %5603 = vrot.lane.b32.xlu0 %v5487, 96
        %v5604 = vpop.permute.xlu0 %5603
        %5605 = vrot.lane.b32.xlu0 %v5488, 96
        %v5606 = vpop.permute.xlu0 %5605
        %5607 = vrot.lane.b32.xlu0 %v5489, 96
        %v5608 = vpop.permute.xlu0 %5607
        %5609 = vrot.lane.b32.xlu0 %v5490, 96
        %v5610 = vpop.permute.xlu0 %5609
        %5627 = vrot.lane.b32.xlu0 %v5491, 32
        %v5628 = vpop.permute.xlu0 %5627
        %5629 = vrot.lane.b32.xlu0 %v5492, 32
        %v5630 = vpop.permute.xlu0 %5629
        %5631 = vrot.lane.b32.xlu0 %v5493, 32
        %v5632 = vpop.permute.xlu0 %5631
        %5633 = vrot.lane.b32.xlu0 %v5494, 32
        %v5634 = vpop.permute.xlu0 %5633
        %5635 = vrot.lane.b32.xlu0 %v5495, 32
        %v5636 = vpop.permute.xlu0 %5635
        %5637 = vrot.lane.b32.xlu0 %v5496, 32
        %v5638 = vpop.permute.xlu0 %5637
        %5639 = vrot.lane.b32.xlu0 %v5497, 32
        %v5640 = vpop.permute.xlu0 %5639
        %5641 = vrot.lane.b32.xlu0 %v5498, 32
        %v5642 = vpop.permute.xlu0 %5641
        %5659 = vrot.lane.b32.xlu0 %v5499, 64
        %v5660 = vpop.permute.xlu0 %5659
        %5661 = vrot.lane.b32.xlu0 %v5500, 64
        %v5662 = vpop.permute.xlu0 %5661
        %5663 = vrot.lane.b32.xlu0 %v5501, 64
        %v5664 = vpop.permute.xlu0 %5663
        %5665 = vrot.lane.b32.xlu0 %v5502, 64
        %v5666 = vpop.permute.xlu0 %5665
        %5667 = vrot.lane.b32.xlu0 %v5503, 64
        %v5668 = vpop.permute.xlu0 %5667
        %5669 = vrot.lane.b32.xlu0 %v5504, 64
        %v5670 = vpop.permute.xlu0 %5669
        %5671 = vrot.lane.b32.xlu0 %v5505, 64
        %v5672 = vpop.permute.xlu0 %5671
        %5673 = vrot.lane.b32.xlu0 %v5506, 64
        %v5674 = vpop.permute.xlu0 %5673
        %5691 = vrot.lane.b32.xlu0 %v5507, 96
        %v5692 = vpop.permute.xlu0 %5691
        %5693 = vrot.lane.b32.xlu0 %v5508, 96
        %v5694 = vpop.permute.xlu0 %5693
        %5695 = vrot.lane.b32.xlu0 %v5509, 96
        %v5696 = vpop.permute.xlu0 %5695
        %5697 = vrot.lane.b32.xlu0 %v5510, 96
        %v5698 = vpop.permute.xlu0 %5697
        %5699 = vrot.lane.b32.xlu0 %v5511, 96
        %v5700 = vpop.permute.xlu0 %5699
        %5701 = vrot.lane.b32.xlu0 %v5512, 96
        %v5702 = vpop.permute.xlu0 %5701
        %5703 = vrot.lane.b32.xlu0 %v5513, 96
        %v5704 = vpop.permute.xlu0 %5703
        %5705 = vrot.lane.b32.xlu0 %v5514, 96
        %v5706 = vpop.permute.xlu0 %5705
        %v5715 = vsel %vm577, %v5443, %v5532
        %v5716 = vsel %vm577, %v5444, %v5534
        %v5717 = vsel %vm577, %v5445, %v5536
        %v5718 = vsel %vm577, %v5446, %v5538
        %v5719 = vsel %vm577, %v5447, %v5540
        %v5720 = vsel %vm577, %v5448, %v5542
        %v5721 = vsel %vm577, %v5449, %v5544
        %v5722 = vsel %vm577, %v5450, %v5546
        %v5723 = vsel %vm588, %v5715, %v5564
        %v5724 = vsel %vm588, %v5716, %v5566
        %v5725 = vsel %vm588, %v5717, %v5568
        %v5726 = vsel %vm588, %v5718, %v5570
        %v5727 = vsel %vm588, %v5719, %v5572
        %v5728 = vsel %vm588, %v5720, %v5574
        %v5729 = vsel %vm588, %v5721, %v5576
        %v5730 = vsel %vm588, %v5722, %v5578
        %v5731 = vsel %vm1613, %v5723, %v5596
        %v5732 = vsel %vm1613, %v5724, %v5598
        %v5733 = vsel %vm1613, %v5725, %v5600
        %v5734 = vsel %vm1613, %v5726, %v5602
        %v5735 = vsel %vm1613, %v5727, %v5604
        %v5736 = vsel %vm1613, %v5728, %v5606
        %v5737 = vsel %vm1613, %v5729, %v5608
        %v5738 = vsel %vm1613, %v5730, %v5610
        %v5739 = vsel %vm577, %v5419, %v5628
        %v5740 = vsel %vm577, %v5420, %v5630
        %v5741 = vsel %vm577, %v5421, %v5632
        %v5742 = vsel %vm577, %v5422, %v5634
        %v5743 = vsel %vm577, %v5423, %v5636
        %v5744 = vsel %vm577, %v5424, %v5638
        %v5745 = vsel %vm577, %v5425, %v5640
        %v5746 = vsel %vm577, %v5426, %v5642
        %v5747 = vsel %vm588, %v5739, %v5660
        %v5748 = vsel %vm588, %v5740, %v5662
        %v5749 = vsel %vm588, %v5741, %v5664
        %v5750 = vsel %vm588, %v5742, %v5666
        %v5751 = vsel %vm588, %v5743, %v5668
        %v5752 = vsel %vm588, %v5744, %v5670
        %v5753 = vsel %vm588, %v5745, %v5672
        %v5754 = vsel %vm588, %v5746, %v5674
        %v5755 = vsel %vm1613, %v5747, %v5692
        %v5756 = vsel %vm1613, %v5748, %v5694
        %v5757 = vsel %vm1613, %v5749, %v5696
        %v5758 = vsel %vm1613, %v5750, %v5698
        %v5759 = vsel %vm1613, %v5751, %v5700
        %v5760 = vsel %vm1613, %v5752, %v5702
        %v5761 = vsel %vm1613, %v5753, %v5704
        %v5762 = vsel %vm1613, %v5754, %v5706
        %v5763 = vpack.c.bf16 %v5732, %v5731
        %v5764 = vpack.c.bf16 %v5756, %v5755
        %v5765 = vpack.c.bf16 %v5516, %v5515
        %v5766 = vpack.c.bf16 %v5734, %v5733
        %v5767 = vpack.c.bf16 %v5758, %v5757
        %v5768 = vpack.c.bf16 %v5518, %v5517
        %v5769 = vpack.c.bf16 %v5736, %v5735
        %v5770 = vpack.c.bf16 %v5760, %v5759
        %v5771 = vpack.c.bf16 %v5520, %v5519
        %v5772 = vpack.c.bf16 %v5738, %v5737
        %v5773 = vpack.c.bf16 %v5762, %v5761
        %v5774 = vpack.c.bf16 %v5522, %v5521
        %s5775 = scalar_lea.vmem %s8, 432
        %v5776 = vld [vmem:[%s5775] sm:$0xf]
        %v5777 = vld [vmem:[%s5775 + $0x4] sm:$0xf]
        %v5778 = vld [vmem:[%s5775 + $0x8] sm:$0xf]
        %v5779 = vld [vmem:[%s5775 + $0xc] sm:$0xf]
        %v5780 = vld [vmem:[%s5775 + $0x10] sm:$0xf]
        %v5781 = vld [vmem:[%s5775 + $0x14] sm:$0xf]
        %v5782 = vld [vmem:[%s5775 + $0x18] sm:$0xf]
        %v5783 = vld [vmem:[%s5775 + $0x1c] sm:$0xf]
        %v5784 = vld [vmem:[%s5775 + $0x20] sm:$0xf]
        %v5785 = vld [vmem:[%s5775 + $0x24] sm:$0xf]
        %v5786 = vld [vmem:[%s5775 + $0x28] sm:$0xf]
        %v5787 = vld [vmem:[%s5775 + $0x2c] sm:$0xf]
        %v5788 = vld [vmem:[%s5775 + $0x30] sm:$0xf]
        %v5789 = vld [vmem:[%s5775 + $0x34] sm:$0xf]
        %v5790 = vld [vmem:[%s5775 + $0x38] sm:$0xf]
        %v5791 = vld [vmem:[%s5775 + $0x3c] sm:$0xf]
        %v5792 = vld [vmem:[%s5775 + $0x40] sm:$0xf]
        %v5793 = vld [vmem:[%s5775 + $0x44] sm:$0xf]
        %v5794 = vld [vmem:[%s5775 + $0x48] sm:$0xf]
        %v5795 = vld [vmem:[%s5775 + $0x4c] sm:$0xf]
        %v5796 = vld [vmem:[%s5775 + $0x50] sm:$0xf]
        %v5797 = vld [vmem:[%s5775 + $0x54] sm:$0xf]
        %v5798 = vld [vmem:[%s5775 + $0x58] sm:$0xf]
        %v5799 = vld [vmem:[%s5775 + $0x5c] sm:$0xf]
        %v5800 = vld [vmem:[%s5775 + $0x60] sm:$0xf]
        %v5801 = vld [vmem:[%s5775 + $0x64] sm:$0xf]
        %v5802 = vld [vmem:[%s5775 + $0x68] sm:$0xf]
        %v5803 = vld [vmem:[%s5775 + $0x6c] sm:$0xf]
        %v5804 = vld [vmem:[%s5775 + $0x70] sm:$0xf]
        %v5805 = vld [vmem:[%s5775 + $0x74] sm:$0xf]
        %v5806 = vld [vmem:[%s5775 + $0x78] sm:$0xf]
        %v5807 = vld [vmem:[%s5775 + $0x7c] sm:$0xf]
        %v5808 = vld [vmem:[%s5775 + $0x80] sm:$0xf]
        %v5809 = vld [vmem:[%s5775 + $0x84] sm:$0xf]
        %v5810 = vld [vmem:[%s5775 + $0x88] sm:$0xf]
        %v5811 = vld [vmem:[%s5775 + $0x8c] sm:$0xf]
        %s5812 = scalar_lea.vmem %s9, 3
        %v5813 = vld [vmem:[%s5812] sm:$0x1]
        %v5815 = vlaneseq
        %v5816 = vshrl.u32 %v5815, 7
        %v5817 = vsub.s32 0, %v5816
        %v5818 = vrot.slane %v5813, %v5817
        %v5856 = vunpack.c.l.b16 %v5776
        %v5857 = vunpack.c.l.b16 %v5777
        %v5858 = vunpack.c.l.b16 %v5778
        %v5859 = vunpack.c.l.b16 %v5779
        %v5860 = vunpack.c.l.b16 %v5780
        %v5861 = vunpack.c.l.b16 %v5781
        %v5862 = vunpack.c.l.b16 %v5782
        %v5863 = vunpack.c.l.b16 %v5783
        %v5864 = vunpack.c.l.b16 %v5784
        %v5865 = vunpack.c.l.b16 %v5785
        %v5866 = vunpack.c.l.b16 %v5786
        %v5867 = vunpack.c.l.b16 %v5787
        %v5868 = vunpack.c.l.b16 %v5788
        %v5869 = vunpack.c.l.b16 %v5789
        %v5870 = vunpack.c.l.b16 %v5790
        %v5871 = vunpack.c.l.b16 %v5791
        %v5872 = vunpack.c.l.b16 %v5792
        %v5873 = vunpack.c.l.b16 %v5793
        %v5874 = vunpack.c.l.b16 %v5794
        %v5875 = vunpack.c.l.b16 %v5795
        %v5876 = vunpack.c.l.b16 %v5796
        %v5877 = vunpack.c.l.b16 %v5797
        %v5878 = vunpack.c.l.b16 %v5798
        %v5879 = vunpack.c.l.b16 %v5799
        %v5880 = vunpack.c.l.b16 %v5800
        %v5881 = vunpack.c.l.b16 %v5801
        %v5882 = vunpack.c.l.b16 %v5802
        %v5883 = vunpack.c.l.b16 %v5803
        %v5884 = vunpack.c.l.b16 %v5804
        %v5885 = vunpack.c.l.b16 %v5805
        %v5886 = vunpack.c.l.b16 %v5806
        %v5887 = vunpack.c.l.b16 %v5807
        %v5888 = vunpack.c.l.b16 %v5808
        %v5889 = vunpack.c.l.b16 %v5809
        %v5890 = vunpack.c.l.b16 %v5810
        %v5891 = vunpack.c.l.b16 %v5811
        %v5892 = vpack.c.b16 %v5857, %v5856
        %v5893 = vpack.c.b16 %v5859, %v5858
        %v5894 = vpack.c.b16 %v5861, %v5860
        %v5895 = vpack.c.b16 %v5863, %v5862
        %v5896 = vpack.c.b16 %v5865, %v5864
        %v5897 = vpack.c.b16 %v5867, %v5866
        %v5898 = vpack.c.b16 %v5869, %v5868
        %v5899 = vpack.c.b16 %v5871, %v5870
        %v5900 = vpack.c.b16 %v5873, %v5872
        %v5901 = vpack.c.b16 %v5875, %v5874
        %v5902 = vpack.c.b16 %v5877, %v5876
        %v5903 = vpack.c.b16 %v5879, %v5878
        %v5904 = vpack.c.b16 %v5881, %v5880
        %v5905 = vpack.c.b16 %v5883, %v5882
        %v5906 = vpack.c.b16 %v5885, %v5884
        %v5907 = vpack.c.b16 %v5887, %v5886
        %v5908 = vpack.c.b16 %v5889, %v5888
        %v5909 = vpack.c.b16 %v5891, %v5890
        %v5929 = vsel %vm577, %v5765, 0
        %v5932 = vsel %vm577, %v5768, 0
        %v5935 = vsel %vm577, %v5771, 0
        %v5938 = vsel %vm577, %v5774, 0
        %5940 = vmatprep.subr.bf16.mxu0 0
        %5941 = vmatpush1.bf16.msra.mxu0 %v5899
        %5942 = vmatprep.subr.bf16.mxu0 0
        %5943 = vmatpush1.bf16.msra.mxu0 %v5898
        %5944 = vmatprep.subr.bf16.mxu0 0
        %5945 = vmatpush1.bf16.msra.mxu0 %v5897
        %5946 = vmatprep.subr.bf16.mxu0 0
        %5947 = vmatpush1.bf16.msra.mxu0 %v5896
        %5948 = vmatprep.subr.bf16.mxu0 0
        %5949 = vmatpush1.bf16.msra.mxu0 %v5895
        %5950 = vmatprep.subr.bf16.mxu0 0
        %5951 = vmatpush1.bf16.msra.mxu0 %v5894
        %5952 = vmatprep.subr.bf16.mxu0 0
        %5953 = vmatpush1.bf16.msra.mxu0 %v5893
        %5954 = vmatprep.subr.bf16.mxu0 0
        %5955 = vmatpush1.bf16.msra.mxu0 %v5892
        %5956 = vmatprep.subr.bf16.mxu0 0
        %5957 = vmatpush2.bf16.msra.mxu0 %v5907
        %5958 = vmatprep.subr.bf16.mxu0 0
        %5959 = vmatpush2.bf16.msra.mxu0 %v5906
        %5960 = vmatprep.subr.bf16.mxu0 0
        %5961 = vmatpush2.bf16.msra.mxu0 %v5905
        %5962 = vmatprep.subr.bf16.mxu0 0
        %5963 = vmatpush2.bf16.msra.mxu0 %v5904
        %5964 = vmatprep.subr.bf16.mxu0 0
        %5965 = vmatpush2.bf16.msra.mxu0 %v5903
        %5966 = vmatprep.subr.bf16.mxu0 0
        %5967 = vmatpush2.bf16.msra.mxu0 %v5902
        %5968 = vmatprep.subr.bf16.mxu0 0
        %5969 = vmatpush2.bf16.msra.mxu0 %v5901
        %5970 = vmatprep.subr.bf16.mxu0 0
        %5971 = vmatpush2.bf16.msra.mxu0 %v5900
        %5972 = vmatprep.mubr.bf16.mxu0 %v5764
        %5973 = vmatmul.mubr.bf16.gmra.mxu0 %v5763
        %v5974 = vpop.f32.mrf.mxu0
        %v5975 = vadd.f32 %v5818, %v5974
        %v5976 = vpop.f32.mrf.mxu0
        %v5977 = vpop.f32.mrf.mxu0
        %v5978 = vadd.f32 %v5818, %v5977
        %v5979 = vpop.f32.mrf.mxu0
        %5980 = vmatprep.mubr.bf16.mxu0 %v5767
        %5981 = vmatmul.mubr.bf16.gmra.mxu0 %v5766
        %v5982 = vpop.f32.mrf.mxu0
        %v5983 = vadd.f32 %v5818, %v5982
        %v5984 = vpop.f32.mrf.mxu0
        %v5985 = vpop.f32.mrf.mxu0
        %v5986 = vadd.f32 %v5818, %v5985
        %v5987 = vpop.f32.mrf.mxu0
        %5988 = vmatprep.mubr.bf16.mxu0 %v5770
        %5989 = vmatmul.mubr.bf16.gmra.mxu0 %v5769
        %v5990 = vpop.f32.mrf.mxu0
        %v5991 = vadd.f32 %v5818, %v5990
        %v5992 = vpop.f32.mrf.mxu0
        %v5993 = vpop.f32.mrf.mxu0
        %v5994 = vadd.f32 %v5818, %v5993
        %v5995 = vpop.f32.mrf.mxu0
        %5996 = vmatprep.mubr.bf16.mxu0 %v5773
        %5997 = vmatmul.mubr.bf16.gmra.mxu0 %v5772
        %v5998 = vpop.f32.mrf.mxu0
        %v5999 = vadd.f32 %v5818, %v5998
        %v6000 = vpop.f32.mrf.mxu0
        %v6001 = vpop.f32.mrf.mxu0
        %v6002 = vadd.f32 %v5818, %v6001
        %v6003 = vpop.f32.mrf.mxu0
        %6004 = vdwg.mxu0
        %6005 = vmatprep.subr.bf16.mxu0 0
        %6006 = vmatpush1.bf16.msra.mxu0 0
        %6007 = vmatprep.subr.bf16.mxu0 0
        %6008 = vmatpush1.bf16.msra.mxu0 0
        %6009 = vmatprep.subr.bf16.mxu0 0
        %6010 = vmatpush1.bf16.msra.mxu0 0
        %6011 = vmatprep.subr.bf16.mxu0 0
        %6012 = vmatpush1.bf16.msra.mxu0 0
        %6013 = vmatprep.subr.bf16.mxu0 0
        %6014 = vmatpush1.bf16.msra.mxu0 0
        %6015 = vmatprep.subr.bf16.mxu0 0
        %6016 = vmatpush1.bf16.msra.mxu0 0
        %6017 = vmatprep.subr.bf16.mxu0 0
        %6018 = vmatpush1.bf16.msra.mxu0 %v5909
        %6019 = vmatprep.subr.bf16.mxu0 0
        %6020 = vmatpush1.bf16.msra.mxu0 %v5908
        %6021 = vmatprep.subr.bf16.mxu0 0
        %6022 = vmatpush2.bf16.msra.mxu0 0
        %6023 = vmatprep.subr.bf16.mxu0 0
        %6024 = vmatpush2.bf16.msra.mxu0 0
        %6025 = vmatprep.subr.bf16.mxu0 0
        %6026 = vmatpush2.bf16.msra.mxu0 0
        %6027 = vmatprep.subr.bf16.mxu0 0
        %6028 = vmatpush2.bf16.msra.mxu0 0
        %6029 = vmatprep.subr.bf16.mxu0 0
        %6030 = vmatpush2.bf16.msra.mxu0 0
        %6031 = vmatprep.subr.bf16.mxu0 0
        %6032 = vmatpush2.bf16.msra.mxu0 0
        %6033 = vmatprep.subr.bf16.mxu0 0
        %6034 = vmatpush2.bf16.msra.mxu0 0
        %6035 = vmatprep.subr.bf16.mxu0 0
        %6036 = vmatpush2.bf16.msra.mxu0 0
        %6037 = vmatprep.mubr.bf16.mxu0 0
        %6038 = vmatmul.mubr.bf16.gmra.mxu0 %v5929
        %v6039 = vpop.f32.mrf.mxu0
        %v6040 = vadd.f32 %v5975, %v6039
        %v6041 = vpop.f32.mrf.mxu0
        %v6042 = vpop.f32.mrf.mxu0
        %v6043 = vadd.f32 %v5978, %v6042
        %v6044 = vpop.f32.mrf.mxu0
        %6045 = vmatprep.mubr.bf16.mxu0 0
        %6046 = vmatmul.mubr.bf16.gmra.mxu0 %v5932
        %v6047 = vpop.f32.mrf.mxu0
        %v6048 = vadd.f32 %v5983, %v6047
        %v6049 = vpop.f32.mrf.mxu0
        %v6050 = vpop.f32.mrf.mxu0
        %v6051 = vadd.f32 %v5986, %v6050
        %v6052 = vpop.f32.mrf.mxu0
        %6053 = vmatprep.mubr.bf16.mxu0 0
        %6054 = vmatmul.mubr.bf16.gmra.mxu0 %v5935
        %v6055 = vpop.f32.mrf.mxu0
        %v6056 = vadd.f32 %v5991, %v6055
        %v6057 = vpop.f32.mrf.mxu0
        %v6058 = vpop.f32.mrf.mxu0
        %v6059 = vadd.f32 %v5994, %v6058
        %v6060 = vpop.f32.mrf.mxu0
        %6061 = vmatprep.mubr.bf16.mxu0 0
        %6062 = vmatmul.mubr.bf16.gmra.mxu0 %v5938
        %v6063 = vpop.f32.mrf.mxu0
        %v6064 = vadd.f32 %v5999, %v6063
        %v6065 = vpop.f32.mrf.mxu0
        %v6066 = vpop.f32.mrf.mxu0
        %v6067 = vadd.f32 %v6002, %v6066
        %v6068 = vpop.f32.mrf.mxu0
        %6069 = vdwg.mxu0
        %v6070 = vadd.f32 %v4276, %v6040
        %v6071 = vadd.f32 %v4277, %v6043
        %v6072 = vadd.f32 %v4278, %v6048
        %v6073 = vadd.f32 %v4279, %v6051
        %v6074 = vadd.f32 %v4280, %v6056
        %v6075 = vadd.f32 %v4281, %v6059
        %v6076 = vadd.f32 %v4282, %v6064
        %v6077 = vadd.f32 %v4283, %v6067
        %6078 = vst.msk [vmem:[%s536] sm:$0xff] %vm577, %v6070
        %6079 = vst.msk [vmem:[%s536 + $0x8] sm:$0xff] %vm577, %v6071
        %6080 = vst.msk [vmem:[%s536 + $0x10] sm:$0xff] %vm577, %v6072
        %6081 = vst.msk [vmem:[%s536 + $0x18] sm:$0xff] %vm577, %v6073
        %6082 = vst.msk [vmem:[%s536 + $0x20] sm:$0xff] %vm577, %v6074
        %6083 = vst.msk [vmem:[%s536 + $0x28] sm:$0xff] %vm577, %v6075
        %6084 = vst.msk [vmem:[%s536 + $0x30] sm:$0xff] %vm577, %v6076
        %6085 = vst.msk [vmem:[%s536 + $0x38] sm:$0xff] %vm577, %v6077
        %s6086 = sand.u32 %s389, 1
        %s6087 = scalar_lea.sflag [#allocation3], %s6086
        %s6088 = sand.u32 %s389, 1
        %s6089 = smul.addr %s6088, 64
        %s6090 = scalar_lea.vmem [#allocation2], %s6089
        // Predicated region
        $region85: #{mid_block_forward.1} parent=83 // pred_check
          %p6091 = pneg %p399
        $region86: #{mid_block_forward.1} parent=83 // pred_check_branch
          %6093 = sbr.rel (%p6091) target = $region88
        $region87: #{mid_block_forward.1} parent=83 // pred_region
          %s6095 = ssub.s32 1024, 1024
          %6096 = vsyncadd %s6087, %s6095
          %s6097 = smul.addr %s30, 8
          %s6098 = smul.addr %s6097, 128
          %s6099 = scalar_lea.hbm %s16, %s6098
          %s6100 = sshll.u32 %s6090, 4
          %s6101 = int_to_ptr.vmem [resolvable:$true] %s6100
          %6106 = dma.vmem_to_hbm [thread:$0]  %s6101, 1024, %s6099, %s6087, 128, 128, 8
        $region88: #{mid_block_forward.1} parent=83 // pred_fallthru
          _
      $region84: #{mid_block_forward.1} parent=5 // pred_fallthru
        _
      %p6107 = scmp.le.s32.totalorder 2, %s25
      // Predicated region
      $region89: #{mid_block_forward.1} parent=5 // pred_check
        %p6108 = pneg %p6107
      $region90: #{mid_block_forward.1} parent=5 // pred_check_branch
        %6110 = sbr.rel (%p6108) target = $region92
      $region91: #{mid_block_forward.1} parent=5 // pred_region
        %s6111 = ssub.s32 %s25, 2
        // Predicated region
        $region93: #{mid_block_forward.1} parent=91 // pred_check
          %p6112 = pneg %p405
        $region94: #{mid_block_forward.1} parent=91 // pred_check_branch
          %6114 = sbr.rel (%p6112) target = $region96
        $region95: #{mid_block_forward.1} parent=91 // pred_region
          %s6115 = sand.u32 %s390, 1
          %s6116 = scalar_lea.sflag [#allocation3], %s6115
          %s6117 = sand.u32 %s390, 1
          %s6118 = smul.addr %s6117, 64
          %s6119 = scalar_lea.vmem [#allocation2], %s6118
          %6120 = dma.done %s6116, 1024
        $region96: #{mid_block_forward.1} parent=91 // pred_fallthru
          _
      $region92: #{mid_block_forward.1} parent=5 // pred_fallthru
        _
    $region6: #{mid_block_forward.1} parent=1 // loop_footer
      %s29 = sadd.s32 1, %s25
    $region7: #{mid_block_forward.1} parent=1 // loop_footer_branch
      %24 = sbr.rel target = $region3
    $region8: #{mid_block_forward.1} parent=1 // loop_exit
      _
    %6121 = vsyncpa [#allocation3], 1
    %s6122 = scalar_lea.sflag [#allocation3], 1
    %6123 = vsyncpa %s6122, 1

</llo_original>
